<compile_context>
chip_gen: v6e
topology: v6e:2x2x1
jax: 0.10.0
libtpu: 0.0.40
codegen_flags: <defaults>
</compile_context>

<pallas_src>
import functools
import math

import jax
import jax.numpy as jnp
from jax.experimental import pallas as pl
from jax.experimental.pallas import tpu as pltpu

# ---------------- model config (small, consistent with a tiny BERT) -------------
BATCH = 2
SEQ = 8
HIDDEN = 32
NUM_HEADS = 4
HEAD_DIM = HIDDEN // NUM_HEADS
INTERMEDIATE = 64
NUM_LAYERS = 2
NUM_LABELS = 2
LN_EPS = 1e-12

_VMEM = pl.BlockSpec(memory_space=pltpu.MemorySpace.VMEM)


# ------------------------------- helpers (in-kernel) -----------------------------
def _layernorm(x, g, b, eps):
    """LayerNorm over the last (hidden) axis.  g,b: (1, H)."""
    mu = jnp.mean(x, axis=-1, keepdims=True)
    xc = x - mu
    var = jnp.mean(xc * xc, axis=-1, keepdims=True)
    return xc * jax.lax.rsqrt(var + eps) * g + b


def _gelu(x):
    # TODO(synk): HF BERT default is erf-based GELU; erf has no clean Mosaic
    # lowering, so the standard tanh approximation is used instead.
    c = math.sqrt(2.0 / math.pi)
    return 0.5 * x * (1.0 + jnp.tanh(c * (x + 0.044715 * x * x * x)))


def _softmax_lastdim(s):
    m = jnp.max(s, axis=-1, keepdims=True)
    p = jnp.exp(s - m)
    return p * pl.reciprocal(jnp.sum(p, axis=-1, keepdims=True), approx=True)


# ------------------------------- fused Pallas kernel -----------------------------
def _bert_kernel(
    x_ref,            # (B*S, H) embeddings, flattened rows
    wqkv_ref,         # (L, H, 3H)
    bqkv_ref,         # (L, 1, 3H)
    wo_ref, bo_ref,   # (L, H, H), (L, 1, H)
    ln1g_ref, ln1b_ref,  # (L, 1, H)
    wi_ref, bi_ref,   # (L, H, I), (L, 1, I)
    wo2_ref, bo2_ref, # (L, I, H), (L, 1, H)
    ln2g_ref, ln2b_ref,  # (L, 1, H)
    pw_ref, pb_ref,   # (H, H), (1, H)
    cw_ref, cb_ref,   # (H, NUM_LABELS), (1, NUM_LABELS)
    o_ref,            # (B, 1)
    *, batch, seq, num_heads, head_dim, eps,
):
    hidden = num_heads * head_dim
    scale = 1.0 / math.sqrt(head_dim)

    x = x_ref[...]  # (B*S, H), stays in vregs/VMEM for the whole forward

    # NOTE: attention_mask defaults to all-ones in BertModelWrapper, so the
    # extended additive mask is identically zero and is omitted.
    # TODO(synk): if real padding masks are ever needed, pass the (B, S) mask
    # and add it to the scores here.
    for l in range(NUM_LAYERS):  # static unroll
        # --- self-attention: fused QKV projection (one matmul) ---
        qkv = jnp.dot(x, wqkv_ref[l], preferred_element_type=jnp.float32) + bqkv_ref[l]
        q = qkv[:, 0:hidden]
        k = qkv[:, hidden:2 * hidden]
        v = qkv[:, 2 * hidden:3 * hidden]

        # per-(batch, head) attention with static slices; everything stays in VMEM
        ctx_rows = []
        for b in range(batch):
            r0, r1 = b * seq, (b + 1) * seq
            head_ctx = []
            for h in range(num_heads):
                c0, c1 = h * head_dim, (h + 1) * head_dim
                qh = q[r0:r1, c0:c1]          # (S, D)
                kh = k[r0:r1, c0:c1]          # (S, D)
                vh = v[r0:r1, c0:c1]          # (S, D)
                s = jax.lax.dot_general(      # q @ k^T  -> (S, S)
                    qh, kh, (((1,), (1,)), ((), ())),
                    preferred_element_type=jnp.float32) * scale
                p = _softmax_lastdim(s)
                ch = jnp.dot(p, vh, preferred_element_type=jnp.float32)  # (S, D)
                head_ctx.append(ch)
            ctx_rows.append(jnp.concatenate(head_ctx, axis=-1))  # (S, H)
        ctx = jnp.concatenate(ctx_rows, axis=0)                  # (B*S, H)

        attn_out = jnp.dot(ctx, wo_ref[l], preferred_element_type=jnp.float32) + bo_ref[l]
        x = _layernorm(attn_out + x, ln1g_ref[l], ln1b_ref[l], eps)

        # --- feed-forward ---
        inter = jnp.dot(x, wi_ref[l], preferred_element_type=jnp.float32) + bi_ref[l]
        inter = _gelu(inter)
        ffn = jnp.dot(inter, wo2_ref[l], preferred_element_type=jnp.float32) + bo2_ref[l]
        x = _layernorm(ffn + x, ln2g_ref[l], ln2b_ref[l], eps)

    # --- pooler (dense + tanh on the [CLS] token) ---
    cls = jnp.concatenate([x[b * seq:b * seq + 1, :] for b in range(batch)], axis=0)  # (B, H)
    pooled = jnp.tanh(
        jnp.dot(cls, pw_ref[...], preferred_element_type=jnp.float32) + pb_ref[...])

    # --- classifier + softmax over labels, keep prob of class 1 ---
    logits = jnp.dot(pooled, cw_ref[...], preferred_element_type=jnp.float32) + cb_ref[...]
    probs = _softmax_lastdim(logits)          # (B, NUM_LABELS)
    o_ref[...] = probs[:, 1:2].astype(o_ref.dtype)


def bert_wrapper_forward(params, embeddings):
    """Equivalent of BertModelWrapper.forward(embeddings) in eval mode."""
    B, S, H = embeddings.shape
    x2d = embeddings.reshape(B * S, H)

    kernel = functools.partial(
        _bert_kernel, batch=B, seq=S, num_heads=NUM_HEADS,
        head_dim=HEAD_DIM, eps=LN_EPS)

    n_inputs = 17
    return pl.pallas_call(
        kernel,
        out_shape=jax.ShapeDtypeStruct((B, 1), jnp.float32),
        in_specs=[_VMEM] * n_inputs,
        out_specs=_VMEM,
    )(
        x2d,
        params["wqkv"], params["bqkv"],
        params["wo"], params["bo"],
        params["ln1_g"], params["ln1_b"],
        params["wi"], params["bi"],
        params["wo2"], params["bo2"],
        params["ln2_g"], params["ln2_b"],
        params["pooler_w"], params["pooler_b"],
        params["cls_w"], params["cls_b"],
    )


# ----------------------------- parameters (synthetic) ---------------------------
def _linear_params(key, fan_in, fan_out):
    k1, k2 = jax.random.split(key)
    w = jax.random.normal(k1, (fan_in, fan_out), jnp.float32) * 0.02
    b = jax.random.normal(k2, (1, fan_out), jnp.float32) * 0.02
    return w, b


def init_params(key):
    keys = jax.random.split(key, NUM_LAYERS + 2)
    wqkv_l, bqkv_l, wo_l, bo_l = [], [], [], []
    wi_l, bi_l, wo2_l, bo2_l = [], [], [], []
    for li in range(NUM_LAYERS):
        lk = jax.random.split(keys[li], 6)
        wq, bq = _linear_params(lk[0], HIDDEN, HIDDEN)
        wk, bk = _linear_params(lk[1], HIDDEN, HIDDEN)
        wv, bv = _linear_params(lk[2], HIDDEN, HIDDEN)
        wo, bo = _linear_params(lk[3], HIDDEN, HIDDEN)
        wi, bi = _linear_params(lk[4], HIDDEN, INTERMEDIATE)
        wo2, bo2 = _linear_params(lk[5], INTERMEDIATE, HIDDEN)
        # fuse Q/K/V weights -> one (H, 3H) matmul per layer
        wqkv_l.append(jnp.concatenate([wq, wk, wv], axis=1))
        bqkv_l.append(jnp.concatenate([bq, bk, bv], axis=1))
        wo_l.append(wo); bo_l.append(bo)
        wi_l.append(wi); bi_l.append(bi)
        wo2_l.append(wo2); bo2_l.append(bo2)

    ones_h = jnp.ones((NUM_LAYERS, 1, HIDDEN), jnp.float32)
    zeros_h = jnp.zeros((NUM_LAYERS, 1, HIDDEN), jnp.float32)

    pooler_w, pooler_b = _linear_params(keys[NUM_LAYERS], HIDDEN, HIDDEN)
    cls_w, cls_b = _linear_params(keys[NUM_LAYERS + 1], HIDDEN, NUM_LABELS)

    return dict(
        wqkv=jnp.stack(wqkv_l), bqkv=jnp.stack(bqkv_l),
        wo=jnp.stack(wo_l), bo=jnp.stack(bo_l),
        ln1_g=ones_h, ln1_b=zeros_h,
        wi=jnp.stack(wi_l), bi=jnp.stack(bi_l),
        wo2=jnp.stack(wo2_l), bo2=jnp.stack(bo2_l),
        ln2_g=ones_h, ln2_b=zeros_h,
        pooler_w=pooler_w, pooler_b=pooler_b,
        cls_w=cls_w, cls_b=cls_b,
    )


if __name__ == "__main__":
    key = jax.random.PRNGKey(0)
    pkey, xkey = jax.random.split(key)
    params = init_params(pkey)
    embeddings = jax.random.normal(xkey, (BATCH, SEQ, HIDDEN), jnp.float32)

    out = bert_wrapper_forward(params, embeddings)
    out = jax.block_until_ready(out)
    assert out.shape == (BATCH, 1), out.shape
    assert bool(jnp.all(jnp.isfinite(out)))
    assert bool(jnp.all((out >= 0.0) & (out <= 1.0 + 1e-3)))
    print("KERNEL_OK")
</pallas_src>

<mosaic_0001>
module attributes {stable_mosaic.version = 11 : i64} {
  func.func @_bert_kernel(%arg0: memref<16x32xf32, #tpu.memory_space<vmem>>, %arg1: memref<2x32x96xf32, #tpu.memory_space<vmem>>, %arg2: memref<2x1x96xf32, #tpu.memory_space<vmem>>, %arg3: memref<2x32x32xf32, #tpu.memory_space<vmem>>, %arg4: memref<2x1x32xf32, #tpu.memory_space<vmem>>, %arg5: memref<2x1x32xf32, #tpu.memory_space<vmem>>, %arg6: memref<2x1x32xf32, #tpu.memory_space<vmem>>, %arg7: memref<2x32x64xf32, #tpu.memory_space<vmem>>, %arg8: memref<2x1x64xf32, #tpu.memory_space<vmem>>, %arg9: memref<2x64x32xf32, #tpu.memory_space<vmem>>, %arg10: memref<2x1x32xf32, #tpu.memory_space<vmem>>, %arg11: memref<2x1x32xf32, #tpu.memory_space<vmem>>, %arg12: memref<2x1x32xf32, #tpu.memory_space<vmem>>, %arg13: memref<32x32xf32, #tpu.memory_space<vmem>>, %arg14: memref<1x32xf32, #tpu.memory_space<vmem>>, %arg15: memref<32x2xf32, #tpu.memory_space<vmem>>, %arg16: memref<1x2xf32, #tpu.memory_space<vmem>>, %arg17: memref<2x1xf32, #tpu.memory_space<vmem>>) attributes {dimension_semantics = [], scalar_prefetch = 0 : i64, scratch_operands = 0 : i64, tpu.core_type = #tpu.core_type<tc>} {
    %c0 = arith.constant 0 : index
    %c0_0 = arith.constant 0 : index
    %0 = vector.load %arg0[%c0, %c0_0] : memref<16x32xf32, #tpu.memory_space<vmem>>, vector<16x32xf32>
    %c0_1 = arith.constant 0 : index
    %c0_2 = arith.constant 0 : index
    %c0_3 = arith.constant 0 : index
    %1 = vector.load %arg1[%c0_1, %c0_2, %c0_3] : memref<2x32x96xf32, #tpu.memory_space<vmem>>, vector<1x32x96xf32>
    %2 = vector.shape_cast %1 : vector<1x32x96xf32> to vector<32x96xf32>
    %cst = arith.constant dense<0.000000e+00> : vector<16x96xf32>
    %3 = tpu.matmul %0, %2, %cst {dimension_numbers = #tpu.dot_dimension_numbers<[1], [0], [0], [1], [0, 0, 1, 1], [], []>} : vector<16x32xf32>, vector<32x96xf32>, vector<16x96xf32> -> vector<16x96xf32>
    %c0_4 = arith.constant 0 : index
    %c0_5 = arith.constant 0 : index
    %c0_6 = arith.constant 0 : index
    %4 = vector.load %arg2[%c0_4, %c0_5, %c0_6] : memref<2x1x96xf32, #tpu.memory_space<vmem>>, vector<1x1x96xf32>
    %5 = vector.shape_cast %4 : vector<1x1x96xf32> to vector<1x96xf32>
    %6 = vector.broadcast %5 : vector<1x96xf32> to vector<16x96xf32>
    %7 = arith.addf %3, %6 : vector<16x96xf32>
    %8 = vector.extract_strided_slice %7 {offsets = [0, 0], sizes = [16, 32], strides = [1, 1]} : vector<16x96xf32> to vector<16x32xf32>
    %9 = vector.extract_strided_slice %7 {offsets = [0, 32], sizes = [16, 32], strides = [1, 1]} : vector<16x96xf32> to vector<16x32xf32>
    %10 = vector.extract_strided_slice %7 {offsets = [0, 64], sizes = [16, 32], strides = [1, 1]} : vector<16x96xf32> to vector<16x32xf32>
    %11 = vector.extract_strided_slice %8 {offsets = [0, 0], sizes = [8, 8], strides = [1, 1]} : vector<16x32xf32> to vector<8x8xf32>
    %12 = vector.extract_strided_slice %9 {offsets = [0, 0], sizes = [8, 8], strides = [1, 1]} : vector<16x32xf32> to vector<8x8xf32>
    %13 = vector.extract_strided_slice %10 {offsets = [0, 0], sizes = [8, 8], strides = [1, 1]} : vector<16x32xf32> to vector<8x8xf32>
    %cst_7 = arith.constant dense<0.000000e+00> : vector<8x8xf32>
    %14 = tpu.matmul %11, %12, %cst_7 {dimension_numbers = #tpu.dot_dimension_numbers<[1], [1], [0], [0], [0, 0, 1, 0], [], []>} : vector<8x8xf32>, vector<8x8xf32>, vector<8x8xf32> -> vector<8x8xf32>
    %cst_8 = arith.constant 0.353553385 : f32
    %15 = vector.broadcast %cst_8 : f32 to vector<8x8xf32>
    %16 = arith.mulf %14, %15 : vector<8x8xf32>
    %cst_9 = arith.constant dense<0xFF800000> : vector<8xf32>
    %17 = vector.multi_reduction <maximumf>, %16, %cst_9 [1] : vector<8x8xf32> to vector<8xf32>
    %18 = vector.shape_cast %17 : vector<8xf32> to vector<8x1xf32>
    %19 = vector.broadcast %18 : vector<8x1xf32> to vector<8x8xf32>
    %20 = arith.subf %16, %19 : vector<8x8xf32>
    %21 = math.exp %20 : vector<8x8xf32>
    %cst_10 = arith.constant dense<0.000000e+00> : vector<8xf32>
    %22 = vector.multi_reduction <add>, %21, %cst_10 [1] : vector<8x8xf32> to vector<8xf32>
    %23 = vector.shape_cast %22 : vector<8xf32> to vector<8x1xf32>
    %24 = tpu.reciprocal %23 {approx = true} : vector<8x1xf32> -> vector<8x1xf32>
    %25 = vector.broadcast %24 : vector<8x1xf32> to vector<8x8xf32>
    %26 = arith.mulf %21, %25 : vector<8x8xf32>
    %cst_11 = arith.constant dense<0.000000e+00> : vector<8x8xf32>
    %27 = tpu.matmul %26, %13, %cst_11 {dimension_numbers = #tpu.dot_dimension_numbers<[1], [0], [0], [1], [0, 0, 1, 1], [], []>} : vector<8x8xf32>, vector<8x8xf32>, vector<8x8xf32> -> vector<8x8xf32>
    %28 = vector.extract_strided_slice %8 {offsets = [0, 8], sizes = [8, 8], strides = [1, 1]} : vector<16x32xf32> to vector<8x8xf32>
    %29 = vector.extract_strided_slice %9 {offsets = [0, 8], sizes = [8, 8], strides = [1, 1]} : vector<16x32xf32> to vector<8x8xf32>
    %30 = vector.extract_strided_slice %10 {offsets = [0, 8], sizes = [8, 8], strides = [1, 1]} : vector<16x32xf32> to vector<8x8xf32>
    %cst_12 = arith.constant dense<0.000000e+00> : vector<8x8xf32>
    %31 = tpu.matmul %28, %29, %cst_12 {dimension_numbers = #tpu.dot_dimension_numbers<[1], [1], [0], [0], [0, 0, 1, 0], [], []>} : vector<8x8xf32>, vector<8x8xf32>, vector<8x8xf32> -> vector<8x8xf32>
    %cst_13 = arith.constant 0.353553385 : f32
    %32 = vector.broadcast %cst_13 : f32 to vector<8x8xf32>
    %33 = arith.mulf %31, %32 : vector<8x8xf32>
    %cst_14 = arith.constant dense<0xFF800000> : vector<8xf32>
    %34 = vector.multi_reduction <maximumf>, %33, %cst_14 [1] : vector<8x8xf32> to vector<8xf32>
    %35 = vector.shape_cast %34 : vector<8xf32> to vector<8x1xf32>
    %36 = vector.broadcast %35 : vector<8x1xf32> to vector<8x8xf32>
    %37 = arith.subf %33, %36 : vector<8x8xf32>
    %38 = math.exp %37 : vector<8x8xf32>
    %cst_15 = arith.constant dense<0.000000e+00> : vector<8xf32>
    %39 = vector.multi_reduction <add>, %38, %cst_15 [1] : vector<8x8xf32> to vector<8xf32>
    %40 = vector.shape_cast %39 : vector<8xf32> to vector<8x1xf32>
    %41 = tpu.reciprocal %40 {approx = true} : vector<8x1xf32> -> vector<8x1xf32>
    %42 = vector.broadcast %41 : vector<8x1xf32> to vector<8x8xf32>
    %43 = arith.mulf %38, %42 : vector<8x8xf32>
    %cst_16 = arith.constant dense<0.000000e+00> : vector<8x8xf32>
    %44 = tpu.matmul %43, %30, %cst_16 {dimension_numbers = #tpu.dot_dimension_numbers<[1], [0], [0], [1], [0, 0, 1, 1], [], []>} : vector<8x8xf32>, vector<8x8xf32>, vector<8x8xf32> -> vector<8x8xf32>
    %45 = vector.extract_strided_slice %8 {offsets = [0, 16], sizes = [8, 8], strides = [1, 1]} : vector<16x32xf32> to vector<8x8xf32>
    %46 = vector.extract_strided_slice %9 {offsets = [0, 16], sizes = [8, 8], strides = [1, 1]} : vector<16x32xf32> to vector<8x8xf32>
    %47 = vector.extract_strided_slice %10 {offsets = [0, 16], sizes = [8, 8], strides = [1, 1]} : vector<16x32xf32> to vector<8x8xf32>
    %cst_17 = arith.constant dense<0.000000e+00> : vector<8x8xf32>
    %48 = tpu.matmul %45, %46, %cst_17 {dimension_numbers = #tpu.dot_dimension_numbers<[1], [1], [0], [0], [0, 0, 1, 0], [], []>} : vector<8x8xf32>, vector<8x8xf32>, vector<8x8xf32> -> vector<8x8xf32>
    %cst_18 = arith.constant 0.353553385 : f32
    %49 = vector.broadcast %cst_18 : f32 to vector<8x8xf32>
    %50 = arith.mulf %48, %49 : vector<8x8xf32>
    %cst_19 = arith.constant dense<0xFF800000> : vector<8xf32>
    %51 = vector.multi_reduction <maximumf>, %50, %cst_19 [1] : vector<8x8xf32> to vector<8xf32>
    %52 = vector.shape_cast %51 : vector<8xf32> to vector<8x1xf32>
    %53 = vector.broadcast %52 : vector<8x1xf32> to vector<8x8xf32>
    %54 = arith.subf %50, %53 : vector<8x8xf32>
    %55 = math.exp %54 : vector<8x8xf32>
    %cst_20 = arith.constant dense<0.000000e+00> : vector<8xf32>
    %56 = vector.multi_reduction <add>, %55, %cst_20 [1] : vector<8x8xf32> to vector<8xf32>
    %57 = vector.shape_cast %56 : vector<8xf32> to vector<8x1xf32>
    %58 = tpu.reciprocal %57 {approx = true} : vector<8x1xf32> -> vector<8x1xf32>
    %59 = vector.broadcast %58 : vector<8x1xf32> to vector<8x8xf32>
    %60 = arith.mulf %55, %59 : vector<8x8xf32>
    %cst_21 = arith.constant dense<0.000000e+00> : vector<8x8xf32>
    %61 = tpu.matmul %60, %47, %cst_21 {dimension_numbers = #tpu.dot_dimension_numbers<[1], [0], [0], [1], [0, 0, 1, 1], [], []>} : vector<8x8xf32>, vector<8x8xf32>, vector<8x8xf32> -> vector<8x8xf32>
    %62 = vector.extract_strided_slice %8 {offsets = [0, 24], sizes = [8, 8], strides = [1, 1]} : vector<16x32xf32> to vector<8x8xf32>
    %63 = vector.extract_strided_slice %9 {offsets = [0, 24], sizes = [8, 8], strides = [1, 1]} : vector<16x32xf32> to vector<8x8xf32>
    %64 = vector.extract_strided_slice %10 {offsets = [0, 24], sizes = [8, 8], strides = [1, 1]} : vector<16x32xf32> to vector<8x8xf32>
    %cst_22 = arith.constant dense<0.000000e+00> : vector<8x8xf32>
    %65 = tpu.matmul %62, %63, %cst_22 {dimension_numbers = #tpu.dot_dimension_numbers<[1], [1], [0], [0], [0, 0, 1, 0], [], []>} : vector<8x8xf32>, vector<8x8xf32>, vector<8x8xf32> -> vector<8x8xf32>
    %cst_23 = arith.constant 0.353553385 : f32
    %66 = vector.broadcast %cst_23 : f32 to vector<8x8xf32>
    %67 = arith.mulf %65, %66 : vector<8x8xf32>
    %cst_24 = arith.constant dense<0xFF800000> : vector<8xf32>
    %68 = vector.multi_reduction <maximumf>, %67, %cst_24 [1] : vector<8x8xf32> to vector<8xf32>
    %69 = vector.shape_cast %68 : vector<8xf32> to vector<8x1xf32>
    %70 = vector.broadcast %69 : vector<8x1xf32> to vector<8x8xf32>
    %71 = arith.subf %67, %70 : vector<8x8xf32>
    %72 = math.exp %71 : vector<8x8xf32>
    %cst_25 = arith.constant dense<0.000000e+00> : vector<8xf32>
    %73 = vector.multi_reduction <add>, %72, %cst_25 [1] : vector<8x8xf32> to vector<8xf32>
    %74 = vector.shape_cast %73 : vector<8xf32> to vector<8x1xf32>
    %75 = tpu.reciprocal %74 {approx = true} : vector<8x1xf32> -> vector<8x1xf32>
    %76 = vector.broadcast %75 : vector<8x1xf32> to vector<8x8xf32>
    %77 = arith.mulf %72, %76 : vector<8x8xf32>
    %cst_26 = arith.constant dense<0.000000e+00> : vector<8x8xf32>
    %78 = tpu.matmul %77, %64, %cst_26 {dimension_numbers = #tpu.dot_dimension_numbers<[1], [0], [0], [1], [0, 0, 1, 1], [], []>} : vector<8x8xf32>, vector<8x8xf32>, vector<8x8xf32> -> vector<8x8xf32>
    %79 = tpu.concatenate %27, %44, %61, %78 in 1 : vector<8x8xf32>, vector<8x8xf32>, vector<8x8xf32>, vector<8x8xf32> -> vector<8x32xf32>
    %80 = vector.extract_strided_slice %8 {offsets = [8, 0], sizes = [8, 8], strides = [1, 1]} : vector<16x32xf32> to vector<8x8xf32>
    %81 = vector.extract_strided_slice %9 {offsets = [8, 0], sizes = [8, 8], strides = [1, 1]} : vector<16x32xf32> to vector<8x8xf32>
    %82 = vector.extract_strided_slice %10 {offsets = [8, 0], sizes = [8, 8], strides = [1, 1]} : vector<16x32xf32> to vector<8x8xf32>
    %cst_27 = arith.constant dense<0.000000e+00> : vector<8x8xf32>
    %83 = tpu.matmul %80, %81, %cst_27 {dimension_numbers = #tpu.dot_dimension_numbers<[1], [1], [0], [0], [0, 0, 1, 0], [], []>} : vector<8x8xf32>, vector<8x8xf32>, vector<8x8xf32> -> vector<8x8xf32>
    %cst_28 = arith.constant 0.353553385 : f32
    %84 = vector.broadcast %cst_28 : f32 to vector<8x8xf32>
    %85 = arith.mulf %83, %84 : vector<8x8xf32>
    %cst_29 = arith.constant dense<0xFF800000> : vector<8xf32>
    %86 = vector.multi_reduction <maximumf>, %85, %cst_29 [1] : vector<8x8xf32> to vector<8xf32>
    %87 = vector.shape_cast %86 : vector<8xf32> to vector<8x1xf32>
    %88 = vector.broadcast %87 : vector<8x1xf32> to vector<8x8xf32>
    %89 = arith.subf %85, %88 : vector<8x8xf32>
    %90 = math.exp %89 : vector<8x8xf32>
    %cst_30 = arith.constant dense<0.000000e+00> : vector<8xf32>
    %91 = vector.multi_reduction <add>, %90, %cst_30 [1] : vector<8x8xf32> to vector<8xf32>
    %92 = vector.shape_cast %91 : vector<8xf32> to vector<8x1xf32>
    %93 = tpu.reciprocal %92 {approx = true} : vector<8x1xf32> -> vector<8x1xf32>
    %94 = vector.broadcast %93 : vector<8x1xf32> to vector<8x8xf32>
    %95 = arith.mulf %90, %94 : vector<8x8xf32>
    %cst_31 = arith.constant dense<0.000000e+00> : vector<8x8xf32>
    %96 = tpu.matmul %95, %82, %cst_31 {dimension_numbers = #tpu.dot_dimension_numbers<[1], [0], [0], [1], [0, 0, 1, 1], [], []>} : vector<8x8xf32>, vector<8x8xf32>, vector<8x8xf32> -> vector<8x8xf32>
    %97 = vector.extract_strided_slice %8 {offsets = [8, 8], sizes = [8, 8], strides = [1, 1]} : vector<16x32xf32> to vector<8x8xf32>
    %98 = vector.extract_strided_slice %9 {offsets = [8, 8], sizes = [8, 8], strides = [1, 1]} : vector<16x32xf32> to vector<8x8xf32>
    %99 = vector.extract_strided_slice %10 {offsets = [8, 8], sizes = [8, 8], strides = [1, 1]} : vector<16x32xf32> to vector<8x8xf32>
    %cst_32 = arith.constant dense<0.000000e+00> : vector<8x8xf32>
    %100 = tpu.matmul %97, %98, %cst_32 {dimension_numbers = #tpu.dot_dimension_numbers<[1], [1], [0], [0], [0, 0, 1, 0], [], []>} : vector<8x8xf32>, vector<8x8xf32>, vector<8x8xf32> -> vector<8x8xf32>
    %cst_33 = arith.constant 0.353553385 : f32
    %101 = vector.broadcast %cst_33 : f32 to vector<8x8xf32>
    %102 = arith.mulf %100, %101 : vector<8x8xf32>
    %cst_34 = arith.constant dense<0xFF800000> : vector<8xf32>
    %103 = vector.multi_reduction <maximumf>, %102, %cst_34 [1] : vector<8x8xf32> to vector<8xf32>
    %104 = vector.shape_cast %103 : vector<8xf32> to vector<8x1xf32>
    %105 = vector.broadcast %104 : vector<8x1xf32> to vector<8x8xf32>
    %106 = arith.subf %102, %105 : vector<8x8xf32>
    %107 = math.exp %106 : vector<8x8xf32>
    %cst_35 = arith.constant dense<0.000000e+00> : vector<8xf32>
    %108 = vector.multi_reduction <add>, %107, %cst_35 [1] : vector<8x8xf32> to vector<8xf32>
    %109 = vector.shape_cast %108 : vector<8xf32> to vector<8x1xf32>
    %110 = tpu.reciprocal %109 {approx = true} : vector<8x1xf32> -> vector<8x1xf32>
    %111 = vector.broadcast %110 : vector<8x1xf32> to vector<8x8xf32>
    %112 = arith.mulf %107, %111 : vector<8x8xf32>
    %cst_36 = arith.constant dense<0.000000e+00> : vector<8x8xf32>
    %113 = tpu.matmul %112, %99, %cst_36 {dimension_numbers = #tpu.dot_dimension_numbers<[1], [0], [0], [1], [0, 0, 1, 1], [], []>} : vector<8x8xf32>, vector<8x8xf32>, vector<8x8xf32> -> vector<8x8xf32>
    %114 = vector.extract_strided_slice %8 {offsets = [8, 16], sizes = [8, 8], strides = [1, 1]} : vector<16x32xf32> to vector<8x8xf32>
    %115 = vector.extract_strided_slice %9 {offsets = [8, 16], sizes = [8, 8], strides = [1, 1]} : vector<16x32xf32> to vector<8x8xf32>
    %116 = vector.extract_strided_slice %10 {offsets = [8, 16], sizes = [8, 8], strides = [1, 1]} : vector<16x32xf32> to vector<8x8xf32>
    %cst_37 = arith.constant dense<0.000000e+00> : vector<8x8xf32>
    %117 = tpu.matmul %114, %115, %cst_37 {dimension_numbers = #tpu.dot_dimension_numbers<[1], [1], [0], [0], [0, 0, 1, 0], [], []>} : vector<8x8xf32>, vector<8x8xf32>, vector<8x8xf32> -> vector<8x8xf32>
    %cst_38 = arith.constant 0.353553385 : f32
    %118 = vector.broadcast %cst_38 : f32 to vector<8x8xf32>
    %119 = arith.mulf %117, %118 : vector<8x8xf32>
    %cst_39 = arith.constant dense<0xFF800000> : vector<8xf32>
    %120 = vector.multi_reduction <maximumf>, %119, %cst_39 [1] : vector<8x8xf32> to vector<8xf32>
    %121 = vector.shape_cast %120 : vector<8xf32> to vector<8x1xf32>
    %122 = vector.broadcast %121 : vector<8x1xf32> to vector<8x8xf32>
    %123 = arith.subf %119, %122 : vector<8x8xf32>
    %124 = math.exp %123 : vector<8x8xf32>
    %cst_40 = arith.constant dense<0.000000e+00> : vector<8xf32>
    %125 = vector.multi_reduction <add>, %124, %cst_40 [1] : vector<8x8xf32> to vector<8xf32>
    %126 = vector.shape_cast %125 : vector<8xf32> to vector<8x1xf32>
    %127 = tpu.reciprocal %126 {approx = true} : vector<8x1xf32> -> vector<8x1xf32>
    %128 = vector.broadcast %127 : vector<8x1xf32> to vector<8x8xf32>
    %129 = arith.mulf %124, %128 : vector<8x8xf32>
    %cst_41 = arith.constant dense<0.000000e+00> : vector<8x8xf32>
    %130 = tpu.matmul %129, %116, %cst_41 {dimension_numbers = #tpu.dot_dimension_numbers<[1], [0], [0], [1], [0, 0, 1, 1], [], []>} : vector<8x8xf32>, vector<8x8xf32>, vector<8x8xf32> -> vector<8x8xf32>
    %131 = vector.extract_strided_slice %8 {offsets = [8, 24], sizes = [8, 8], strides = [1, 1]} : vector<16x32xf32> to vector<8x8xf32>
    %132 = vector.extract_strided_slice %9 {offsets = [8, 24], sizes = [8, 8], strides = [1, 1]} : vector<16x32xf32> to vector<8x8xf32>
    %133 = vector.extract_strided_slice %10 {offsets = [8, 24], sizes = [8, 8], strides = [1, 1]} : vector<16x32xf32> to vector<8x8xf32>
    %cst_42 = arith.constant dense<0.000000e+00> : vector<8x8xf32>
    %134 = tpu.matmul %131, %132, %cst_42 {dimension_numbers = #tpu.dot_dimension_numbers<[1], [1], [0], [0], [0, 0, 1, 0], [], []>} : vector<8x8xf32>, vector<8x8xf32>, vector<8x8xf32> -> vector<8x8xf32>
    %cst_43 = arith.constant 0.353553385 : f32
    %135 = vector.broadcast %cst_43 : f32 to vector<8x8xf32>
    %136 = arith.mulf %134, %135 : vector<8x8xf32>
    %cst_44 = arith.constant dense<0xFF800000> : vector<8xf32>
    %137 = vector.multi_reduction <maximumf>, %136, %cst_44 [1] : vector<8x8xf32> to vector<8xf32>
    %138 = vector.shape_cast %137 : vector<8xf32> to vector<8x1xf32>
    %139 = vector.broadcast %138 : vector<8x1xf32> to vector<8x8xf32>
    %140 = arith.subf %136, %139 : vector<8x8xf32>
    %141 = math.exp %140 : vector<8x8xf32>
    %cst_45 = arith.constant dense<0.000000e+00> : vector<8xf32>
    %142 = vector.multi_reduction <add>, %141, %cst_45 [1] : vector<8x8xf32> to vector<8xf32>
    %143 = vector.shape_cast %142 : vector<8xf32> to vector<8x1xf32>
    %144 = tpu.reciprocal %143 {approx = true} : vector<8x1xf32> -> vector<8x1xf32>
    %145 = vector.broadcast %144 : vector<8x1xf32> to vector<8x8xf32>
    %146 = arith.mulf %141, %145 : vector<8x8xf32>
    %cst_46 = arith.constant dense<0.000000e+00> : vector<8x8xf32>
    %147 = tpu.matmul %146, %133, %cst_46 {dimension_numbers = #tpu.dot_dimension_numbers<[1], [0], [0], [1], [0, 0, 1, 1], [], []>} : vector<8x8xf32>, vector<8x8xf32>, vector<8x8xf32> -> vector<8x8xf32>
    %148 = tpu.concatenate %96, %113, %130, %147 in 1 : vector<8x8xf32>, vector<8x8xf32>, vector<8x8xf32>, vector<8x8xf32> -> vector<8x32xf32>
    %149 = tpu.concatenate %79, %148 in 0 : vector<8x32xf32>, vector<8x32xf32> -> vector<16x32xf32>
    %c0_47 = arith.constant 0 : index
    %c0_48 = arith.constant 0 : index
    %c0_49 = arith.constant 0 : index
    %150 = vector.load %arg3[%c0_47, %c0_48, %c0_49] : memref<2x32x32xf32, #tpu.memory_space<vmem>>, vector<1x32x32xf32>
    %151 = vector.shape_cast %150 : vector<1x32x32xf32> to vector<32x32xf32>
    %cst_50 = arith.constant dense<0.000000e+00> : vector<16x32xf32>
    %152 = tpu.matmul %149, %151, %cst_50 {dimension_numbers = #tpu.dot_dimension_numbers<[1], [0], [0], [1], [0, 0, 1, 1], [], []>} : vector<16x32xf32>, vector<32x32xf32>, vector<16x32xf32> -> vector<16x32xf32>
    %c0_51 = arith.constant 0 : index
    %c0_52 = arith.constant 0 : index
    %c0_53 = arith.constant 0 : index
    %153 = vector.load %arg4[%c0_51, %c0_52, %c0_53] : memref<2x1x32xf32, #tpu.memory_space<vmem>>, vector<1x1x32xf32>
    %154 = vector.shape_cast %153 : vector<1x1x32xf32> to vector<1x32xf32>
    %155 = vector.broadcast %154 : vector<1x32xf32> to vector<16x32xf32>
    %156 = arith.addf %152, %155 : vector<16x32xf32>
    %157 = arith.addf %156, %0 : vector<16x32xf32>
    %c0_54 = arith.constant 0 : index
    %c0_55 = arith.constant 0 : index
    %c0_56 = arith.constant 0 : index
    %158 = vector.load %arg5[%c0_54, %c0_55, %c0_56] : memref<2x1x32xf32, #tpu.memory_space<vmem>>, vector<1x1x32xf32>
    %159 = vector.shape_cast %158 : vector<1x1x32xf32> to vector<1x32xf32>
    %c0_57 = arith.constant 0 : index
    %c0_58 = arith.constant 0 : index
    %c0_59 = arith.constant 0 : index
    %160 = vector.load %arg6[%c0_57, %c0_58, %c0_59] : memref<2x1x32xf32, #tpu.memory_space<vmem>>, vector<1x1x32xf32>
    %161 = vector.shape_cast %160 : vector<1x1x32xf32> to vector<1x32xf32>
    %cst_60 = arith.constant dense<0.000000e+00> : vector<16xf32>
    %162 = vector.multi_reduction <add>, %157, %cst_60 [1] : vector<16x32xf32> to vector<16xf32>
    %163 = vector.shape_cast %162 : vector<16xf32> to vector<16x1xf32>
    %cst_61 = arith.constant 3.200000e+01 : f32
    %164 = vector.broadcast %cst_61 : f32 to vector<16x1xf32>
    %165 = arith.divf %163, %164 : vector<16x1xf32>
    %166 = vector.broadcast %165 : vector<16x1xf32> to vector<16x32xf32>
    %167 = arith.subf %157, %166 : vector<16x32xf32>
    %168 = arith.mulf %167, %167 : vector<16x32xf32>
    %cst_62 = arith.constant dense<0.000000e+00> : vector<16xf32>
    %169 = vector.multi_reduction <add>, %168, %cst_62 [1] : vector<16x32xf32> to vector<16xf32>
    %170 = vector.shape_cast %169 : vector<16xf32> to vector<16x1xf32>
    %cst_63 = arith.constant 3.200000e+01 : f32
    %171 = vector.broadcast %cst_63 : f32 to vector<16x1xf32>
    %172 = arith.divf %170, %171 : vector<16x1xf32>
    %cst_64 = arith.constant 9.99999996E-13 : f32
    %173 = vector.broadcast %cst_64 : f32 to vector<16x1xf32>
    %174 = arith.addf %172, %173 : vector<16x1xf32>
    %175 = math.rsqrt %174 : vector<16x1xf32>
    %176 = vector.broadcast %175 : vector<16x1xf32> to vector<16x32xf32>
    %177 = arith.mulf %167, %176 : vector<16x32xf32>
    %178 = vector.broadcast %159 : vector<1x32xf32> to vector<16x32xf32>
    %179 = arith.mulf %177, %178 : vector<16x32xf32>
    %180 = vector.broadcast %161 : vector<1x32xf32> to vector<16x32xf32>
    %181 = arith.addf %179, %180 : vector<16x32xf32>
    %c0_65 = arith.constant 0 : index
    %c0_66 = arith.constant 0 : index
    %c0_67 = arith.constant 0 : index
    %182 = vector.load %arg7[%c0_65, %c0_66, %c0_67] : memref<2x32x64xf32, #tpu.memory_space<vmem>>, vector<1x32x64xf32>
    %183 = vector.shape_cast %182 : vector<1x32x64xf32> to vector<32x64xf32>
    %cst_68 = arith.constant dense<0.000000e+00> : vector<16x64xf32>
    %184 = tpu.matmul %181, %183, %cst_68 {dimension_numbers = #tpu.dot_dimension_numbers<[1], [0], [0], [1], [0, 0, 1, 1], [], []>} : vector<16x32xf32>, vector<32x64xf32>, vector<16x64xf32> -> vector<16x64xf32>
    %c0_69 = arith.constant 0 : index
    %c0_70 = arith.constant 0 : index
    %c0_71 = arith.constant 0 : index
    %185 = vector.load %arg8[%c0_69, %c0_70, %c0_71] : memref<2x1x64xf32, #tpu.memory_space<vmem>>, vector<1x1x64xf32>
    %186 = vector.shape_cast %185 : vector<1x1x64xf32> to vector<1x64xf32>
    %187 = vector.broadcast %186 : vector<1x64xf32> to vector<16x64xf32>
    %188 = arith.addf %184, %187 : vector<16x64xf32>
    %cst_72 = arith.constant 5.000000e-01 : f32
    %189 = vector.broadcast %cst_72 : f32 to vector<16x64xf32>
    %190 = arith.mulf %189, %188 : vector<16x64xf32>
    %cst_73 = arith.constant 4.471500e-02 : f32
    %191 = vector.broadcast %cst_73 : f32 to vector<16x64xf32>
    %192 = arith.mulf %191, %188 : vector<16x64xf32>
    %193 = arith.mulf %192, %188 : vector<16x64xf32>
    %194 = arith.mulf %193, %188 : vector<16x64xf32>
    %195 = arith.addf %188, %194 : vector<16x64xf32>
    %cst_74 = arith.constant 0.797884583 : f32
    %196 = vector.broadcast %cst_74 : f32 to vector<16x64xf32>
    %197 = arith.mulf %196, %195 : vector<16x64xf32>
    %198 = math.tanh %197 : vector<16x64xf32>
    %cst_75 = arith.constant 1.000000e+00 : f32
    %199 = vector.broadcast %cst_75 : f32 to vector<16x64xf32>
    %200 = arith.addf %199, %198 : vector<16x64xf32>
    %201 = arith.mulf %190, %200 : vector<16x64xf32>
    %c0_76 = arith.constant 0 : index
    %c0_77 = arith.constant 0 : index
    %c0_78 = arith.constant 0 : index
    %202 = vector.load %arg9[%c0_76, %c0_77, %c0_78] : memref<2x64x32xf32, #tpu.memory_space<vmem>>, vector<1x64x32xf32>
    %203 = vector.shape_cast %202 : vector<1x64x32xf32> to vector<64x32xf32>
    %cst_79 = arith.constant dense<0.000000e+00> : vector<16x32xf32>
    %204 = tpu.matmul %201, %203, %cst_79 {dimension_numbers = #tpu.dot_dimension_numbers<[1], [0], [0], [1], [0, 0, 1, 1], [], []>} : vector<16x64xf32>, vector<64x32xf32>, vector<16x32xf32> -> vector<16x32xf32>
    %c0_80 = arith.constant 0 : index
    %c0_81 = arith.constant 0 : index
    %c0_82 = arith.constant 0 : index
    %205 = vector.load %arg10[%c0_80, %c0_81, %c0_82] : memref<2x1x32xf32, #tpu.memory_space<vmem>>, vector<1x1x32xf32>
    %206 = vector.shape_cast %205 : vector<1x1x32xf32> to vector<1x32xf32>
    %207 = vector.broadcast %206 : vector<1x32xf32> to vector<16x32xf32>
    %208 = arith.addf %204, %207 : vector<16x32xf32>
    %209 = arith.addf %208, %181 : vector<16x32xf32>
    %c0_83 = arith.constant 0 : index
    %c0_84 = arith.constant 0 : index
    %c0_85 = arith.constant 0 : index
    %210 = vector.load %arg11[%c0_83, %c0_84, %c0_85] : memref<2x1x32xf32, #tpu.memory_space<vmem>>, vector<1x1x32xf32>
    %211 = vector.shape_cast %210 : vector<1x1x32xf32> to vector<1x32xf32>
    %c0_86 = arith.constant 0 : index
    %c0_87 = arith.constant 0 : index
    %c0_88 = arith.constant 0 : index
    %212 = vector.load %arg12[%c0_86, %c0_87, %c0_88] : memref<2x1x32xf32, #tpu.memory_space<vmem>>, vector<1x1x32xf32>
    %213 = vector.shape_cast %212 : vector<1x1x32xf32> to vector<1x32xf32>
    %cst_89 = arith.constant dense<0.000000e+00> : vector<16xf32>
    %214 = vector.multi_reduction <add>, %209, %cst_89 [1] : vector<16x32xf32> to vector<16xf32>
    %215 = vector.shape_cast %214 : vector<16xf32> to vector<16x1xf32>
    %cst_90 = arith.constant 3.200000e+01 : f32
    %216 = vector.broadcast %cst_90 : f32 to vector<16x1xf32>
    %217 = arith.divf %215, %216 : vector<16x1xf32>
    %218 = vector.broadcast %217 : vector<16x1xf32> to vector<16x32xf32>
    %219 = arith.subf %209, %218 : vector<16x32xf32>
    %220 = arith.mulf %219, %219 : vector<16x32xf32>
    %cst_91 = arith.constant dense<0.000000e+00> : vector<16xf32>
    %221 = vector.multi_reduction <add>, %220, %cst_91 [1] : vector<16x32xf32> to vector<16xf32>
    %222 = vector.shape_cast %221 : vector<16xf32> to vector<16x1xf32>
    %cst_92 = arith.constant 3.200000e+01 : f32
    %223 = vector.broadcast %cst_92 : f32 to vector<16x1xf32>
    %224 = arith.divf %222, %223 : vector<16x1xf32>
    %cst_93 = arith.constant 9.99999996E-13 : f32
    %225 = vector.broadcast %cst_93 : f32 to vector<16x1xf32>
    %226 = arith.addf %224, %225 : vector<16x1xf32>
    %227 = math.rsqrt %226 : vector<16x1xf32>
    %228 = vector.broadcast %227 : vector<16x1xf32> to vector<16x32xf32>
    %229 = arith.mulf %219, %228 : vector<16x32xf32>
    %230 = vector.broadcast %211 : vector<1x32xf32> to vector<16x32xf32>
    %231 = arith.mulf %229, %230 : vector<16x32xf32>
    %232 = vector.broadcast %213 : vector<1x32xf32> to vector<16x32xf32>
    %233 = arith.addf %231, %232 : vector<16x32xf32>
    %c1 = arith.constant 1 : index
    %c0_94 = arith.constant 0 : index
    %c0_95 = arith.constant 0 : index
    %234 = vector.load %arg1[%c1, %c0_94, %c0_95] : memref<2x32x96xf32, #tpu.memory_space<vmem>>, vector<1x32x96xf32>
    %235 = vector.shape_cast %234 : vector<1x32x96xf32> to vector<32x96xf32>
    %cst_96 = arith.constant dense<0.000000e+00> : vector<16x96xf32>
    %236 = tpu.matmul %233, %235, %cst_96 {dimension_numbers = #tpu.dot_dimension_numbers<[1], [0], [0], [1], [0, 0, 1, 1], [], []>} : vector<16x32xf32>, vector<32x96xf32>, vector<16x96xf32> -> vector<16x96xf32>
    %c1_97 = arith.constant 1 : index
    %c0_98 = arith.constant 0 : index
    %c0_99 = arith.constant 0 : index
    %237 = vector.load %arg2[%c1_97, %c0_98, %c0_99] : memref<2x1x96xf32, #tpu.memory_space<vmem>>, vector<1x1x96xf32>
    %238 = vector.shape_cast %237 : vector<1x1x96xf32> to vector<1x96xf32>
    %239 = vector.broadcast %238 : vector<1x96xf32> to vector<16x96xf32>
    %240 = arith.addf %236, %239 : vector<16x96xf32>
    %241 = vector.extract_strided_slice %240 {offsets = [0, 0], sizes = [16, 32], strides = [1, 1]} : vector<16x96xf32> to vector<16x32xf32>
    %242 = vector.extract_strided_slice %240 {offsets = [0, 32], sizes = [16, 32], strides = [1, 1]} : vector<16x96xf32> to vector<16x32xf32>
    %243 = vector.extract_strided_slice %240 {offsets = [0, 64], sizes = [16, 32], strides = [1, 1]} : vector<16x96xf32> to vector<16x32xf32>
    %244 = vector.extract_strided_slice %241 {offsets = [0, 0], sizes = [8, 8], strides = [1, 1]} : vector<16x32xf32> to vector<8x8xf32>
    %245 = vector.extract_strided_slice %242 {offsets = [0, 0], sizes = [8, 8], strides = [1, 1]} : vector<16x32xf32> to vector<8x8xf32>
    %246 = vector.extract_strided_slice %243 {offsets = [0, 0], sizes = [8, 8], strides = [1, 1]} : vector<16x32xf32> to vector<8x8xf32>
    %cst_100 = arith.constant dense<0.000000e+00> : vector<8x8xf32>
    %247 = tpu.matmul %244, %245, %cst_100 {dimension_numbers = #tpu.dot_dimension_numbers<[1], [1], [0], [0], [0, 0, 1, 0], [], []>} : vector<8x8xf32>, vector<8x8xf32>, vector<8x8xf32> -> vector<8x8xf32>
    %cst_101 = arith.constant 0.353553385 : f32
    %248 = vector.broadcast %cst_101 : f32 to vector<8x8xf32>
    %249 = arith.mulf %247, %248 : vector<8x8xf32>
    %cst_102 = arith.constant dense<0xFF800000> : vector<8xf32>
    %250 = vector.multi_reduction <maximumf>, %249, %cst_102 [1] : vector<8x8xf32> to vector<8xf32>
    %251 = vector.shape_cast %250 : vector<8xf32> to vector<8x1xf32>
    %252 = vector.broadcast %251 : vector<8x1xf32> to vector<8x8xf32>
    %253 = arith.subf %249, %252 : vector<8x8xf32>
    %254 = math.exp %253 : vector<8x8xf32>
    %cst_103 = arith.constant dense<0.000000e+00> : vector<8xf32>
    %255 = vector.multi_reduction <add>, %254, %cst_103 [1] : vector<8x8xf32> to vector<8xf32>
    %256 = vector.shape_cast %255 : vector<8xf32> to vector<8x1xf32>
    %257 = tpu.reciprocal %256 {approx = true} : vector<8x1xf32> -> vector<8x1xf32>
    %258 = vector.broadcast %257 : vector<8x1xf32> to vector<8x8xf32>
    %259 = arith.mulf %254, %258 : vector<8x8xf32>
    %cst_104 = arith.constant dense<0.000000e+00> : vector<8x8xf32>
    %260 = tpu.matmul %259, %246, %cst_104 {dimension_numbers = #tpu.dot_dimension_numbers<[1], [0], [0], [1], [0, 0, 1, 1], [], []>} : vector<8x8xf32>, vector<8x8xf32>, vector<8x8xf32> -> vector<8x8xf32>
    %261 = vector.extract_strided_slice %241 {offsets = [0, 8], sizes = [8, 8], strides = [1, 1]} : vector<16x32xf32> to vector<8x8xf32>
    %262 = vector.extract_strided_slice %242 {offsets = [0, 8], sizes = [8, 8], strides = [1, 1]} : vector<16x32xf32> to vector<8x8xf32>
    %263 = vector.extract_strided_slice %243 {offsets = [0, 8], sizes = [8, 8], strides = [1, 1]} : vector<16x32xf32> to vector<8x8xf32>
    %cst_105 = arith.constant dense<0.000000e+00> : vector<8x8xf32>
    %264 = tpu.matmul %261, %262, %cst_105 {dimension_numbers = #tpu.dot_dimension_numbers<[1], [1], [0], [0], [0, 0, 1, 0], [], []>} : vector<8x8xf32>, vector<8x8xf32>, vector<8x8xf32> -> vector<8x8xf32>
    %cst_106 = arith.constant 0.353553385 : f32
    %265 = vector.broadcast %cst_106 : f32 to vector<8x8xf32>
    %266 = arith.mulf %264, %265 : vector<8x8xf32>
    %cst_107 = arith.constant dense<0xFF800000> : vector<8xf32>
    %267 = vector.multi_reduction <maximumf>, %266, %cst_107 [1] : vector<8x8xf32> to vector<8xf32>
    %268 = vector.shape_cast %267 : vector<8xf32> to vector<8x1xf32>
    %269 = vector.broadcast %268 : vector<8x1xf32> to vector<8x8xf32>
    %270 = arith.subf %266, %269 : vector<8x8xf32>
    %271 = math.exp %270 : vector<8x8xf32>
    %cst_108 = arith.constant dense<0.000000e+00> : vector<8xf32>
    %272 = vector.multi_reduction <add>, %271, %cst_108 [1] : vector<8x8xf32> to vector<8xf32>
    %273 = vector.shape_cast %272 : vector<8xf32> to vector<8x1xf32>
    %274 = tpu.reciprocal %273 {approx = true} : vector<8x1xf32> -> vector<8x1xf32>
    %275 = vector.broadcast %274 : vector<8x1xf32> to vector<8x8xf32>
    %276 = arith.mulf %271, %275 : vector<8x8xf32>
    %cst_109 = arith.constant dense<0.000000e+00> : vector<8x8xf32>
    %277 = tpu.matmul %276, %263, %cst_109 {dimension_numbers = #tpu.dot_dimension_numbers<[1], [0], [0], [1], [0, 0, 1, 1], [], []>} : vector<8x8xf32>, vector<8x8xf32>, vector<8x8xf32> -> vector<8x8xf32>
    %278 = vector.extract_strided_slice %241 {offsets = [0, 16], sizes = [8, 8], strides = [1, 1]} : vector<16x32xf32> to vector<8x8xf32>
    %279 = vector.extract_strided_slice %242 {offsets = [0, 16], sizes = [8, 8], strides = [1, 1]} : vector<16x32xf32> to vector<8x8xf32>
    %280 = vector.extract_strided_slice %243 {offsets = [0, 16], sizes = [8, 8], strides = [1, 1]} : vector<16x32xf32> to vector<8x8xf32>
    %cst_110 = arith.constant dense<0.000000e+00> : vector<8x8xf32>
    %281 = tpu.matmul %278, %279, %cst_110 {dimension_numbers = #tpu.dot_dimension_numbers<[1], [1], [0], [0], [0, 0, 1, 0], [], []>} : vector<8x8xf32>, vector<8x8xf32>, vector<8x8xf32> -> vector<8x8xf32>
    %cst_111 = arith.constant 0.353553385 : f32
    %282 = vector.broadcast %cst_111 : f32 to vector<8x8xf32>
    %283 = arith.mulf %281, %282 : vector<8x8xf32>
    %cst_112 = arith.constant dense<0xFF800000> : vector<8xf32>
    %284 = vector.multi_reduction <maximumf>, %283, %cst_112 [1] : vector<8x8xf32> to vector<8xf32>
    %285 = vector.shape_cast %284 : vector<8xf32> to vector<8x1xf32>
    %286 = vector.broadcast %285 : vector<8x1xf32> to vector<8x8xf32>
    %287 = arith.subf %283, %286 : vector<8x8xf32>
    %288 = math.exp %287 : vector<8x8xf32>
    %cst_113 = arith.constant dense<0.000000e+00> : vector<8xf32>
    %289 = vector.multi_reduction <add>, %288, %cst_113 [1] : vector<8x8xf32> to vector<8xf32>
    %290 = vector.shape_cast %289 : vector<8xf32> to vector<8x1xf32>
    %291 = tpu.reciprocal %290 {approx = true} : vector<8x1xf32> -> vector<8x1xf32>
    %292 = vector.broadcast %291 : vector<8x1xf32> to vector<8x8xf32>
    %293 = arith.mulf %288, %292 : vector<8x8xf32>
    %cst_114 = arith.constant dense<0.000000e+00> : vector<8x8xf32>
    %294 = tpu.matmul %293, %280, %cst_114 {dimension_numbers = #tpu.dot_dimension_numbers<[1], [0], [0], [1], [0, 0, 1, 1], [], []>} : vector<8x8xf32>, vector<8x8xf32>, vector<8x8xf32> -> vector<8x8xf32>
    %295 = vector.extract_strided_slice %241 {offsets = [0, 24], sizes = [8, 8], strides = [1, 1]} : vector<16x32xf32> to vector<8x8xf32>
    %296 = vector.extract_strided_slice %242 {offsets = [0, 24], sizes = [8, 8], strides = [1, 1]} : vector<16x32xf32> to vector<8x8xf32>
    %297 = vector.extract_strided_slice %243 {offsets = [0, 24], sizes = [8, 8], strides = [1, 1]} : vector<16x32xf32> to vector<8x8xf32>
    %cst_115 = arith.constant dense<0.000000e+00> : vector<8x8xf32>
    %298 = tpu.matmul %295, %296, %cst_115 {dimension_numbers = #tpu.dot_dimension_numbers<[1], [1], [0], [0], [0, 0, 1, 0], [], []>} : vector<8x8xf32>, vector<8x8xf32>, vector<8x8xf32> -> vector<8x8xf32>
    %cst_116 = arith.constant 0.353553385 : f32
    %299 = vector.broadcast %cst_116 : f32 to vector<8x8xf32>
    %300 = arith.mulf %298, %299 : vector<8x8xf32>
    %cst_117 = arith.constant dense<0xFF800000> : vector<8xf32>
    %301 = vector.multi_reduction <maximumf>, %300, %cst_117 [1] : vector<8x8xf32> to vector<8xf32>
    %302 = vector.shape_cast %301 : vector<8xf32> to vector<8x1xf32>
    %303 = vector.broadcast %302 : vector<8x1xf32> to vector<8x8xf32>
    %304 = arith.subf %300, %303 : vector<8x8xf32>
    %305 = math.exp %304 : vector<8x8xf32>
    %cst_118 = arith.constant dense<0.000000e+00> : vector<8xf32>
    %306 = vector.multi_reduction <add>, %305, %cst_118 [1] : vector<8x8xf32> to vector<8xf32>
    %307 = vector.shape_cast %306 : vector<8xf32> to vector<8x1xf32>
    %308 = tpu.reciprocal %307 {approx = true} : vector<8x1xf32> -> vector<8x1xf32>
    %309 = vector.broadcast %308 : vector<8x1xf32> to vector<8x8xf32>
    %310 = arith.mulf %305, %309 : vector<8x8xf32>
    %cst_119 = arith.constant dense<0.000000e+00> : vector<8x8xf32>
    %311 = tpu.matmul %310, %297, %cst_119 {dimension_numbers = #tpu.dot_dimension_numbers<[1], [0], [0], [1], [0, 0, 1, 1], [], []>} : vector<8x8xf32>, vector<8x8xf32>, vector<8x8xf32> -> vector<8x8xf32>
    %312 = tpu.concatenate %260, %277, %294, %311 in 1 : vector<8x8xf32>, vector<8x8xf32>, vector<8x8xf32>, vector<8x8xf32> -> vector<8x32xf32>
    %313 = vector.extract_strided_slice %241 {offsets = [8, 0], sizes = [8, 8], strides = [1, 1]} : vector<16x32xf32> to vector<8x8xf32>
    %314 = vector.extract_strided_slice %242 {offsets = [8, 0], sizes = [8, 8], strides = [1, 1]} : vector<16x32xf32> to vector<8x8xf32>
    %315 = vector.extract_strided_slice %243 {offsets = [8, 0], sizes = [8, 8], strides = [1, 1]} : vector<16x32xf32> to vector<8x8xf32>
    %cst_120 = arith.constant dense<0.000000e+00> : vector<8x8xf32>
    %316 = tpu.matmul %313, %314, %cst_120 {dimension_numbers = #tpu.dot_dimension_numbers<[1], [1], [0], [0], [0, 0, 1, 0], [], []>} : vector<8x8xf32>, vector<8x8xf32>, vector<8x8xf32> -> vector<8x8xf32>
    %cst_121 = arith.constant 0.353553385 : f32
    %317 = vector.broadcast %cst_121 : f32 to vector<8x8xf32>
    %318 = arith.mulf %316, %317 : vector<8x8xf32>
    %cst_122 = arith.constant dense<0xFF800000> : vector<8xf32>
    %319 = vector.multi_reduction <maximumf>, %318, %cst_122 [1] : vector<8x8xf32> to vector<8xf32>
    %320 = vector.shape_cast %319 : vector<8xf32> to vector<8x1xf32>
    %321 = vector.broadcast %320 : vector<8x1xf32> to vector<8x8xf32>
    %322 = arith.subf %318, %321 : vector<8x8xf32>
    %323 = math.exp %322 : vector<8x8xf32>
    %cst_123 = arith.constant dense<0.000000e+00> : vector<8xf32>
    %324 = vector.multi_reduction <add>, %323, %cst_123 [1] : vector<8x8xf32> to vector<8xf32>
    %325 = vector.shape_cast %324 : vector<8xf32> to vector<8x1xf32>
    %326 = tpu.reciprocal %325 {approx = true} : vector<8x1xf32> -> vector<8x1xf32>
    %327 = vector.broadcast %326 : vector<8x1xf32> to vector<8x8xf32>
    %328 = arith.mulf %323, %327 : vector<8x8xf32>
    %cst_124 = arith.constant dense<0.000000e+00> : vector<8x8xf32>
    %329 = tpu.matmul %328, %315, %cst_124 {dimension_numbers = #tpu.dot_dimension_numbers<[1], [0], [0], [1], [0, 0, 1, 1], [], []>} : vector<8x8xf32>, vector<8x8xf32>, vector<8x8xf32> -> vector<8x8xf32>
    %330 = vector.extract_strided_slice %241 {offsets = [8, 8], sizes = [8, 8], strides = [1, 1]} : vector<16x32xf32> to vector<8x8xf32>
    %331 = vector.extract_strided_slice %242 {offsets = [8, 8], sizes = [8, 8], strides = [1, 1]} : vector<16x32xf32> to vector<8x8xf32>
    %332 = vector.extract_strided_slice %243 {offsets = [8, 8], sizes = [8, 8], strides = [1, 1]} : vector<16x32xf32> to vector<8x8xf32>
    %cst_125 = arith.constant dense<0.000000e+00> : vector<8x8xf32>
    %333 = tpu.matmul %330, %331, %cst_125 {dimension_numbers = #tpu.dot_dimension_numbers<[1], [1], [0], [0], [0, 0, 1, 0], [], []>} : vector<8x8xf32>, vector<8x8xf32>, vector<8x8xf32> -> vector<8x8xf32>
    %cst_126 = arith.constant 0.353553385 : f32
    %334 = vector.broadcast %cst_126 : f32 to vector<8x8xf32>
    %335 = arith.mulf %333, %334 : vector<8x8xf32>
    %cst_127 = arith.constant dense<0xFF800000> : vector<8xf32>
    %336 = vector.multi_reduction <maximumf>, %335, %cst_127 [1] : vector<8x8xf32> to vector<8xf32>
    %337 = vector.shape_cast %336 : vector<8xf32> to vector<8x1xf32>
    %338 = vector.broadcast %337 : vector<8x1xf32> to vector<8x8xf32>
    %339 = arith.subf %335, %338 : vector<8x8xf32>
    %340 = math.exp %339 : vector<8x8xf32>
    %cst_128 = arith.constant dense<0.000000e+00> : vector<8xf32>
    %341 = vector.multi_reduction <add>, %340, %cst_128 [1] : vector<8x8xf32> to vector<8xf32>
    %342 = vector.shape_cast %341 : vector<8xf32> to vector<8x1xf32>
    %343 = tpu.reciprocal %342 {approx = true} : vector<8x1xf32> -> vector<8x1xf32>
    %344 = vector.broadcast %343 : vector<8x1xf32> to vector<8x8xf32>
    %345 = arith.mulf %340, %344 : vector<8x8xf32>
    %cst_129 = arith.constant dense<0.000000e+00> : vector<8x8xf32>
    %346 = tpu.matmul %345, %332, %cst_129 {dimension_numbers = #tpu.dot_dimension_numbers<[1], [0], [0], [1], [0, 0, 1, 1], [], []>} : vector<8x8xf32>, vector<8x8xf32>, vector<8x8xf32> -> vector<8x8xf32>
    %347 = vector.extract_strided_slice %241 {offsets = [8, 16], sizes = [8, 8], strides = [1, 1]} : vector<16x32xf32> to vector<8x8xf32>
    %348 = vector.extract_strided_slice %242 {offsets = [8, 16], sizes = [8, 8], strides = [1, 1]} : vector<16x32xf32> to vector<8x8xf32>
    %349 = vector.extract_strided_slice %243 {offsets = [8, 16], sizes = [8, 8], strides = [1, 1]} : vector<16x32xf32> to vector<8x8xf32>
    %cst_130 = arith.constant dense<0.000000e+00> : vector<8x8xf32>
    %350 = tpu.matmul %347, %348, %cst_130 {dimension_numbers = #tpu.dot_dimension_numbers<[1], [1], [0], [0], [0, 0, 1, 0], [], []>} : vector<8x8xf32>, vector<8x8xf32>, vector<8x8xf32> -> vector<8x8xf32>
    %cst_131 = arith.constant 0.353553385 : f32
    %351 = vector.broadcast %cst_131 : f32 to vector<8x8xf32>
    %352 = arith.mulf %350, %351 : vector<8x8xf32>
    %cst_132 = arith.constant dense<0xFF800000> : vector<8xf32>
    %353 = vector.multi_reduction <maximumf>, %352, %cst_132 [1] : vector<8x8xf32> to vector<8xf32>
    %354 = vector.shape_cast %353 : vector<8xf32> to vector<8x1xf32>
    %355 = vector.broadcast %354 : vector<8x1xf32> to vector<8x8xf32>
    %356 = arith.subf %352, %355 : vector<8x8xf32>
    %357 = math.exp %356 : vector<8x8xf32>
    %cst_133 = arith.constant dense<0.000000e+00> : vector<8xf32>
    %358 = vector.multi_reduction <add>, %357, %cst_133 [1] : vector<8x8xf32> to vector<8xf32>
    %359 = vector.shape_cast %358 : vector<8xf32> to vector<8x1xf32>
    %360 = tpu.reciprocal %359 {approx = true} : vector<8x1xf32> -> vector<8x1xf32>
    %361 = vector.broadcast %360 : vector<8x1xf32> to vector<8x8xf32>
    %362 = arith.mulf %357, %361 : vector<8x8xf32>
    %cst_134 = arith.constant dense<0.000000e+00> : vector<8x8xf32>
    %363 = tpu.matmul %362, %349, %cst_134 {dimension_numbers = #tpu.dot_dimension_numbers<[1], [0], [0], [1], [0, 0, 1, 1], [], []>} : vector<8x8xf32>, vector<8x8xf32>, vector<8x8xf32> -> vector<8x8xf32>
    %364 = vector.extract_strided_slice %241 {offsets = [8, 24], sizes = [8, 8], strides = [1, 1]} : vector<16x32xf32> to vector<8x8xf32>
    %365 = vector.extract_strided_slice %242 {offsets = [8, 24], sizes = [8, 8], strides = [1, 1]} : vector<16x32xf32> to vector<8x8xf32>
    %366 = vector.extract_strided_slice %243 {offsets = [8, 24], sizes = [8, 8], strides = [1, 1]} : vector<16x32xf32> to vector<8x8xf32>
    %cst_135 = arith.constant dense<0.000000e+00> : vector<8x8xf32>
    %367 = tpu.matmul %364, %365, %cst_135 {dimension_numbers = #tpu.dot_dimension_numbers<[1], [1], [0], [0], [0, 0, 1, 0], [], []>} : vector<8x8xf32>, vector<8x8xf32>, vector<8x8xf32> -> vector<8x8xf32>
    %cst_136 = arith.constant 0.353553385 : f32
    %368 = vector.broadcast %cst_136 : f32 to vector<8x8xf32>
    %369 = arith.mulf %367, %368 : vector<8x8xf32>
    %cst_137 = arith.constant dense<0xFF800000> : vector<8xf32>
    %370 = vector.multi_reduction <maximumf>, %369, %cst_137 [1] : vector<8x8xf32> to vector<8xf32>
    %371 = vector.shape_cast %370 : vector<8xf32> to vector<8x1xf32>
    %372 = vector.broadcast %371 : vector<8x1xf32> to vector<8x8xf32>
    %373 = arith.subf %369, %372 : vector<8x8xf32>
    %374 = math.exp %373 : vector<8x8xf32>
    %cst_138 = arith.constant dense<0.000000e+00> : vector<8xf32>
    %375 = vector.multi_reduction <add>, %374, %cst_138 [1] : vector<8x8xf32> to vector<8xf32>
    %376 = vector.shape_cast %375 : vector<8xf32> to vector<8x1xf32>
    %377 = tpu.reciprocal %376 {approx = true} : vector<8x1xf32> -> vector<8x1xf32>
    %378 = vector.broadcast %377 : vector<8x1xf32> to vector<8x8xf32>
    %379 = arith.mulf %374, %378 : vector<8x8xf32>
    %cst_139 = arith.constant dense<0.000000e+00> : vector<8x8xf32>
    %380 = tpu.matmul %379, %366, %cst_139 {dimension_numbers = #tpu.dot_dimension_numbers<[1], [0], [0], [1], [0, 0, 1, 1], [], []>} : vector<8x8xf32>, vector<8x8xf32>, vector<8x8xf32> -> vector<8x8xf32>
    %381 = tpu.concatenate %329, %346, %363, %380 in 1 : vector<8x8xf32>, vector<8x8xf32>, vector<8x8xf32>, vector<8x8xf32> -> vector<8x32xf32>
    %382 = tpu.concatenate %312, %381 in 0 : vector<8x32xf32>, vector<8x32xf32> -> vector<16x32xf32>
    %c1_140 = arith.constant 1 : index
    %c0_141 = arith.constant 0 : index
    %c0_142 = arith.constant 0 : index
    %383 = vector.load %arg3[%c1_140, %c0_141, %c0_142] : memref<2x32x32xf32, #tpu.memory_space<vmem>>, vector<1x32x32xf32>
    %384 = vector.shape_cast %383 : vector<1x32x32xf32> to vector<32x32xf32>
    %cst_143 = arith.constant dense<0.000000e+00> : vector<16x32xf32>
    %385 = tpu.matmul %382, %384, %cst_143 {dimension_numbers = #tpu.dot_dimension_numbers<[1], [0], [0], [1], [0, 0, 1, 1], [], []>} : vector<16x32xf32>, vector<32x32xf32>, vector<16x32xf32> -> vector<16x32xf32>
    %c1_144 = arith.constant 1 : index
    %c0_145 = arith.constant 0 : index
    %c0_146 = arith.constant 0 : index
    %386 = vector.load %arg4[%c1_144, %c0_145, %c0_146] : memref<2x1x32xf32, #tpu.memory_space<vmem>>, vector<1x1x32xf32>
    %387 = vector.shape_cast %386 : vector<1x1x32xf32> to vector<1x32xf32>
    %388 = vector.broadcast %387 : vector<1x32xf32> to vector<16x32xf32>
    %389 = arith.addf %385, %388 : vector<16x32xf32>
    %390 = arith.addf %389, %233 : vector<16x32xf32>
    %c1_147 = arith.constant 1 : index
    %c0_148 = arith.constant 0 : index
    %c0_149 = arith.constant 0 : index
    %391 = vector.load %arg5[%c1_147, %c0_148, %c0_149] : memref<2x1x32xf32, #tpu.memory_space<vmem>>, vector<1x1x32xf32>
    %392 = vector.shape_cast %391 : vector<1x1x32xf32> to vector<1x32xf32>
    %c1_150 = arith.constant 1 : index
    %c0_151 = arith.constant 0 : index
    %c0_152 = arith.constant 0 : index
    %393 = vector.load %arg6[%c1_150, %c0_151, %c0_152] : memref<2x1x32xf32, #tpu.memory_space<vmem>>, vector<1x1x32xf32>
    %394 = vector.shape_cast %393 : vector<1x1x32xf32> to vector<1x32xf32>
    %cst_153 = arith.constant dense<0.000000e+00> : vector<16xf32>
    %395 = vector.multi_reduction <add>, %390, %cst_153 [1] : vector<16x32xf32> to vector<16xf32>
    %396 = vector.shape_cast %395 : vector<16xf32> to vector<16x1xf32>
    %cst_154 = arith.constant 3.200000e+01 : f32
    %397 = vector.broadcast %cst_154 : f32 to vector<16x1xf32>
    %398 = arith.divf %396, %397 : vector<16x1xf32>
    %399 = vector.broadcast %398 : vector<16x1xf32> to vector<16x32xf32>
    %400 = arith.subf %390, %399 : vector<16x32xf32>
    %401 = arith.mulf %400, %400 : vector<16x32xf32>
    %cst_155 = arith.constant dense<0.000000e+00> : vector<16xf32>
    %402 = vector.multi_reduction <add>, %401, %cst_155 [1] : vector<16x32xf32> to vector<16xf32>
    %403 = vector.shape_cast %402 : vector<16xf32> to vector<16x1xf32>
    %cst_156 = arith.constant 3.200000e+01 : f32
    %404 = vector.broadcast %cst_156 : f32 to vector<16x1xf32>
    %405 = arith.divf %403, %404 : vector<16x1xf32>
    %cst_157 = arith.constant 9.99999996E-13 : f32
    %406 = vector.broadcast %cst_157 : f32 to vector<16x1xf32>
    %407 = arith.addf %405, %406 : vector<16x1xf32>
    %408 = math.rsqrt %407 : vector<16x1xf32>
    %409 = vector.broadcast %408 : vector<16x1xf32> to vector<16x32xf32>
    %410 = arith.mulf %400, %409 : vector<16x32xf32>
    %411 = vector.broadcast %392 : vector<1x32xf32> to vector<16x32xf32>
    %412 = arith.mulf %410, %411 : vector<16x32xf32>
    %413 = vector.broadcast %394 : vector<1x32xf32> to vector<16x32xf32>
    %414 = arith.addf %412, %413 : vector<16x32xf32>
    %c1_158 = arith.constant 1 : index
    %c0_159 = arith.constant 0 : index
    %c0_160 = arith.constant 0 : index
    %415 = vector.load %arg7[%c1_158, %c0_159, %c0_160] : memref<2x32x64xf32, #tpu.memory_space<vmem>>, vector<1x32x64xf32>
    %416 = vector.shape_cast %415 : vector<1x32x64xf32> to vector<32x64xf32>
    %cst_161 = arith.constant dense<0.000000e+00> : vector<16x64xf32>
    %417 = tpu.matmul %414, %416, %cst_161 {dimension_numbers = #tpu.dot_dimension_numbers<[1], [0], [0], [1], [0, 0, 1, 1], [], []>} : vector<16x32xf32>, vector<32x64xf32>, vector<16x64xf32> -> vector<16x64xf32>
    %c1_162 = arith.constant 1 : index
    %c0_163 = arith.constant 0 : index
    %c0_164 = arith.constant 0 : index
    %418 = vector.load %arg8[%c1_162, %c0_163, %c0_164] : memref<2x1x64xf32, #tpu.memory_space<vmem>>, vector<1x1x64xf32>
    %419 = vector.shape_cast %418 : vector<1x1x64xf32> to vector<1x64xf32>
    %420 = vector.broadcast %419 : vector<1x64xf32> to vector<16x64xf32>
    %421 = arith.addf %417, %420 : vector<16x64xf32>
    %cst_165 = arith.constant 5.000000e-01 : f32
    %422 = vector.broadcast %cst_165 : f32 to vector<16x64xf32>
    %423 = arith.mulf %422, %421 : vector<16x64xf32>
    %cst_166 = arith.constant 4.471500e-02 : f32
    %424 = vector.broadcast %cst_166 : f32 to vector<16x64xf32>
    %425 = arith.mulf %424, %421 : vector<16x64xf32>
    %426 = arith.mulf %425, %421 : vector<16x64xf32>
    %427 = arith.mulf %426, %421 : vector<16x64xf32>
    %428 = arith.addf %421, %427 : vector<16x64xf32>
    %cst_167 = arith.constant 0.797884583 : f32
    %429 = vector.broadcast %cst_167 : f32 to vector<16x64xf32>
    %430 = arith.mulf %429, %428 : vector<16x64xf32>
    %431 = math.tanh %430 : vector<16x64xf32>
    %cst_168 = arith.constant 1.000000e+00 : f32
    %432 = vector.broadcast %cst_168 : f32 to vector<16x64xf32>
    %433 = arith.addf %432, %431 : vector<16x64xf32>
    %434 = arith.mulf %423, %433 : vector<16x64xf32>
    %c1_169 = arith.constant 1 : index
    %c0_170 = arith.constant 0 : index
    %c0_171 = arith.constant 0 : index
    %435 = vector.load %arg9[%c1_169, %c0_170, %c0_171] : memref<2x64x32xf32, #tpu.memory_space<vmem>>, vector<1x64x32xf32>
    %436 = vector.shape_cast %435 : vector<1x64x32xf32> to vector<64x32xf32>
    %cst_172 = arith.constant dense<0.000000e+00> : vector<16x32xf32>
    %437 = tpu.matmul %434, %436, %cst_172 {dimension_numbers = #tpu.dot_dimension_numbers<[1], [0], [0], [1], [0, 0, 1, 1], [], []>} : vector<16x64xf32>, vector<64x32xf32>, vector<16x32xf32> -> vector<16x32xf32>
    %c1_173 = arith.constant 1 : index
    %c0_174 = arith.constant 0 : index
    %c0_175 = arith.constant 0 : index
    %438 = vector.load %arg10[%c1_173, %c0_174, %c0_175] : memref<2x1x32xf32, #tpu.memory_space<vmem>>, vector<1x1x32xf32>
    %439 = vector.shape_cast %438 : vector<1x1x32xf32> to vector<1x32xf32>
    %440 = vector.broadcast %439 : vector<1x32xf32> to vector<16x32xf32>
    %441 = arith.addf %437, %440 : vector<16x32xf32>
    %442 = arith.addf %441, %414 : vector<16x32xf32>
    %c1_176 = arith.constant 1 : index
    %c0_177 = arith.constant 0 : index
    %c0_178 = arith.constant 0 : index
    %443 = vector.load %arg11[%c1_176, %c0_177, %c0_178] : memref<2x1x32xf32, #tpu.memory_space<vmem>>, vector<1x1x32xf32>
    %444 = vector.shape_cast %443 : vector<1x1x32xf32> to vector<1x32xf32>
    %c1_179 = arith.constant 1 : index
    %c0_180 = arith.constant 0 : index
    %c0_181 = arith.constant 0 : index
    %445 = vector.load %arg12[%c1_179, %c0_180, %c0_181] : memref<2x1x32xf32, #tpu.memory_space<vmem>>, vector<1x1x32xf32>
    %446 = vector.shape_cast %445 : vector<1x1x32xf32> to vector<1x32xf32>
    %cst_182 = arith.constant dense<0.000000e+00> : vector<16xf32>
    %447 = vector.multi_reduction <add>, %442, %cst_182 [1] : vector<16x32xf32> to vector<16xf32>
    %448 = vector.shape_cast %447 : vector<16xf32> to vector<16x1xf32>
    %cst_183 = arith.constant 3.200000e+01 : f32
    %449 = vector.broadcast %cst_183 : f32 to vector<16x1xf32>
    %450 = arith.divf %448, %449 : vector<16x1xf32>
    %451 = vector.broadcast %450 : vector<16x1xf32> to vector<16x32xf32>
    %452 = arith.subf %442, %451 : vector<16x32xf32>
    %453 = arith.mulf %452, %452 : vector<16x32xf32>
    %cst_184 = arith.constant dense<0.000000e+00> : vector<16xf32>
    %454 = vector.multi_reduction <add>, %453, %cst_184 [1] : vector<16x32xf32> to vector<16xf32>
    %455 = vector.shape_cast %454 : vector<16xf32> to vector<16x1xf32>
    %cst_185 = arith.constant 3.200000e+01 : f32
    %456 = vector.broadcast %cst_185 : f32 to vector<16x1xf32>
    %457 = arith.divf %455, %456 : vector<16x1xf32>
    %cst_186 = arith.constant 9.99999996E-13 : f32
    %458 = vector.broadcast %cst_186 : f32 to vector<16x1xf32>
    %459 = arith.addf %457, %458 : vector<16x1xf32>
    %460 = math.rsqrt %459 : vector<16x1xf32>
    %461 = vector.broadcast %460 : vector<16x1xf32> to vector<16x32xf32>
    %462 = arith.mulf %452, %461 : vector<16x32xf32>
    %463 = vector.broadcast %444 : vector<1x32xf32> to vector<16x32xf32>
    %464 = arith.mulf %462, %463 : vector<16x32xf32>
    %465 = vector.broadcast %446 : vector<1x32xf32> to vector<16x32xf32>
    %466 = arith.addf %464, %465 : vector<16x32xf32>
    %467 = vector.extract_strided_slice %466 {offsets = [0, 0], sizes = [1, 32], strides = [1, 1]} : vector<16x32xf32> to vector<1x32xf32>
    %468 = vector.extract_strided_slice %466 {offsets = [8, 0], sizes = [1, 32], strides = [1, 1]} : vector<16x32xf32> to vector<1x32xf32>
    %469 = tpu.concatenate %467, %468 in 0 : vector<1x32xf32>, vector<1x32xf32> -> vector<2x32xf32>
    %c0_187 = arith.constant 0 : index
    %c0_188 = arith.constant 0 : index
    %470 = vector.load %arg13[%c0_187, %c0_188] : memref<32x32xf32, #tpu.memory_space<vmem>>, vector<32x32xf32>
    %cst_189 = arith.constant dense<0.000000e+00> : vector<2x32xf32>
    %471 = tpu.matmul %469, %470, %cst_189 {dimension_numbers = #tpu.dot_dimension_numbers<[1], [0], [0], [1], [0, 0, 1, 1], [], []>} : vector<2x32xf32>, vector<32x32xf32>, vector<2x32xf32> -> vector<2x32xf32>
    %c0_190 = arith.constant 0 : index
    %c0_191 = arith.constant 0 : index
    %472 = vector.load %arg14[%c0_190, %c0_191] : memref<1x32xf32, #tpu.memory_space<vmem>>, vector<1x32xf32>
    %473 = vector.broadcast %472 : vector<1x32xf32> to vector<2x32xf32>
    %474 = arith.addf %471, %473 : vector<2x32xf32>
    %475 = math.tanh %474 : vector<2x32xf32>
    %c0_192 = arith.constant 0 : index
    %c0_193 = arith.constant 0 : index
    %476 = vector.load %arg15[%c0_192, %c0_193] : memref<32x2xf32, #tpu.memory_space<vmem>>, vector<32x2xf32>
    %cst_194 = arith.constant dense<0.000000e+00> : vector<2x2xf32>
    %477 = tpu.matmul %475, %476, %cst_194 {dimension_numbers = #tpu.dot_dimension_numbers<[1], [0], [0], [1], [0, 0, 1, 1], [], []>} : vector<2x32xf32>, vector<32x2xf32>, vector<2x2xf32> -> vector<2x2xf32>
    %c0_195 = arith.constant 0 : index
    %c0_196 = arith.constant 0 : index
    %478 = vector.load %arg16[%c0_195, %c0_196] : memref<1x2xf32, #tpu.memory_space<vmem>>, vector<1x2xf32>
    %479 = vector.broadcast %478 : vector<1x2xf32> to vector<2x2xf32>
    %480 = arith.addf %477, %479 : vector<2x2xf32>
    %cst_197 = arith.constant dense<0xFF800000> : vector<2xf32>
    %481 = vector.multi_reduction <maximumf>, %480, %cst_197 [1] : vector<2x2xf32> to vector<2xf32>
    %482 = vector.shape_cast %481 : vector<2xf32> to vector<2x1xf32>
    %483 = vector.broadcast %482 : vector<2x1xf32> to vector<2x2xf32>
    %484 = arith.subf %480, %483 : vector<2x2xf32>
    %485 = math.exp %484 : vector<2x2xf32>
    %cst_198 = arith.constant dense<0.000000e+00> : vector<2xf32>
    %486 = vector.multi_reduction <add>, %485, %cst_198 [1] : vector<2x2xf32> to vector<2xf32>
    %487 = vector.shape_cast %486 : vector<2xf32> to vector<2x1xf32>
    %488 = tpu.reciprocal %487 {approx = true} : vector<2x1xf32> -> vector<2x1xf32>
    %489 = vector.broadcast %488 : vector<2x1xf32> to vector<2x2xf32>
    %490 = arith.mulf %485, %489 : vector<2x2xf32>
    %491 = vector.extract_strided_slice %490 {offsets = [0, 1], sizes = [2, 1], strides = [1, 1]} : vector<2x2xf32> to vector<2x1xf32>
    %c0_199 = arith.constant 0 : index
    %c0_200 = arith.constant 0 : index
    %492 = vector.load %arg17[%c0_199, %c0_200] : memref<2x1xf32, #tpu.memory_space<vmem>>, vector<2x1xf32>
    tpu.vector_store %arg17[%c0_199, %c0_200], %491 {strides = array<i32>} : memref<2x1xf32, #tpu.memory_space<vmem>>, vector<2x1xf32>,
    return
  }
}

</mosaic_0001>

<llo_original>
// kernel: tpu_custom_call.1
$region0: #{tpu_custom_call.1}
  #allocation0 [shape = 'u32[]', space=smem, size = 0x4, offset = 0x4, fixed_abs, tag = 'smem constant byte address 0x4 - core index']
  #allocation1 [shape = 'u32[144,128]{1,0:T(1,128)}', space=vmem, size = 0x12000, scoped, tag = 'internal scratch']
  %s0 = inlined_call_operand.hbm [shape: f32[16,32], index: 0, kind: input, shape index: {}]
  %s1 = inlined_call_operand.vmem [shape: f32[2,32,96], index: 1, kind: input, shape index: {}]
  %s2 = inlined_call_operand.vmem [shape: f32[2,1,96], index: 2, kind: input, shape index: {}]
  %s3 = inlined_call_operand.vmem [shape: f32[2,32,32], index: 3, kind: input, shape index: {}]
  %s4 = inlined_call_operand.vmem [shape: f32[2,1,32], index: 4, kind: input, shape index: {}]
  %s5 = inlined_call_operand.vmem [shape: f32[2,1,32], index: 5, kind: input, shape index: {}]
  %s6 = inlined_call_operand.vmem [shape: f32[2,1,32], index: 6, kind: input, shape index: {}]
  %s7 = inlined_call_operand.vmem [shape: f32[2,32,64], index: 7, kind: input, shape index: {}]
  %s8 = inlined_call_operand.vmem [shape: f32[2,1,64], index: 8, kind: input, shape index: {}]
  %s9 = inlined_call_operand.vmem [shape: f32[2,64,32], index: 9, kind: input, shape index: {}]
  %s10 = inlined_call_operand.vmem [shape: f32[2,1,32], index: 10, kind: input, shape index: {}]
  %s11 = inlined_call_operand.vmem [shape: f32[2,1,32], index: 11, kind: input, shape index: {}]
  %s12 = inlined_call_operand.vmem [shape: f32[2,1,32], index: 12, kind: input, shape index: {}]
  %s13 = inlined_call_operand.vmem [shape: f32[32,32], index: 13, kind: input, shape index: {}]
  %s14 = inlined_call_operand.vmem [shape: f32[1,32], index: 14, kind: input, shape index: {}]
  %s15 = inlined_call_operand.vmem [shape: f32[32,2], index: 15, kind: input, shape index: {}]
  %s16 = inlined_call_operand.vmem [shape: f32[1,2], index: 16, kind: input, shape index: {}]
  %s17 = inlined_call_operand.vmem [shape: f32[2,1], index: 17, kind: output, shape index: {}]
  %s18 = sld [smem:[#allocation0]]
  $region82: #{tpu_custom_call.1} parent=0
    _
  %s20 = ssub.s32 1, %s18
  %s21 = scalar_select 0, %s20, %s18
  $region1: #{tpu_custom_call.1} parent=0
    #allocation2 [shape = 'u8[8192]{0}', space=vmem, size = 0x2000, scoped, tag = 'input window, operand 0, single buffered']
    #allocation3 [shape = 's32[1]{0}', space=sflag, size = 0x4, scoped, tag = 'scoped memory for tpu_custom_call.1']
    %22 = vsyncpa [#allocation3], 0
    // Predicated region
    $region2: #{tpu_custom_call.1} parent=1 // pred_check
      _
    $region3: #{tpu_custom_call.1} parent=1 // pred_check_branch
      %24 = sbr.rel (0) target = $region5
    $region4: #{tpu_custom_call.1} parent=1 // pred_region
      %s26 = ssub.s32 256, 256
      %27 = vsyncadd [#allocation3], %s26
      %s28 = sshll.u32 [#allocation2], 4
      %s29 = int_to_ptr.vmem [resolvable:$true] %s28
      %34 = dma.hbm_to_vmem [thread:$0]  %s0, 256, %s29, [#allocation3], 128, 128, 8
    $region5: #{tpu_custom_call.1} parent=1 // pred_fallthru
      _
    // Predicated region
    $region6: #{tpu_custom_call.1} parent=1 // pred_check
      _
    $region7: #{tpu_custom_call.1} parent=1 // pred_check_branch
      %36 = sbr.rel (0) target = $region9
    $region8: #{tpu_custom_call.1} parent=1 // pred_region
      _
    $region9: #{tpu_custom_call.1} parent=1 // pred_fallthru
      _
    // Predicated region
    $region10: #{tpu_custom_call.1} parent=1 // pred_check
      _
    $region11: #{tpu_custom_call.1} parent=1 // pred_check_branch
      %38 = sbr.rel (0) target = $region13
    $region12: #{tpu_custom_call.1} parent=1 // pred_region
      _
    $region13: #{tpu_custom_call.1} parent=1 // pred_fallthru
      _
    // Predicated region
    $region14: #{tpu_custom_call.1} parent=1 // pred_check
      _
    $region15: #{tpu_custom_call.1} parent=1 // pred_check_branch
      %40 = sbr.rel (0) target = $region17
    $region16: #{tpu_custom_call.1} parent=1 // pred_region
      _
    $region17: #{tpu_custom_call.1} parent=1 // pred_fallthru
      _
    // Predicated region
    $region18: #{tpu_custom_call.1} parent=1 // pred_check
      _
    $region19: #{tpu_custom_call.1} parent=1 // pred_check_branch
      %42 = sbr.rel (0) target = $region21
    $region20: #{tpu_custom_call.1} parent=1 // pred_region
      _
    $region21: #{tpu_custom_call.1} parent=1 // pred_fallthru
      _
    // Predicated region
    $region22: #{tpu_custom_call.1} parent=1 // pred_check
      _
    $region23: #{tpu_custom_call.1} parent=1 // pred_check_branch
      %44 = sbr.rel (0) target = $region25
    $region24: #{tpu_custom_call.1} parent=1 // pred_region
      _
    $region25: #{tpu_custom_call.1} parent=1 // pred_fallthru
      _
    // Predicated region
    $region26: #{tpu_custom_call.1} parent=1 // pred_check
      _
    $region27: #{tpu_custom_call.1} parent=1 // pred_check_branch
      %46 = sbr.rel (0) target = $region29
    $region28: #{tpu_custom_call.1} parent=1 // pred_region
      _
    $region29: #{tpu_custom_call.1} parent=1 // pred_fallthru
      _
    // Predicated region
    $region30: #{tpu_custom_call.1} parent=1 // pred_check
      _
    $region31: #{tpu_custom_call.1} parent=1 // pred_check_branch
      %48 = sbr.rel (0) target = $region33
    $region32: #{tpu_custom_call.1} parent=1 // pred_region
      _
    $region33: #{tpu_custom_call.1} parent=1 // pred_fallthru
      _
    // Predicated region
    $region34: #{tpu_custom_call.1} parent=1 // pred_check
      _
    $region35: #{tpu_custom_call.1} parent=1 // pred_check_branch
      %50 = sbr.rel (0) target = $region37
    $region36: #{tpu_custom_call.1} parent=1 // pred_region
      _
    $region37: #{tpu_custom_call.1} parent=1 // pred_fallthru
      _
    // Predicated region
    $region38: #{tpu_custom_call.1} parent=1 // pred_check
      _
    $region39: #{tpu_custom_call.1} parent=1 // pred_check_branch
      %52 = sbr.rel (0) target = $region41
    $region40: #{tpu_custom_call.1} parent=1 // pred_region
      _
    $region41: #{tpu_custom_call.1} parent=1 // pred_fallthru
      _
    // Predicated region
    $region42: #{tpu_custom_call.1} parent=1 // pred_check
      _
    $region43: #{tpu_custom_call.1} parent=1 // pred_check_branch
      %54 = sbr.rel (0) target = $region45
    $region44: #{tpu_custom_call.1} parent=1 // pred_region
      _
    $region45: #{tpu_custom_call.1} parent=1 // pred_fallthru
      _
    // Predicated region
    $region46: #{tpu_custom_call.1} parent=1 // pred_check
      _
    $region47: #{tpu_custom_call.1} parent=1 // pred_check_branch
      %56 = sbr.rel (0) target = $region49
    $region48: #{tpu_custom_call.1} parent=1 // pred_region
      _
    $region49: #{tpu_custom_call.1} parent=1 // pred_fallthru
      _
    // Predicated region
    $region50: #{tpu_custom_call.1} parent=1 // pred_check
      _
    $region51: #{tpu_custom_call.1} parent=1 // pred_check_branch
      %58 = sbr.rel (0) target = $region53
    $region52: #{tpu_custom_call.1} parent=1 // pred_region
      _
    $region53: #{tpu_custom_call.1} parent=1 // pred_fallthru
      _
    // Predicated region
    $region54: #{tpu_custom_call.1} parent=1 // pred_check
      _
    $region55: #{tpu_custom_call.1} parent=1 // pred_check_branch
      %60 = sbr.rel (0) target = $region57
    $region56: #{tpu_custom_call.1} parent=1 // pred_region
      _
    $region57: #{tpu_custom_call.1} parent=1 // pred_fallthru
      _
    // Predicated region
    $region58: #{tpu_custom_call.1} parent=1 // pred_check
      _
    $region59: #{tpu_custom_call.1} parent=1 // pred_check_branch
      %62 = sbr.rel (0) target = $region61
    $region60: #{tpu_custom_call.1} parent=1 // pred_region
      _
    $region61: #{tpu_custom_call.1} parent=1 // pred_fallthru
      _
    // Predicated region
    $region62: #{tpu_custom_call.1} parent=1 // pred_check
      _
    $region63: #{tpu_custom_call.1} parent=1 // pred_check_branch
      %64 = sbr.rel (0) target = $region65
    $region64: #{tpu_custom_call.1} parent=1 // pred_region
      _
    $region65: #{tpu_custom_call.1} parent=1 // pred_fallthru
      _
    // Predicated region
    $region66: #{tpu_custom_call.1} parent=1 // pred_check
      _
    $region67: #{tpu_custom_call.1} parent=1 // pred_check_branch
      %66 = sbr.rel (0) target = $region69
    $region68: #{tpu_custom_call.1} parent=1 // pred_region
      _
    $region69: #{tpu_custom_call.1} parent=1 // pred_fallthru
      _
    // Predicated region
    $region70: #{tpu_custom_call.1} parent=1 // pred_check
      _
    $region71: #{tpu_custom_call.1} parent=1 // pred_check_branch
      %68 = sbr.rel (0) target = $region73
    $region72: #{tpu_custom_call.1} parent=1 // pred_region
      %69 = dma.done [#allocation3], 256
    $region73: #{tpu_custom_call.1} parent=1 // pred_fallthru
      _
    %v70 = vld [vmem:[#allocation2] sm:$0xff]
    %v71 = vld [vmem:[#allocation2 + $0x8] sm:$0xff]
    %v72 = vld [vmem:[%s1] sm:$0xff]
    %v73 = vld [vmem:[%s1 + $0x8] sm:$0xff]
    %v74 = vld [vmem:[%s1 + $0x10] sm:$0xff]
    %v75 = vld [vmem:[%s1 + $0x18] sm:$0xff]
    %v76 = vld [vmem:[%s2] sm:$0x1]
    %v78 = vlaneseq
    %v79 = vshrl.u32 %v78, 7
    %v80 = vsub.s32 0, %v79
    %v81 = vrot.slane %v76, %v80
    %vm83 = vcmask 261120
    %v85 = vsel %vm83, %v70, 0
    %v88 = vsel %vm83, %v71, 0
    %90 = vmatprep.subr.mxu0 0.0
    %91 = vmatpush1.msra.mxu0 0.0
    %92 = vmatprep.subr.mxu0 0.0
    %93 = vmatpush1.msra.mxu0 0.0
    %94 = vmatprep.subr.mxu0 0.0
    %95 = vmatpush1.msra.mxu0 0.0
    %96 = vmatprep.subr.mxu0 0.0
    %97 = vmatpush1.msra.mxu0 0.0
    %98 = vmatprep.subr.mxu0 0.0
    %99 = vmatpush1.msra.mxu0 0.0
    %100 = vmatprep.subr.mxu0 0.0
    %101 = vmatpush1.msra.mxu0 0.0
    %102 = vmatprep.subr.mxu0 0.0
    %103 = vmatpush1.msra.mxu0 0.0
    %104 = vmatprep.subr.mxu0 0.0
    %105 = vmatpush1.msra.mxu0 0.0
    %106 = vmatprep.subr.mxu0 0.0
    %107 = vmatpush1.msra.mxu0 0.0
    %108 = vmatprep.subr.mxu0 0.0
    %109 = vmatpush1.msra.mxu0 0.0
    %110 = vmatprep.subr.mxu0 0.0
    %111 = vmatpush1.msra.mxu0 0.0
    %112 = vmatprep.subr.mxu0 0.0
    %113 = vmatpush1.msra.mxu0 0.0
    %114 = vmatprep.subr.mxu0 0.0
    %115 = vmatpush1.msra.mxu0 %v75
    %116 = vmatprep.subr.mxu0 0.0
    %117 = vmatpush1.msra.mxu0 %v74
    %118 = vmatprep.subr.mxu0 0.0
    %119 = vmatpush1.msra.mxu0 %v73
    %120 = vmatprep.subr.mxu0 0.0
    %121 = vmatpush1.msra.mxu0 %v72
    %122 = vmatprep.subr.mxu0 0.0
    %123 = vmatpush2.msra.mxu0 0.0
    %124 = vmatprep.subr.mxu0 0.0
    %125 = vmatpush2.msra.mxu0 0.0
    %126 = vmatprep.subr.mxu0 0.0
    %127 = vmatpush2.msra.mxu0 0.0
    %128 = vmatprep.subr.mxu0 0.0
    %129 = vmatpush2.msra.mxu0 0.0
    %130 = vmatprep.subr.mxu0 0.0
    %131 = vmatpush2.msra.mxu0 0.0
    %132 = vmatprep.subr.mxu0 0.0
    %133 = vmatpush2.msra.mxu0 0.0
    %134 = vmatprep.subr.mxu0 0.0
    %135 = vmatpush2.msra.mxu0 0.0
    %136 = vmatprep.subr.mxu0 0.0
    %137 = vmatpush2.msra.mxu0 0.0
    %138 = vmatprep.subr.mxu0 0.0
    %139 = vmatpush2.msra.mxu0 0.0
    %140 = vmatprep.subr.mxu0 0.0
    %141 = vmatpush2.msra.mxu0 0.0
    %142 = vmatprep.subr.mxu0 0.0
    %143 = vmatpush2.msra.mxu0 0.0
    %144 = vmatprep.subr.mxu0 0.0
    %145 = vmatpush2.msra.mxu0 0.0
    %146 = vmatprep.subr.mxu0 0.0
    %147 = vmatpush2.msra.mxu0 0.0
    %148 = vmatprep.subr.mxu0 0.0
    %149 = vmatpush2.msra.mxu0 0.0
    %150 = vmatprep.subr.mxu0 0.0
    %151 = vmatpush2.msra.mxu0 0.0
    %152 = vmatprep.subr.mxu0 0.0
    %153 = vmatpush2.msra.mxu0 0.0
    %154 = vmatprep.mubr.f32.mxu0 0.0
    %155 = vmatmul.mubr.f32.gmra.mxu0 %v85
    %v156 = vpop.f32.mrf.mxu0
    %v157 = vadd.f32 %v81, %v156
    %v158 = vpop.f32.mrf.mxu0
    %159 = vmatprep.mubr.f32.mxu0 0.0
    %160 = vmatmul.mubr.f32.gmra.mxu0 %v88
    %v161 = vpop.f32.mrf.mxu0
    %v162 = vadd.f32 %v81, %v161
    %v163 = vpop.f32.mrf.mxu0
    %164 = vdwg.mxu0
    %166 = vrot.lane.b32.xlu0 %v157, 96
    %v167 = vpop.permute.xlu0 %166
    %vm168 = vcmask 64512
    %v169 = vsel %vm168, %v157, 0
    %v171 = vsel %vm168, %v167, 0
    %173 = vmatprep.subr.mxu0 0.0
    %174 = vmatpush1.xpose.msra.mxu0 0.0
    %175 = vmatprep.subr.mxu0 0.0
    %176 = vmatpush1.xpose.msra.mxu0 0.0
    %177 = vmatprep.subr.mxu0 0.0
    %178 = vmatpush1.xpose.msra.mxu0 0.0
    %179 = vmatprep.subr.mxu0 0.0
    %180 = vmatpush1.xpose.msra.mxu0 0.0
    %181 = vmatprep.subr.mxu0 0.0
    %182 = vmatpush1.xpose.msra.mxu0 0.0
    %183 = vmatprep.subr.mxu0 0.0
    %184 = vmatpush1.xpose.msra.mxu0 0.0
    %185 = vmatprep.subr.mxu0 0.0
    %186 = vmatpush1.xpose.msra.mxu0 0.0
    %187 = vmatprep.subr.mxu0 0.0
    %188 = vmatpush1.xpose.msra.mxu0 0.0
    %189 = vmatprep.subr.mxu0 0.0
    %190 = vmatpush1.xpose.msra.mxu0 0.0
    %191 = vmatprep.subr.mxu0 0.0
    %192 = vmatpush1.xpose.msra.mxu0 0.0
    %193 = vmatprep.subr.mxu0 0.0
    %194 = vmatpush1.xpose.msra.mxu0 0.0
    %195 = vmatprep.subr.mxu0 0.0
    %196 = vmatpush1.xpose.msra.mxu0 0.0
    %197 = vmatprep.subr.mxu0 0.0
    %198 = vmatpush1.xpose.msra.mxu0 0.0
    %199 = vmatprep.subr.mxu0 0.0
    %200 = vmatpush1.xpose.msra.mxu0 0.0
    %201 = vmatprep.subr.mxu0 0.0
    %202 = vmatpush1.xpose.msra.mxu0 0.0
    %203 = vmatprep.subr.mxu0 0.0
    %204 = vmatpush1.xpose.msra.mxu0 %v171
    %205 = vmatprep.subr.mxu0 0.0
    %206 = vmatpush2.xpose.msra.mxu0 0.0
    %207 = vmatprep.subr.mxu0 0.0
    %208 = vmatpush2.xpose.msra.mxu0 0.0
    %209 = vmatprep.subr.mxu0 0.0
    %210 = vmatpush2.xpose.msra.mxu0 0.0
    %211 = vmatprep.subr.mxu0 0.0
    %212 = vmatpush2.xpose.msra.mxu0 0.0
    %213 = vmatprep.subr.mxu0 0.0
    %214 = vmatpush2.xpose.msra.mxu0 0.0
    %215 = vmatprep.subr.mxu0 0.0
    %216 = vmatpush2.xpose.msra.mxu0 0.0
    %217 = vmatprep.subr.mxu0 0.0
    %218 = vmatpush2.xpose.msra.mxu0 0.0
    %219 = vmatprep.subr.mxu0 0.0
    %220 = vmatpush2.xpose.msra.mxu0 0.0
    %221 = vmatprep.subr.mxu0 0.0
    %222 = vmatpush2.xpose.msra.mxu0 0.0
    %223 = vmatprep.subr.mxu0 0.0
    %224 = vmatpush2.xpose.msra.mxu0 0.0
    %225 = vmatprep.subr.mxu0 0.0
    %226 = vmatpush2.xpose.msra.mxu0 0.0
    %227 = vmatprep.subr.mxu0 0.0
    %228 = vmatpush2.xpose.msra.mxu0 0.0
    %229 = vmatprep.subr.mxu0 0.0
    %230 = vmatpush2.xpose.msra.mxu0 0.0
    %231 = vmatprep.subr.mxu0 0.0
    %232 = vmatpush2.xpose.msra.mxu0 0.0
    %233 = vmatprep.subr.mxu0 0.0
    %234 = vmatpush2.xpose.msra.mxu0 0.0
    %235 = vmatprep.subr.mxu0 0.0
    %236 = vmatpush2.xpose.msra.mxu0 0.0
    %237 = vmatprep.mubr.f32.mxu0 0.0
    %238 = vmatmul.mubr.f32.gmra.mxu0 %v169
    %v239 = vpop.f32.mrf.mxu0
    %v240 = vadd.f32 0.0, %v239
    %v241 = vpop.f32.mrf.mxu0
    %242 = vdwg.mxu0
    %v243 = vmul.f32 %v240, 0.35355338
    %v244 = vsel %vm168, %v243, -inf
    %245 = vmax.xlane.f32.xlu0 %v244
    %v246 = vpop.xlane.xlu0 %245
    %v247 = vsub.f32 %v243, %v246
    %v248 = vmul.f32 %v247, 1.442695
    %v249 = vpow.pop %v248
    %v250 = vsel %vm168, %v249, 0.0
    %251 = vadd.xlane.f32.xlu0 %v250
    %v252 = vpop.xlane.xlu0 %251
    %v253 = vrcp.pop %v252
    %v254 = vmul.f32 %v249, %v253
    %255 = vrot.lane.b32.xlu0 %v157, 64
    %v256 = vpop.permute.xlu0 %255
    %v259 = vsel %vm168, %v254, 0
    %261 = vmatprep.subr.mxu0 0.0
    %262 = vmatpush1.msra.mxu0 0.0
    %263 = vmatprep.subr.mxu0 0.0
    %264 = vmatpush1.msra.mxu0 0.0
    %265 = vmatprep.subr.mxu0 0.0
    %266 = vmatpush1.msra.mxu0 0.0
    %267 = vmatprep.subr.mxu0 0.0
    %268 = vmatpush1.msra.mxu0 0.0
    %269 = vmatprep.subr.mxu0 0.0
    %270 = vmatpush1.msra.mxu0 0.0
    %271 = vmatprep.subr.mxu0 0.0
    %272 = vmatpush1.msra.mxu0 0.0
    %273 = vmatprep.subr.mxu0 0.0
    %274 = vmatpush1.msra.mxu0 0.0
    %275 = vmatprep.subr.mxu0 0.0
    %276 = vmatpush1.msra.mxu0 0.0
    %277 = vmatprep.subr.mxu0 0.0
    %278 = vmatpush1.msra.mxu0 0.0
    %279 = vmatprep.subr.mxu0 0.0
    %280 = vmatpush1.msra.mxu0 0.0
    %281 = vmatprep.subr.mxu0 0.0
    %282 = vmatpush1.msra.mxu0 0.0
    %283 = vmatprep.subr.mxu0 0.0
    %284 = vmatpush1.msra.mxu0 0.0
    %285 = vmatprep.subr.mxu0 0.0
    %286 = vmatpush1.msra.mxu0 0.0
    %287 = vmatprep.subr.mxu0 0.0
    %288 = vmatpush1.msra.mxu0 0.0
    %289 = vmatprep.subr.mxu0 0.0
    %290 = vmatpush1.msra.mxu0 0.0
    %291 = vmatprep.subr.mxu0 0.0
    %292 = vmatpush1.msra.mxu0 %v256
    %293 = vmatprep.subr.mxu0 0.0
    %294 = vmatpush2.msra.mxu0 0.0
    %295 = vmatprep.subr.mxu0 0.0
    %296 = vmatpush2.msra.mxu0 0.0
    %297 = vmatprep.subr.mxu0 0.0
    %298 = vmatpush2.msra.mxu0 0.0
    %299 = vmatprep.subr.mxu0 0.0
    %300 = vmatpush2.msra.mxu0 0.0
    %301 = vmatprep.subr.mxu0 0.0
    %302 = vmatpush2.msra.mxu0 0.0
    %303 = vmatprep.subr.mxu0 0.0
    %304 = vmatpush2.msra.mxu0 0.0
    %305 = vmatprep.subr.mxu0 0.0
    %306 = vmatpush2.msra.mxu0 0.0
    %307 = vmatprep.subr.mxu0 0.0
    %308 = vmatpush2.msra.mxu0 0.0
    %309 = vmatprep.subr.mxu0 0.0
    %310 = vmatpush2.msra.mxu0 0.0
    %311 = vmatprep.subr.mxu0 0.0
    %312 = vmatpush2.msra.mxu0 0.0
    %313 = vmatprep.subr.mxu0 0.0
    %314 = vmatpush2.msra.mxu0 0.0
    %315 = vmatprep.subr.mxu0 0.0
    %316 = vmatpush2.msra.mxu0 0.0
    %317 = vmatprep.subr.mxu0 0.0
    %318 = vmatpush2.msra.mxu0 0.0
    %319 = vmatprep.subr.mxu0 0.0
    %320 = vmatpush2.msra.mxu0 0.0
    %321 = vmatprep.subr.mxu0 0.0
    %322 = vmatpush2.msra.mxu0 0.0
    %323 = vmatprep.subr.mxu0 0.0
    %324 = vmatpush2.msra.mxu0 0.0
    %325 = vmatprep.mubr.f32.mxu0 0.0
    %326 = vmatmul.mubr.f32.gmra.mxu0 %v259
    %v327 = vpop.f32.mrf.mxu0
    %v328 = vadd.f32 0.0, %v327
    %v329 = vpop.f32.mrf.mxu0
    %330 = vdwg.mxu0
    %331 = vrot.lane.b32.xlu0 %v157, 120
    %v332 = vpop.permute.xlu0 %331
    %333 = vrot.lane.b32.xlu0 %v157, 88
    %v334 = vpop.permute.xlu0 %333
    %v335 = vsel %vm168, %v332, 0
    %v337 = vsel %vm168, %v334, 0
    %339 = vmatprep.subr.mxu0 0.0
    %340 = vmatpush1.xpose.msra.mxu0 0.0
    %341 = vmatprep.subr.mxu0 0.0
    %342 = vmatpush1.xpose.msra.mxu0 0.0
    %343 = vmatprep.subr.mxu0 0.0
    %344 = vmatpush1.xpose.msra.mxu0 0.0
    %345 = vmatprep.subr.mxu0 0.0
    %346 = vmatpush1.xpose.msra.mxu0 0.0
    %347 = vmatprep.subr.mxu0 0.0
    %348 = vmatpush1.xpose.msra.mxu0 0.0
    %349 = vmatprep.subr.mxu0 0.0
    %350 = vmatpush1.xpose.msra.mxu0 0.0
    %351 = vmatprep.subr.mxu0 0.0
    %352 = vmatpush1.xpose.msra.mxu0 0.0
    %353 = vmatprep.subr.mxu0 0.0
    %354 = vmatpush1.xpose.msra.mxu0 0.0
    %355 = vmatprep.subr.mxu0 0.0
    %356 = vmatpush1.xpose.msra.mxu0 0.0
    %357 = vmatprep.subr.mxu0 0.0
    %358 = vmatpush1.xpose.msra.mxu0 0.0
    %359 = vmatprep.subr.mxu0 0.0
    %360 = vmatpush1.xpose.msra.mxu0 0.0
    %361 = vmatprep.subr.mxu0 0.0
    %362 = vmatpush1.xpose.msra.mxu0 0.0
    %363 = vmatprep.subr.mxu0 0.0
    %364 = vmatpush1.xpose.msra.mxu0 0.0
    %365 = vmatprep.subr.mxu0 0.0
    %366 = vmatpush1.xpose.msra.mxu0 0.0
    %367 = vmatprep.subr.mxu0 0.0
    %368 = vmatpush1.xpose.msra.mxu0 0.0
    %369 = vmatprep.subr.mxu0 0.0
    %370 = vmatpush1.xpose.msra.mxu0 %v337
    %371 = vmatprep.subr.mxu0 0.0
    %372 = vmatpush2.xpose.msra.mxu0 0.0
    %373 = vmatprep.subr.mxu0 0.0
    %374 = vmatpush2.xpose.msra.mxu0 0.0
    %375 = vmatprep.subr.mxu0 0.0
    %376 = vmatpush2.xpose.msra.mxu0 0.0
    %377 = vmatprep.subr.mxu0 0.0
    %378 = vmatpush2.xpose.msra.mxu0 0.0
    %379 = vmatprep.subr.mxu0 0.0
    %380 = vmatpush2.xpose.msra.mxu0 0.0
    %381 = vmatprep.subr.mxu0 0.0
    %382 = vmatpush2.xpose.msra.mxu0 0.0
    %383 = vmatprep.subr.mxu0 0.0
    %384 = vmatpush2.xpose.msra.mxu0 0.0
    %385 = vmatprep.subr.mxu0 0.0
    %386 = vmatpush2.xpose.msra.mxu0 0.0
    %387 = vmatprep.subr.mxu0 0.0
    %388 = vmatpush2.xpose.msra.mxu0 0.0
    %389 = vmatprep.subr.mxu0 0.0
    %390 = vmatpush2.xpose.msra.mxu0 0.0
    %391 = vmatprep.subr.mxu0 0.0
    %392 = vmatpush2.xpose.msra.mxu0 0.0
    %393 = vmatprep.subr.mxu0 0.0
    %394 = vmatpush2.xpose.msra.mxu0 0.0
    %395 = vmatprep.subr.mxu0 0.0
    %396 = vmatpush2.xpose.msra.mxu0 0.0
    %397 = vmatprep.subr.mxu0 0.0
    %398 = vmatpush2.xpose.msra.mxu0 0.0
    %399 = vmatprep.subr.mxu0 0.0
    %400 = vmatpush2.xpose.msra.mxu0 0.0
    %401 = vmatprep.subr.mxu0 0.0
    %402 = vmatpush2.xpose.msra.mxu0 0.0
    %403 = vmatprep.mubr.f32.mxu0 0.0
    %404 = vmatmul.mubr.f32.gmra.mxu0 %v335
    %v405 = vpop.f32.mrf.mxu0
    %v406 = vadd.f32 0.0, %v405
    %v407 = vpop.f32.mrf.mxu0
    %408 = vdwg.mxu0
    %v409 = vmul.f32 %v406, 0.35355338
    %v410 = vsel %vm168, %v409, -inf
    %411 = vmax.xlane.f32.xlu0 %v410
    %v412 = vpop.xlane.xlu0 %411
    %v413 = vsub.f32 %v409, %v412
    %v414 = vmul.f32 %v413, 1.442695
    %v415 = vpow.pop %v414
    %v416 = vsel %vm168, %v415, 0.0
    %417 = vadd.xlane.f32.xlu0 %v416
    %v418 = vpop.xlane.xlu0 %417
    %v419 = vrcp.pop %v418
    %v420 = vmul.f32 %v415, %v419
    %421 = vrot.lane.b32.xlu0 %v157, 56
    %v422 = vpop.permute.xlu0 %421
    %v425 = vsel %vm168, %v420, 0
    %427 = vmatprep.subr.mxu0 0.0
    %428 = vmatpush1.msra.mxu0 0.0
    %429 = vmatprep.subr.mxu0 0.0
    %430 = vmatpush1.msra.mxu0 0.0
    %431 = vmatprep.subr.mxu0 0.0
    %432 = vmatpush1.msra.mxu0 0.0
    %433 = vmatprep.subr.mxu0 0.0
    %434 = vmatpush1.msra.mxu0 0.0
    %435 = vmatprep.subr.mxu0 0.0
    %436 = vmatpush1.msra.mxu0 0.0
    %437 = vmatprep.subr.mxu0 0.0
    %438 = vmatpush1.msra.mxu0 0.0
    %439 = vmatprep.subr.mxu0 0.0
    %440 = vmatpush1.msra.mxu0 0.0
    %441 = vmatprep.subr.mxu0 0.0
    %442 = vmatpush1.msra.mxu0 0.0
    %443 = vmatprep.subr.mxu0 0.0
    %444 = vmatpush1.msra.mxu0 0.0
    %445 = vmatprep.subr.mxu0 0.0
    %446 = vmatpush1.msra.mxu0 0.0
    %447 = vmatprep.subr.mxu0 0.0
    %448 = vmatpush1.msra.mxu0 0.0
    %449 = vmatprep.subr.mxu0 0.0
    %450 = vmatpush1.msra.mxu0 0.0
    %451 = vmatprep.subr.mxu0 0.0
    %452 = vmatpush1.msra.mxu0 0.0
    %453 = vmatprep.subr.mxu0 0.0
    %454 = vmatpush1.msra.mxu0 0.0
    %455 = vmatprep.subr.mxu0 0.0
    %456 = vmatpush1.msra.mxu0 0.0
    %457 = vmatprep.subr.mxu0 0.0
    %458 = vmatpush1.msra.mxu0 %v422
    %459 = vmatprep.subr.mxu0 0.0
    %460 = vmatpush2.msra.mxu0 0.0
    %461 = vmatprep.subr.mxu0 0.0
    %462 = vmatpush2.msra.mxu0 0.0
    %463 = vmatprep.subr.mxu0 0.0
    %464 = vmatpush2.msra.mxu0 0.0
    %465 = vmatprep.subr.mxu0 0.0
    %466 = vmatpush2.msra.mxu0 0.0
    %467 = vmatprep.subr.mxu0 0.0
    %468 = vmatpush2.msra.mxu0 0.0
    %469 = vmatprep.subr.mxu0 0.0
    %470 = vmatpush2.msra.mxu0 0.0
    %471 = vmatprep.subr.mxu0 0.0
    %472 = vmatpush2.msra.mxu0 0.0
    %473 = vmatprep.subr.mxu0 0.0
    %474 = vmatpush2.msra.mxu0 0.0
    %475 = vmatprep.subr.mxu0 0.0
    %476 = vmatpush2.msra.mxu0 0.0
    %477 = vmatprep.subr.mxu0 0.0
    %478 = vmatpush2.msra.mxu0 0.0
    %479 = vmatprep.subr.mxu0 0.0
    %480 = vmatpush2.msra.mxu0 0.0
    %481 = vmatprep.subr.mxu0 0.0
    %482 = vmatpush2.msra.mxu0 0.0
    %483 = vmatprep.subr.mxu0 0.0
    %484 = vmatpush2.msra.mxu0 0.0
    %485 = vmatprep.subr.mxu0 0.0
    %486 = vmatpush2.msra.mxu0 0.0
    %487 = vmatprep.subr.mxu0 0.0
    %488 = vmatpush2.msra.mxu0 0.0
    %489 = vmatprep.subr.mxu0 0.0
    %490 = vmatpush2.msra.mxu0 0.0
    %491 = vmatprep.mubr.f32.mxu0 0.0
    %492 = vmatmul.mubr.f32.gmra.mxu0 %v425
    %v493 = vpop.f32.mrf.mxu0
    %v494 = vadd.f32 0.0, %v493
    %v495 = vpop.f32.mrf.mxu0
    %496 = vdwg.mxu0
    %497 = vrot.lane.b32.xlu0 %v157, 112
    %v498 = vpop.permute.xlu0 %497
    %499 = vrot.lane.b32.xlu0 %v157, 80
    %v500 = vpop.permute.xlu0 %499
    %v501 = vsel %vm168, %v498, 0
    %v503 = vsel %vm168, %v500, 0
    %505 = vmatprep.subr.mxu0 0.0
    %506 = vmatpush1.xpose.msra.mxu0 0.0
    %507 = vmatprep.subr.mxu0 0.0
    %508 = vmatpush1.xpose.msra.mxu0 0.0
    %509 = vmatprep.subr.mxu0 0.0
    %510 = vmatpush1.xpose.msra.mxu0 0.0
    %511 = vmatprep.subr.mxu0 0.0
    %512 = vmatpush1.xpose.msra.mxu0 0.0
    %513 = vmatprep.subr.mxu0 0.0
    %514 = vmatpush1.xpose.msra.mxu0 0.0
    %515 = vmatprep.subr.mxu0 0.0
    %516 = vmatpush1.xpose.msra.mxu0 0.0
    %517 = vmatprep.subr.mxu0 0.0
    %518 = vmatpush1.xpose.msra.mxu0 0.0
    %519 = vmatprep.subr.mxu0 0.0
    %520 = vmatpush1.xpose.msra.mxu0 0.0
    %521 = vmatprep.subr.mxu0 0.0
    %522 = vmatpush1.xpose.msra.mxu0 0.0
    %523 = vmatprep.subr.mxu0 0.0
    %524 = vmatpush1.xpose.msra.mxu0 0.0
    %525 = vmatprep.subr.mxu0 0.0
    %526 = vmatpush1.xpose.msra.mxu0 0.0
    %527 = vmatprep.subr.mxu0 0.0
    %528 = vmatpush1.xpose.msra.mxu0 0.0
    %529 = vmatprep.subr.mxu0 0.0
    %530 = vmatpush1.xpose.msra.mxu0 0.0
    %531 = vmatprep.subr.mxu0 0.0
    %532 = vmatpush1.xpose.msra.mxu0 0.0
    %533 = vmatprep.subr.mxu0 0.0
    %534 = vmatpush1.xpose.msra.mxu0 0.0
    %535 = vmatprep.subr.mxu0 0.0
    %536 = vmatpush1.xpose.msra.mxu0 %v503
    %537 = vmatprep.subr.mxu0 0.0
    %538 = vmatpush2.xpose.msra.mxu0 0.0
    %539 = vmatprep.subr.mxu0 0.0
    %540 = vmatpush2.xpose.msra.mxu0 0.0
    %541 = vmatprep.subr.mxu0 0.0
    %542 = vmatpush2.xpose.msra.mxu0 0.0
    %543 = vmatprep.subr.mxu0 0.0
    %544 = vmatpush2.xpose.msra.mxu0 0.0
    %545 = vmatprep.subr.mxu0 0.0
    %546 = vmatpush2.xpose.msra.mxu0 0.0
    %547 = vmatprep.subr.mxu0 0.0
    %548 = vmatpush2.xpose.msra.mxu0 0.0
    %549 = vmatprep.subr.mxu0 0.0
    %550 = vmatpush2.xpose.msra.mxu0 0.0
    %551 = vmatprep.subr.mxu0 0.0
    %552 = vmatpush2.xpose.msra.mxu0 0.0
    %553 = vmatprep.subr.mxu0 0.0
    %554 = vmatpush2.xpose.msra.mxu0 0.0
    %555 = vmatprep.subr.mxu0 0.0
    %556 = vmatpush2.xpose.msra.mxu0 0.0
    %557 = vmatprep.subr.mxu0 0.0
    %558 = vmatpush2.xpose.msra.mxu0 0.0
    %559 = vmatprep.subr.mxu0 0.0
    %560 = vmatpush2.xpose.msra.mxu0 0.0
    %561 = vmatprep.subr.mxu0 0.0
    %562 = vmatpush2.xpose.msra.mxu0 0.0
    %563 = vmatprep.subr.mxu0 0.0
    %564 = vmatpush2.xpose.msra.mxu0 0.0
    %565 = vmatprep.subr.mxu0 0.0
    %566 = vmatpush2.xpose.msra.mxu0 0.0
    %567 = vmatprep.subr.mxu0 0.0
    %568 = vmatpush2.xpose.msra.mxu0 0.0
    %569 = vmatprep.mubr.f32.mxu0 0.0
    %570 = vmatmul.mubr.f32.gmra.mxu0 %v501
    %v571 = vpop.f32.mrf.mxu0
    %v572 = vadd.f32 0.0, %v571
    %v573 = vpop.f32.mrf.mxu0
    %574 = vdwg.mxu0
    %v575 = vmul.f32 %v572, 0.35355338
    %v576 = vsel %vm168, %v575, -inf
    %577 = vmax.xlane.f32.xlu0 %v576
    %v578 = vpop.xlane.xlu0 %577
    %v579 = vsub.f32 %v575, %v578
    %v580 = vmul.f32 %v579, 1.442695
    %v581 = vpow.pop %v580
    %v582 = vsel %vm168, %v581, 0.0
    %583 = vadd.xlane.f32.xlu0 %v582
    %v584 = vpop.xlane.xlu0 %583
    %v585 = vrcp.pop %v584
    %v586 = vmul.f32 %v581, %v585
    %587 = vrot.lane.b32.xlu0 %v157, 48
    %v588 = vpop.permute.xlu0 %587
    %v591 = vsel %vm168, %v586, 0
    %593 = vmatprep.subr.mxu0 0.0
    %594 = vmatpush1.msra.mxu0 0.0
    %595 = vmatprep.subr.mxu0 0.0
    %596 = vmatpush1.msra.mxu0 0.0
    %597 = vmatprep.subr.mxu0 0.0
    %598 = vmatpush1.msra.mxu0 0.0
    %599 = vmatprep.subr.mxu0 0.0
    %600 = vmatpush1.msra.mxu0 0.0
    %601 = vmatprep.subr.mxu0 0.0
    %602 = vmatpush1.msra.mxu0 0.0
    %603 = vmatprep.subr.mxu0 0.0
    %604 = vmatpush1.msra.mxu0 0.0
    %605 = vmatprep.subr.mxu0 0.0
    %606 = vmatpush1.msra.mxu0 0.0
    %607 = vmatprep.subr.mxu0 0.0
    %608 = vmatpush1.msra.mxu0 0.0
    %609 = vmatprep.subr.mxu0 0.0
    %610 = vmatpush1.msra.mxu0 0.0
    %611 = vmatprep.subr.mxu0 0.0
    %612 = vmatpush1.msra.mxu0 0.0
    %613 = vmatprep.subr.mxu0 0.0
    %614 = vmatpush1.msra.mxu0 0.0
    %615 = vmatprep.subr.mxu0 0.0
    %616 = vmatpush1.msra.mxu0 0.0
    %617 = vmatprep.subr.mxu0 0.0
    %618 = vmatpush1.msra.mxu0 0.0
    %619 = vmatprep.subr.mxu0 0.0
    %620 = vmatpush1.msra.mxu0 0.0
    %621 = vmatprep.subr.mxu0 0.0
    %622 = vmatpush1.msra.mxu0 0.0
    %623 = vmatprep.subr.mxu0 0.0
    %624 = vmatpush1.msra.mxu0 %v588
    %625 = vmatprep.subr.mxu0 0.0
    %626 = vmatpush2.msra.mxu0 0.0
    %627 = vmatprep.subr.mxu0 0.0
    %628 = vmatpush2.msra.mxu0 0.0
    %629 = vmatprep.subr.mxu0 0.0
    %630 = vmatpush2.msra.mxu0 0.0
    %631 = vmatprep.subr.mxu0 0.0
    %632 = vmatpush2.msra.mxu0 0.0
    %633 = vmatprep.subr.mxu0 0.0
    %634 = vmatpush2.msra.mxu0 0.0
    %635 = vmatprep.subr.mxu0 0.0
    %636 = vmatpush2.msra.mxu0 0.0
    %637 = vmatprep.subr.mxu0 0.0
    %638 = vmatpush2.msra.mxu0 0.0
    %639 = vmatprep.subr.mxu0 0.0
    %640 = vmatpush2.msra.mxu0 0.0
    %641 = vmatprep.subr.mxu0 0.0
    %642 = vmatpush2.msra.mxu0 0.0
    %643 = vmatprep.subr.mxu0 0.0
    %644 = vmatpush2.msra.mxu0 0.0
    %645 = vmatprep.subr.mxu0 0.0
    %646 = vmatpush2.msra.mxu0 0.0
    %647 = vmatprep.subr.mxu0 0.0
    %648 = vmatpush2.msra.mxu0 0.0
    %649 = vmatprep.subr.mxu0 0.0
    %650 = vmatpush2.msra.mxu0 0.0
    %651 = vmatprep.subr.mxu0 0.0
    %652 = vmatpush2.msra.mxu0 0.0
    %653 = vmatprep.subr.mxu0 0.0
    %654 = vmatpush2.msra.mxu0 0.0
    %655 = vmatprep.subr.mxu0 0.0
    %656 = vmatpush2.msra.mxu0 0.0
    %657 = vmatprep.mubr.f32.mxu0 0.0
    %658 = vmatmul.mubr.f32.gmra.mxu0 %v591
    %v659 = vpop.f32.mrf.mxu0
    %v660 = vadd.f32 0.0, %v659
    %v661 = vpop.f32.mrf.mxu0
    %662 = vdwg.mxu0
    %663 = vrot.lane.b32.xlu0 %v157, 104
    %v664 = vpop.permute.xlu0 %663
    %665 = vrot.lane.b32.xlu0 %v157, 72
    %v666 = vpop.permute.xlu0 %665
    %v667 = vsel %vm168, %v664, 0
    %v669 = vsel %vm168, %v666, 0
    %671 = vmatprep.subr.mxu0 0.0
    %672 = vmatpush1.xpose.msra.mxu0 0.0
    %673 = vmatprep.subr.mxu0 0.0
    %674 = vmatpush1.xpose.msra.mxu0 0.0
    %675 = vmatprep.subr.mxu0 0.0
    %676 = vmatpush1.xpose.msra.mxu0 0.0
    %677 = vmatprep.subr.mxu0 0.0
    %678 = vmatpush1.xpose.msra.mxu0 0.0
    %679 = vmatprep.subr.mxu0 0.0
    %680 = vmatpush1.xpose.msra.mxu0 0.0
    %681 = vmatprep.subr.mxu0 0.0
    %682 = vmatpush1.xpose.msra.mxu0 0.0
    %683 = vmatprep.subr.mxu0 0.0
    %684 = vmatpush1.xpose.msra.mxu0 0.0
    %685 = vmatprep.subr.mxu0 0.0
    %686 = vmatpush1.xpose.msra.mxu0 0.0
    %687 = vmatprep.subr.mxu0 0.0
    %688 = vmatpush1.xpose.msra.mxu0 0.0
    %689 = vmatprep.subr.mxu0 0.0
    %690 = vmatpush1.xpose.msra.mxu0 0.0
    %691 = vmatprep.subr.mxu0 0.0
    %692 = vmatpush1.xpose.msra.mxu0 0.0
    %693 = vmatprep.subr.mxu0 0.0
    %694 = vmatpush1.xpose.msra.mxu0 0.0
    %695 = vmatprep.subr.mxu0 0.0
    %696 = vmatpush1.xpose.msra.mxu0 0.0
    %697 = vmatprep.subr.mxu0 0.0
    %698 = vmatpush1.xpose.msra.mxu0 0.0
    %699 = vmatprep.subr.mxu0 0.0
    %700 = vmatpush1.xpose.msra.mxu0 0.0
    %701 = vmatprep.subr.mxu0 0.0
    %702 = vmatpush1.xpose.msra.mxu0 %v669
    %703 = vmatprep.subr.mxu0 0.0
    %704 = vmatpush2.xpose.msra.mxu0 0.0
    %705 = vmatprep.subr.mxu0 0.0
    %706 = vmatpush2.xpose.msra.mxu0 0.0
    %707 = vmatprep.subr.mxu0 0.0
    %708 = vmatpush2.xpose.msra.mxu0 0.0
    %709 = vmatprep.subr.mxu0 0.0
    %710 = vmatpush2.xpose.msra.mxu0 0.0
    %711 = vmatprep.subr.mxu0 0.0
    %712 = vmatpush2.xpose.msra.mxu0 0.0
    %713 = vmatprep.subr.mxu0 0.0
    %714 = vmatpush2.xpose.msra.mxu0 0.0
    %715 = vmatprep.subr.mxu0 0.0
    %716 = vmatpush2.xpose.msra.mxu0 0.0
    %717 = vmatprep.subr.mxu0 0.0
    %718 = vmatpush2.xpose.msra.mxu0 0.0
    %719 = vmatprep.subr.mxu0 0.0
    %720 = vmatpush2.xpose.msra.mxu0 0.0
    %721 = vmatprep.subr.mxu0 0.0
    %722 = vmatpush2.xpose.msra.mxu0 0.0
    %723 = vmatprep.subr.mxu0 0.0
    %724 = vmatpush2.xpose.msra.mxu0 0.0
    %725 = vmatprep.subr.mxu0 0.0
    %726 = vmatpush2.xpose.msra.mxu0 0.0
    %727 = vmatprep.subr.mxu0 0.0
    %728 = vmatpush2.xpose.msra.mxu0 0.0
    %729 = vmatprep.subr.mxu0 0.0
    %730 = vmatpush2.xpose.msra.mxu0 0.0
    %731 = vmatprep.subr.mxu0 0.0
    %732 = vmatpush2.xpose.msra.mxu0 0.0
    %733 = vmatprep.subr.mxu0 0.0
    %734 = vmatpush2.xpose.msra.mxu0 0.0
    %735 = vmatprep.mubr.f32.mxu0 0.0
    %736 = vmatmul.mubr.f32.gmra.mxu0 %v667
    %v737 = vpop.f32.mrf.mxu0
    %v738 = vadd.f32 0.0, %v737
    %v739 = vpop.f32.mrf.mxu0
    %740 = vdwg.mxu0
    %v741 = vmul.f32 %v738, 0.35355338
    %v742 = vsel %vm168, %v741, -inf
    %743 = vmax.xlane.f32.xlu0 %v742
    %v744 = vpop.xlane.xlu0 %743
    %v745 = vsub.f32 %v741, %v744
    %v746 = vmul.f32 %v745, 1.442695
    %v747 = vpow.pop %v746
    %v748 = vsel %vm168, %v747, 0.0
    %749 = vadd.xlane.f32.xlu0 %v748
    %v750 = vpop.xlane.xlu0 %749
    %v751 = vrcp.pop %v750
    %v752 = vmul.f32 %v747, %v751
    %753 = vrot.lane.b32.xlu0 %v157, 40
    %v754 = vpop.permute.xlu0 %753
    %v757 = vsel %vm168, %v752, 0
    %759 = vmatprep.subr.mxu0 0.0
    %760 = vmatpush1.msra.mxu0 0.0
    %761 = vmatprep.subr.mxu0 0.0
    %762 = vmatpush1.msra.mxu0 0.0
    %763 = vmatprep.subr.mxu0 0.0
    %764 = vmatpush1.msra.mxu0 0.0
    %765 = vmatprep.subr.mxu0 0.0
    %766 = vmatpush1.msra.mxu0 0.0
    %767 = vmatprep.subr.mxu0 0.0
    %768 = vmatpush1.msra.mxu0 0.0
    %769 = vmatprep.subr.mxu0 0.0
    %770 = vmatpush1.msra.mxu0 0.0
    %771 = vmatprep.subr.mxu0 0.0
    %772 = vmatpush1.msra.mxu0 0.0
    %773 = vmatprep.subr.mxu0 0.0
    %774 = vmatpush1.msra.mxu0 0.0
    %775 = vmatprep.subr.mxu0 0.0
    %776 = vmatpush1.msra.mxu0 0.0
    %777 = vmatprep.subr.mxu0 0.0
    %778 = vmatpush1.msra.mxu0 0.0
    %779 = vmatprep.subr.mxu0 0.0
    %780 = vmatpush1.msra.mxu0 0.0
    %781 = vmatprep.subr.mxu0 0.0
    %782 = vmatpush1.msra.mxu0 0.0
    %783 = vmatprep.subr.mxu0 0.0
    %784 = vmatpush1.msra.mxu0 0.0
    %785 = vmatprep.subr.mxu0 0.0
    %786 = vmatpush1.msra.mxu0 0.0
    %787 = vmatprep.subr.mxu0 0.0
    %788 = vmatpush1.msra.mxu0 0.0
    %789 = vmatprep.subr.mxu0 0.0
    %790 = vmatpush1.msra.mxu0 %v754
    %791 = vmatprep.subr.mxu0 0.0
    %792 = vmatpush2.msra.mxu0 0.0
    %793 = vmatprep.subr.mxu0 0.0
    %794 = vmatpush2.msra.mxu0 0.0
    %795 = vmatprep.subr.mxu0 0.0
    %796 = vmatpush2.msra.mxu0 0.0
    %797 = vmatprep.subr.mxu0 0.0
    %798 = vmatpush2.msra.mxu0 0.0
    %799 = vmatprep.subr.mxu0 0.0
    %800 = vmatpush2.msra.mxu0 0.0
    %801 = vmatprep.subr.mxu0 0.0
    %802 = vmatpush2.msra.mxu0 0.0
    %803 = vmatprep.subr.mxu0 0.0
    %804 = vmatpush2.msra.mxu0 0.0
    %805 = vmatprep.subr.mxu0 0.0
    %806 = vmatpush2.msra.mxu0 0.0
    %807 = vmatprep.subr.mxu0 0.0
    %808 = vmatpush2.msra.mxu0 0.0
    %809 = vmatprep.subr.mxu0 0.0
    %810 = vmatpush2.msra.mxu0 0.0
    %811 = vmatprep.subr.mxu0 0.0
    %812 = vmatpush2.msra.mxu0 0.0
    %813 = vmatprep.subr.mxu0 0.0
    %814 = vmatpush2.msra.mxu0 0.0
    %815 = vmatprep.subr.mxu0 0.0
    %816 = vmatpush2.msra.mxu0 0.0
    %817 = vmatprep.subr.mxu0 0.0
    %818 = vmatpush2.msra.mxu0 0.0
    %819 = vmatprep.subr.mxu0 0.0
    %820 = vmatpush2.msra.mxu0 0.0
    %821 = vmatprep.subr.mxu0 0.0
    %822 = vmatpush2.msra.mxu0 0.0
    %823 = vmatprep.mubr.f32.mxu0 0.0
    %824 = vmatmul.mubr.f32.gmra.mxu0 %v757
    %v825 = vpop.f32.mrf.mxu0
    %v826 = vadd.f32 0.0, %v825
    %v827 = vpop.f32.mrf.mxu0
    %828 = vdwg.mxu0
    %830 = vrot.lane.b32.xlu0 %v494, 8
    %v831 = vpop.permute.xlu0 %830
    %834 = vrot.lane.b32.xlu0 %v660, 16
    %v835 = vpop.permute.xlu0 %834
    %838 = vrot.lane.b32.xlu0 %v826, 24
    %v839 = vpop.permute.xlu0 %838
    %v841 = vsel %vm168, %v328, %v831
    %vm842 = vcmask 130048
    %v843 = vsel %vm842, %v841, %v835
    %vm844 = vcmask 195584
    %v845 = vsel %vm844, %v843, %v839
    %847 = vrot.lane.b32.xlu0 %v162, 96
    %v848 = vpop.permute.xlu0 %847
    %v849 = vsel %vm168, %v162, 0
    %v851 = vsel %vm168, %v848, 0
    %853 = vmatprep.subr.mxu0 0.0
    %854 = vmatpush1.xpose.msra.mxu0 0.0
    %855 = vmatprep.subr.mxu0 0.0
    %856 = vmatpush1.xpose.msra.mxu0 0.0
    %857 = vmatprep.subr.mxu0 0.0
    %858 = vmatpush1.xpose.msra.mxu0 0.0
    %859 = vmatprep.subr.mxu0 0.0
    %860 = vmatpush1.xpose.msra.mxu0 0.0
    %861 = vmatprep.subr.mxu0 0.0
    %862 = vmatpush1.xpose.msra.mxu0 0.0
    %863 = vmatprep.subr.mxu0 0.0
    %864 = vmatpush1.xpose.msra.mxu0 0.0
    %865 = vmatprep.subr.mxu0 0.0
    %866 = vmatpush1.xpose.msra.mxu0 0.0
    %867 = vmatprep.subr.mxu0 0.0
    %868 = vmatpush1.xpose.msra.mxu0 0.0
    %869 = vmatprep.subr.mxu0 0.0
    %870 = vmatpush1.xpose.msra.mxu0 0.0
    %871 = vmatprep.subr.mxu0 0.0
    %872 = vmatpush1.xpose.msra.mxu0 0.0
    %873 = vmatprep.subr.mxu0 0.0
    %874 = vmatpush1.xpose.msra.mxu0 0.0
    %875 = vmatprep.subr.mxu0 0.0
    %876 = vmatpush1.xpose.msra.mxu0 0.0
    %877 = vmatprep.subr.mxu0 0.0
    %878 = vmatpush1.xpose.msra.mxu0 0.0
    %879 = vmatprep.subr.mxu0 0.0
    %880 = vmatpush1.xpose.msra.mxu0 0.0
    %881 = vmatprep.subr.mxu0 0.0
    %882 = vmatpush1.xpose.msra.mxu0 0.0
    %883 = vmatprep.subr.mxu0 0.0
    %884 = vmatpush1.xpose.msra.mxu0 %v851
    %885 = vmatprep.subr.mxu0 0.0
    %886 = vmatpush2.xpose.msra.mxu0 0.0
    %887 = vmatprep.subr.mxu0 0.0
    %888 = vmatpush2.xpose.msra.mxu0 0.0
    %889 = vmatprep.subr.mxu0 0.0
    %890 = vmatpush2.xpose.msra.mxu0 0.0
    %891 = vmatprep.subr.mxu0 0.0
    %892 = vmatpush2.xpose.msra.mxu0 0.0
    %893 = vmatprep.subr.mxu0 0.0
    %894 = vmatpush2.xpose.msra.mxu0 0.0
    %895 = vmatprep.subr.mxu0 0.0
    %896 = vmatpush2.xpose.msra.mxu0 0.0
    %897 = vmatprep.subr.mxu0 0.0
    %898 = vmatpush2.xpose.msra.mxu0 0.0
    %899 = vmatprep.subr.mxu0 0.0
    %900 = vmatpush2.xpose.msra.mxu0 0.0
    %901 = vmatprep.subr.mxu0 0.0
    %902 = vmatpush2.xpose.msra.mxu0 0.0
    %903 = vmatprep.subr.mxu0 0.0
    %904 = vmatpush2.xpose.msra.mxu0 0.0
    %905 = vmatprep.subr.mxu0 0.0
    %906 = vmatpush2.xpose.msra.mxu0 0.0
    %907 = vmatprep.subr.mxu0 0.0
    %908 = vmatpush2.xpose.msra.mxu0 0.0
    %909 = vmatprep.subr.mxu0 0.0
    %910 = vmatpush2.xpose.msra.mxu0 0.0
    %911 = vmatprep.subr.mxu0 0.0
    %912 = vmatpush2.xpose.msra.mxu0 0.0
    %913 = vmatprep.subr.mxu0 0.0
    %914 = vmatpush2.xpose.msra.mxu0 0.0
    %915 = vmatprep.subr.mxu0 0.0
    %916 = vmatpush2.xpose.msra.mxu0 0.0
    %917 = vmatprep.mubr.f32.mxu0 0.0
    %918 = vmatmul.mubr.f32.gmra.mxu0 %v849
    %v919 = vpop.f32.mrf.mxu0
    %v920 = vadd.f32 0.0, %v919
    %v921 = vpop.f32.mrf.mxu0
    %922 = vdwg.mxu0
    %v923 = vmul.f32 %v920, 0.35355338
    %v924 = vsel %vm168, %v923, -inf
    %925 = vmax.xlane.f32.xlu0 %v924
    %v926 = vpop.xlane.xlu0 %925
    %v927 = vsub.f32 %v923, %v926
    %v928 = vmul.f32 %v927, 1.442695
    %v929 = vpow.pop %v928
    %v930 = vsel %vm168, %v929, 0.0
    %931 = vadd.xlane.f32.xlu0 %v930
    %v932 = vpop.xlane.xlu0 %931
    %v933 = vrcp.pop %v932
    %v934 = vmul.f32 %v929, %v933
    %935 = vrot.lane.b32.xlu0 %v162, 64
    %v936 = vpop.permute.xlu0 %935
    %v939 = vsel %vm168, %v934, 0
    %941 = vmatprep.subr.mxu0 0.0
    %942 = vmatpush1.msra.mxu0 0.0
    %943 = vmatprep.subr.mxu0 0.0
    %944 = vmatpush1.msra.mxu0 0.0
    %945 = vmatprep.subr.mxu0 0.0
    %946 = vmatpush1.msra.mxu0 0.0
    %947 = vmatprep.subr.mxu0 0.0
    %948 = vmatpush1.msra.mxu0 0.0
    %949 = vmatprep.subr.mxu0 0.0
    %950 = vmatpush1.msra.mxu0 0.0
    %951 = vmatprep.subr.mxu0 0.0
    %952 = vmatpush1.msra.mxu0 0.0
    %953 = vmatprep.subr.mxu0 0.0
    %954 = vmatpush1.msra.mxu0 0.0
    %955 = vmatprep.subr.mxu0 0.0
    %956 = vmatpush1.msra.mxu0 0.0
    %957 = vmatprep.subr.mxu0 0.0
    %958 = vmatpush1.msra.mxu0 0.0
    %959 = vmatprep.subr.mxu0 0.0
    %960 = vmatpush1.msra.mxu0 0.0
    %961 = vmatprep.subr.mxu0 0.0
    %962 = vmatpush1.msra.mxu0 0.0
    %963 = vmatprep.subr.mxu0 0.0
    %964 = vmatpush1.msra.mxu0 0.0
    %965 = vmatprep.subr.mxu0 0.0
    %966 = vmatpush1.msra.mxu0 0.0
    %967 = vmatprep.subr.mxu0 0.0
    %968 = vmatpush1.msra.mxu0 0.0
    %969 = vmatprep.subr.mxu0 0.0
    %970 = vmatpush1.msra.mxu0 0.0
    %971 = vmatprep.subr.mxu0 0.0
    %972 = vmatpush1.msra.mxu0 %v936
    %973 = vmatprep.subr.mxu0 0.0
    %974 = vmatpush2.msra.mxu0 0.0
    %975 = vmatprep.subr.mxu0 0.0
    %976 = vmatpush2.msra.mxu0 0.0
    %977 = vmatprep.subr.mxu0 0.0
    %978 = vmatpush2.msra.mxu0 0.0
    %979 = vmatprep.subr.mxu0 0.0
    %980 = vmatpush2.msra.mxu0 0.0
    %981 = vmatprep.subr.mxu0 0.0
    %982 = vmatpush2.msra.mxu0 0.0
    %983 = vmatprep.subr.mxu0 0.0
    %984 = vmatpush2.msra.mxu0 0.0
    %985 = vmatprep.subr.mxu0 0.0
    %986 = vmatpush2.msra.mxu0 0.0
    %987 = vmatprep.subr.mxu0 0.0
    %988 = vmatpush2.msra.mxu0 0.0
    %989 = vmatprep.subr.mxu0 0.0
    %990 = vmatpush2.msra.mxu0 0.0
    %991 = vmatprep.subr.mxu0 0.0
    %992 = vmatpush2.msra.mxu0 0.0
    %993 = vmatprep.subr.mxu0 0.0
    %994 = vmatpush2.msra.mxu0 0.0
    %995 = vmatprep.subr.mxu0 0.0
    %996 = vmatpush2.msra.mxu0 0.0
    %997 = vmatprep.subr.mxu0 0.0
    %998 = vmatpush2.msra.mxu0 0.0
    %999 = vmatprep.subr.mxu0 0.0
    %1000 = vmatpush2.msra.mxu0 0.0
    %1001 = vmatprep.subr.mxu0 0.0
    %1002 = vmatpush2.msra.mxu0 0.0
    %1003 = vmatprep.subr.mxu0 0.0
    %1004 = vmatpush2.msra.mxu0 0.0
    %1005 = vmatprep.mubr.f32.mxu0 0.0
    %1006 = vmatmul.mubr.f32.gmra.mxu0 %v939
    %v1007 = vpop.f32.mrf.mxu0
    %v1008 = vadd.f32 0.0, %v1007
    %v1009 = vpop.f32.mrf.mxu0
    %1010 = vdwg.mxu0
    %1011 = vrot.lane.b32.xlu0 %v162, 120
    %v1012 = vpop.permute.xlu0 %1011
    %1013 = vrot.lane.b32.xlu0 %v162, 88
    %v1014 = vpop.permute.xlu0 %1013
    %v1015 = vsel %vm168, %v1012, 0
    %v1017 = vsel %vm168, %v1014, 0
    %1019 = vmatprep.subr.mxu0 0.0
    %1020 = vmatpush1.xpose.msra.mxu0 0.0
    %1021 = vmatprep.subr.mxu0 0.0
    %1022 = vmatpush1.xpose.msra.mxu0 0.0
    %1023 = vmatprep.subr.mxu0 0.0
    %1024 = vmatpush1.xpose.msra.mxu0 0.0
    %1025 = vmatprep.subr.mxu0 0.0
    %1026 = vmatpush1.xpose.msra.mxu0 0.0
    %1027 = vmatprep.subr.mxu0 0.0
    %1028 = vmatpush1.xpose.msra.mxu0 0.0
    %1029 = vmatprep.subr.mxu0 0.0
    %1030 = vmatpush1.xpose.msra.mxu0 0.0
    %1031 = vmatprep.subr.mxu0 0.0
    %1032 = vmatpush1.xpose.msra.mxu0 0.0
    %1033 = vmatprep.subr.mxu0 0.0
    %1034 = vmatpush1.xpose.msra.mxu0 0.0
    %1035 = vmatprep.subr.mxu0 0.0
    %1036 = vmatpush1.xpose.msra.mxu0 0.0
    %1037 = vmatprep.subr.mxu0 0.0
    %1038 = vmatpush1.xpose.msra.mxu0 0.0
    %1039 = vmatprep.subr.mxu0 0.0
    %1040 = vmatpush1.xpose.msra.mxu0 0.0
    %1041 = vmatprep.subr.mxu0 0.0
    %1042 = vmatpush1.xpose.msra.mxu0 0.0
    %1043 = vmatprep.subr.mxu0 0.0
    %1044 = vmatpush1.xpose.msra.mxu0 0.0
    %1045 = vmatprep.subr.mxu0 0.0
    %1046 = vmatpush1.xpose.msra.mxu0 0.0
    %1047 = vmatprep.subr.mxu0 0.0
    %1048 = vmatpush1.xpose.msra.mxu0 0.0
    %1049 = vmatprep.subr.mxu0 0.0
    %1050 = vmatpush1.xpose.msra.mxu0 %v1017
    %1051 = vmatprep.subr.mxu0 0.0
    %1052 = vmatpush2.xpose.msra.mxu0 0.0
    %1053 = vmatprep.subr.mxu0 0.0
    %1054 = vmatpush2.xpose.msra.mxu0 0.0
    %1055 = vmatprep.subr.mxu0 0.0
    %1056 = vmatpush2.xpose.msra.mxu0 0.0
    %1057 = vmatprep.subr.mxu0 0.0
    %1058 = vmatpush2.xpose.msra.mxu0 0.0
    %1059 = vmatprep.subr.mxu0 0.0
    %1060 = vmatpush2.xpose.msra.mxu0 0.0
    %1061 = vmatprep.subr.mxu0 0.0
    %1062 = vmatpush2.xpose.msra.mxu0 0.0
    %1063 = vmatprep.subr.mxu0 0.0
    %1064 = vmatpush2.xpose.msra.mxu0 0.0
    %1065 = vmatprep.subr.mxu0 0.0
    %1066 = vmatpush2.xpose.msra.mxu0 0.0
    %1067 = vmatprep.subr.mxu0 0.0
    %1068 = vmatpush2.xpose.msra.mxu0 0.0
    %1069 = vmatprep.subr.mxu0 0.0
    %1070 = vmatpush2.xpose.msra.mxu0 0.0
    %1071 = vmatprep.subr.mxu0 0.0
    %1072 = vmatpush2.xpose.msra.mxu0 0.0
    %1073 = vmatprep.subr.mxu0 0.0
    %1074 = vmatpush2.xpose.msra.mxu0 0.0
    %1075 = vmatprep.subr.mxu0 0.0
    %1076 = vmatpush2.xpose.msra.mxu0 0.0
    %1077 = vmatprep.subr.mxu0 0.0
    %1078 = vmatpush2.xpose.msra.mxu0 0.0
    %1079 = vmatprep.subr.mxu0 0.0
    %1080 = vmatpush2.xpose.msra.mxu0 0.0
    %1081 = vmatprep.subr.mxu0 0.0
    %1082 = vmatpush2.xpose.msra.mxu0 0.0
    %1083 = vmatprep.mubr.f32.mxu0 0.0
    %1084 = vmatmul.mubr.f32.gmra.mxu0 %v1015
    %v1085 = vpop.f32.mrf.mxu0
    %v1086 = vadd.f32 0.0, %v1085
    %v1087 = vpop.f32.mrf.mxu0
    %1088 = vdwg.mxu0
    %v1089 = vmul.f32 %v1086, 0.35355338
    %v1090 = vsel %vm168, %v1089, -inf
    %1091 = vmax.xlane.f32.xlu0 %v1090
    %v1092 = vpop.xlane.xlu0 %1091
    %v1093 = vsub.f32 %v1089, %v1092
    %v1094 = vmul.f32 %v1093, 1.442695
    %v1095 = vpow.pop %v1094
    %v1096 = vsel %vm168, %v1095, 0.0
    %1097 = vadd.xlane.f32.xlu0 %v1096
    %v1098 = vpop.xlane.xlu0 %1097
    %v1099 = vrcp.pop %v1098
    %v1100 = vmul.f32 %v1095, %v1099
    %1101 = vrot.lane.b32.xlu0 %v162, 56
    %v1102 = vpop.permute.xlu0 %1101
    %v1105 = vsel %vm168, %v1100, 0
    %1107 = vmatprep.subr.mxu0 0.0
    %1108 = vmatpush1.msra.mxu0 0.0
    %1109 = vmatprep.subr.mxu0 0.0
    %1110 = vmatpush1.msra.mxu0 0.0
    %1111 = vmatprep.subr.mxu0 0.0
    %1112 = vmatpush1.msra.mxu0 0.0
    %1113 = vmatprep.subr.mxu0 0.0
    %1114 = vmatpush1.msra.mxu0 0.0
    %1115 = vmatprep.subr.mxu0 0.0
    %1116 = vmatpush1.msra.mxu0 0.0
    %1117 = vmatprep.subr.mxu0 0.0
    %1118 = vmatpush1.msra.mxu0 0.0
    %1119 = vmatprep.subr.mxu0 0.0
    %1120 = vmatpush1.msra.mxu0 0.0
    %1121 = vmatprep.subr.mxu0 0.0
    %1122 = vmatpush1.msra.mxu0 0.0
    %1123 = vmatprep.subr.mxu0 0.0
    %1124 = vmatpush1.msra.mxu0 0.0
    %1125 = vmatprep.subr.mxu0 0.0
    %1126 = vmatpush1.msra.mxu0 0.0
    %1127 = vmatprep.subr.mxu0 0.0
    %1128 = vmatpush1.msra.mxu0 0.0
    %1129 = vmatprep.subr.mxu0 0.0
    %1130 = vmatpush1.msra.mxu0 0.0
    %1131 = vmatprep.subr.mxu0 0.0
    %1132 = vmatpush1.msra.mxu0 0.0
    %1133 = vmatprep.subr.mxu0 0.0
    %1134 = vmatpush1.msra.mxu0 0.0
    %1135 = vmatprep.subr.mxu0 0.0
    %1136 = vmatpush1.msra.mxu0 0.0
    %1137 = vmatprep.subr.mxu0 0.0
    %1138 = vmatpush1.msra.mxu0 %v1102
    %1139 = vmatprep.subr.mxu0 0.0
    %1140 = vmatpush2.msra.mxu0 0.0
    %1141 = vmatprep.subr.mxu0 0.0
    %1142 = vmatpush2.msra.mxu0 0.0
    %1143 = vmatprep.subr.mxu0 0.0
    %1144 = vmatpush2.msra.mxu0 0.0
    %1145 = vmatprep.subr.mxu0 0.0
    %1146 = vmatpush2.msra.mxu0 0.0
    %1147 = vmatprep.subr.mxu0 0.0
    %1148 = vmatpush2.msra.mxu0 0.0
    %1149 = vmatprep.subr.mxu0 0.0
    %1150 = vmatpush2.msra.mxu0 0.0
    %1151 = vmatprep.subr.mxu0 0.0
    %1152 = vmatpush2.msra.mxu0 0.0
    %1153 = vmatprep.subr.mxu0 0.0
    %1154 = vmatpush2.msra.mxu0 0.0
    %1155 = vmatprep.subr.mxu0 0.0
    %1156 = vmatpush2.msra.mxu0 0.0
    %1157 = vmatprep.subr.mxu0 0.0
    %1158 = vmatpush2.msra.mxu0 0.0
    %1159 = vmatprep.subr.mxu0 0.0
    %1160 = vmatpush2.msra.mxu0 0.0
    %1161 = vmatprep.subr.mxu0 0.0
    %1162 = vmatpush2.msra.mxu0 0.0
    %1163 = vmatprep.subr.mxu0 0.0
    %1164 = vmatpush2.msra.mxu0 0.0
    %1165 = vmatprep.subr.mxu0 0.0
    %1166 = vmatpush2.msra.mxu0 0.0
    %1167 = vmatprep.subr.mxu0 0.0
    %1168 = vmatpush2.msra.mxu0 0.0
    %1169 = vmatprep.subr.mxu0 0.0
    %1170 = vmatpush2.msra.mxu0 0.0
    %1171 = vmatprep.mubr.f32.mxu0 0.0
    %1172 = vmatmul.mubr.f32.gmra.mxu0 %v1105
    %v1173 = vpop.f32.mrf.mxu0
    %v1174 = vadd.f32 0.0, %v1173
    %v1175 = vpop.f32.mrf.mxu0
    %1176 = vdwg.mxu0
    %1177 = vrot.lane.b32.xlu0 %v162, 112
    %v1178 = vpop.permute.xlu0 %1177
    %1179 = vrot.lane.b32.xlu0 %v162, 80
    %v1180 = vpop.permute.xlu0 %1179
    %v1181 = vsel %vm168, %v1178, 0
    %v1183 = vsel %vm168, %v1180, 0
    %1185 = vmatprep.subr.mxu0 0.0
    %1186 = vmatpush1.xpose.msra.mxu0 0.0
    %1187 = vmatprep.subr.mxu0 0.0
    %1188 = vmatpush1.xpose.msra.mxu0 0.0
    %1189 = vmatprep.subr.mxu0 0.0
    %1190 = vmatpush1.xpose.msra.mxu0 0.0
    %1191 = vmatprep.subr.mxu0 0.0
    %1192 = vmatpush1.xpose.msra.mxu0 0.0
    %1193 = vmatprep.subr.mxu0 0.0
    %1194 = vmatpush1.xpose.msra.mxu0 0.0
    %1195 = vmatprep.subr.mxu0 0.0
    %1196 = vmatpush1.xpose.msra.mxu0 0.0
    %1197 = vmatprep.subr.mxu0 0.0
    %1198 = vmatpush1.xpose.msra.mxu0 0.0
    %1199 = vmatprep.subr.mxu0 0.0
    %1200 = vmatpush1.xpose.msra.mxu0 0.0
    %1201 = vmatprep.subr.mxu0 0.0
    %1202 = vmatpush1.xpose.msra.mxu0 0.0
    %1203 = vmatprep.subr.mxu0 0.0
    %1204 = vmatpush1.xpose.msra.mxu0 0.0
    %1205 = vmatprep.subr.mxu0 0.0
    %1206 = vmatpush1.xpose.msra.mxu0 0.0
    %1207 = vmatprep.subr.mxu0 0.0
    %1208 = vmatpush1.xpose.msra.mxu0 0.0
    %1209 = vmatprep.subr.mxu0 0.0
    %1210 = vmatpush1.xpose.msra.mxu0 0.0
    %1211 = vmatprep.subr.mxu0 0.0
    %1212 = vmatpush1.xpose.msra.mxu0 0.0
    %1213 = vmatprep.subr.mxu0 0.0
    %1214 = vmatpush1.xpose.msra.mxu0 0.0
    %1215 = vmatprep.subr.mxu0 0.0
    %1216 = vmatpush1.xpose.msra.mxu0 %v1183
    %1217 = vmatprep.subr.mxu0 0.0
    %1218 = vmatpush2.xpose.msra.mxu0 0.0
    %1219 = vmatprep.subr.mxu0 0.0
    %1220 = vmatpush2.xpose.msra.mxu0 0.0
    %1221 = vmatprep.subr.mxu0 0.0
    %1222 = vmatpush2.xpose.msra.mxu0 0.0
    %1223 = vmatprep.subr.mxu0 0.0
    %1224 = vmatpush2.xpose.msra.mxu0 0.0
    %1225 = vmatprep.subr.mxu0 0.0
    %1226 = vmatpush2.xpose.msra.mxu0 0.0
    %1227 = vmatprep.subr.mxu0 0.0
    %1228 = vmatpush2.xpose.msra.mxu0 0.0
    %1229 = vmatprep.subr.mxu0 0.0
    %1230 = vmatpush2.xpose.msra.mxu0 0.0
    %1231 = vmatprep.subr.mxu0 0.0
    %1232 = vmatpush2.xpose.msra.mxu0 0.0
    %1233 = vmatprep.subr.mxu0 0.0
    %1234 = vmatpush2.xpose.msra.mxu0 0.0
    %1235 = vmatprep.subr.mxu0 0.0
    %1236 = vmatpush2.xpose.msra.mxu0 0.0
    %1237 = vmatprep.subr.mxu0 0.0
    %1238 = vmatpush2.xpose.msra.mxu0 0.0
    %1239 = vmatprep.subr.mxu0 0.0
    %1240 = vmatpush2.xpose.msra.mxu0 0.0
    %1241 = vmatprep.subr.mxu0 0.0
    %1242 = vmatpush2.xpose.msra.mxu0 0.0
    %1243 = vmatprep.subr.mxu0 0.0
    %1244 = vmatpush2.xpose.msra.mxu0 0.0
    %1245 = vmatprep.subr.mxu0 0.0
    %1246 = vmatpush2.xpose.msra.mxu0 0.0
    %1247 = vmatprep.subr.mxu0 0.0
    %1248 = vmatpush2.xpose.msra.mxu0 0.0
    %1249 = vmatprep.mubr.f32.mxu0 0.0
    %1250 = vmatmul.mubr.f32.gmra.mxu0 %v1181
    %v1251 = vpop.f32.mrf.mxu0
    %v1252 = vadd.f32 0.0, %v1251
    %v1253 = vpop.f32.mrf.mxu0
    %1254 = vdwg.mxu0
    %v1255 = vmul.f32 %v1252, 0.35355338
    %v1256 = vsel %vm168, %v1255, -inf
    %1257 = vmax.xlane.f32.xlu0 %v1256
    %v1258 = vpop.xlane.xlu0 %1257
    %v1259 = vsub.f32 %v1255, %v1258
    %v1260 = vmul.f32 %v1259, 1.442695
    %v1261 = vpow.pop %v1260
    %v1262 = vsel %vm168, %v1261, 0.0
    %1263 = vadd.xlane.f32.xlu0 %v1262
    %v1264 = vpop.xlane.xlu0 %1263
    %v1265 = vrcp.pop %v1264
    %v1266 = vmul.f32 %v1261, %v1265
    %1267 = vrot.lane.b32.xlu0 %v162, 48
    %v1268 = vpop.permute.xlu0 %1267
    %v1271 = vsel %vm168, %v1266, 0
    %1273 = vmatprep.subr.mxu0 0.0
    %1274 = vmatpush1.msra.mxu0 0.0
    %1275 = vmatprep.subr.mxu0 0.0
    %1276 = vmatpush1.msra.mxu0 0.0
    %1277 = vmatprep.subr.mxu0 0.0
    %1278 = vmatpush1.msra.mxu0 0.0
    %1279 = vmatprep.subr.mxu0 0.0
    %1280 = vmatpush1.msra.mxu0 0.0
    %1281 = vmatprep.subr.mxu0 0.0
    %1282 = vmatpush1.msra.mxu0 0.0
    %1283 = vmatprep.subr.mxu0 0.0
    %1284 = vmatpush1.msra.mxu0 0.0
    %1285 = vmatprep.subr.mxu0 0.0
    %1286 = vmatpush1.msra.mxu0 0.0
    %1287 = vmatprep.subr.mxu0 0.0
    %1288 = vmatpush1.msra.mxu0 0.0
    %1289 = vmatprep.subr.mxu0 0.0
    %1290 = vmatpush1.msra.mxu0 0.0
    %1291 = vmatprep.subr.mxu0 0.0
    %1292 = vmatpush1.msra.mxu0 0.0
    %1293 = vmatprep.subr.mxu0 0.0
    %1294 = vmatpush1.msra.mxu0 0.0
    %1295 = vmatprep.subr.mxu0 0.0
    %1296 = vmatpush1.msra.mxu0 0.0
    %1297 = vmatprep.subr.mxu0 0.0
    %1298 = vmatpush1.msra.mxu0 0.0
    %1299 = vmatprep.subr.mxu0 0.0
    %1300 = vmatpush1.msra.mxu0 0.0
    %1301 = vmatprep.subr.mxu0 0.0
    %1302 = vmatpush1.msra.mxu0 0.0
    %1303 = vmatprep.subr.mxu0 0.0
    %1304 = vmatpush1.msra.mxu0 %v1268
    %1305 = vmatprep.subr.mxu0 0.0
    %1306 = vmatpush2.msra.mxu0 0.0
    %1307 = vmatprep.subr.mxu0 0.0
    %1308 = vmatpush2.msra.mxu0 0.0
    %1309 = vmatprep.subr.mxu0 0.0
    %1310 = vmatpush2.msra.mxu0 0.0
    %1311 = vmatprep.subr.mxu0 0.0
    %1312 = vmatpush2.msra.mxu0 0.0
    %1313 = vmatprep.subr.mxu0 0.0
    %1314 = vmatpush2.msra.mxu0 0.0
    %1315 = vmatprep.subr.mxu0 0.0
    %1316 = vmatpush2.msra.mxu0 0.0
    %1317 = vmatprep.subr.mxu0 0.0
    %1318 = vmatpush2.msra.mxu0 0.0
    %1319 = vmatprep.subr.mxu0 0.0
    %1320 = vmatpush2.msra.mxu0 0.0
    %1321 = vmatprep.subr.mxu0 0.0
    %1322 = vmatpush2.msra.mxu0 0.0
    %1323 = vmatprep.subr.mxu0 0.0
    %1324 = vmatpush2.msra.mxu0 0.0
    %1325 = vmatprep.subr.mxu0 0.0
    %1326 = vmatpush2.msra.mxu0 0.0
    %1327 = vmatprep.subr.mxu0 0.0
    %1328 = vmatpush2.msra.mxu0 0.0
    %1329 = vmatprep.subr.mxu0 0.0
    %1330 = vmatpush2.msra.mxu0 0.0
    %1331 = vmatprep.subr.mxu0 0.0
    %1332 = vmatpush2.msra.mxu0 0.0
    %1333 = vmatprep.subr.mxu0 0.0
    %1334 = vmatpush2.msra.mxu0 0.0
    %1335 = vmatprep.subr.mxu0 0.0
    %1336 = vmatpush2.msra.mxu0 0.0
    %1337 = vmatprep.mubr.f32.mxu0 0.0
    %1338 = vmatmul.mubr.f32.gmra.mxu0 %v1271
    %v1339 = vpop.f32.mrf.mxu0
    %v1340 = vadd.f32 0.0, %v1339
    %v1341 = vpop.f32.mrf.mxu0
    %1342 = vdwg.mxu0
    %1343 = vrot.lane.b32.xlu0 %v162, 104
    %v1344 = vpop.permute.xlu0 %1343
    %1345 = vrot.lane.b32.xlu0 %v162, 72
    %v1346 = vpop.permute.xlu0 %1345
    %v1347 = vsel %vm168, %v1344, 0
    %v1349 = vsel %vm168, %v1346, 0
    %1351 = vmatprep.subr.mxu0 0.0
    %1352 = vmatpush1.xpose.msra.mxu0 0.0
    %1353 = vmatprep.subr.mxu0 0.0
    %1354 = vmatpush1.xpose.msra.mxu0 0.0
    %1355 = vmatprep.subr.mxu0 0.0
    %1356 = vmatpush1.xpose.msra.mxu0 0.0
    %1357 = vmatprep.subr.mxu0 0.0
    %1358 = vmatpush1.xpose.msra.mxu0 0.0
    %1359 = vmatprep.subr.mxu0 0.0
    %1360 = vmatpush1.xpose.msra.mxu0 0.0
    %1361 = vmatprep.subr.mxu0 0.0
    %1362 = vmatpush1.xpose.msra.mxu0 0.0
    %1363 = vmatprep.subr.mxu0 0.0
    %1364 = vmatpush1.xpose.msra.mxu0 0.0
    %1365 = vmatprep.subr.mxu0 0.0
    %1366 = vmatpush1.xpose.msra.mxu0 0.0
    %1367 = vmatprep.subr.mxu0 0.0
    %1368 = vmatpush1.xpose.msra.mxu0 0.0
    %1369 = vmatprep.subr.mxu0 0.0
    %1370 = vmatpush1.xpose.msra.mxu0 0.0
    %1371 = vmatprep.subr.mxu0 0.0
    %1372 = vmatpush1.xpose.msra.mxu0 0.0
    %1373 = vmatprep.subr.mxu0 0.0
    %1374 = vmatpush1.xpose.msra.mxu0 0.0
    %1375 = vmatprep.subr.mxu0 0.0
    %1376 = vmatpush1.xpose.msra.mxu0 0.0
    %1377 = vmatprep.subr.mxu0 0.0
    %1378 = vmatpush1.xpose.msra.mxu0 0.0
    %1379 = vmatprep.subr.mxu0 0.0
    %1380 = vmatpush1.xpose.msra.mxu0 0.0
    %1381 = vmatprep.subr.mxu0 0.0
    %1382 = vmatpush1.xpose.msra.mxu0 %v1349
    %1383 = vmatprep.subr.mxu0 0.0
    %1384 = vmatpush2.xpose.msra.mxu0 0.0
    %1385 = vmatprep.subr.mxu0 0.0
    %1386 = vmatpush2.xpose.msra.mxu0 0.0
    %1387 = vmatprep.subr.mxu0 0.0
    %1388 = vmatpush2.xpose.msra.mxu0 0.0
    %1389 = vmatprep.subr.mxu0 0.0
    %1390 = vmatpush2.xpose.msra.mxu0 0.0
    %1391 = vmatprep.subr.mxu0 0.0
    %1392 = vmatpush2.xpose.msra.mxu0 0.0
    %1393 = vmatprep.subr.mxu0 0.0
    %1394 = vmatpush2.xpose.msra.mxu0 0.0
    %1395 = vmatprep.subr.mxu0 0.0
    %1396 = vmatpush2.xpose.msra.mxu0 0.0
    %1397 = vmatprep.subr.mxu0 0.0
    %1398 = vmatpush2.xpose.msra.mxu0 0.0
    %1399 = vmatprep.subr.mxu0 0.0
    %1400 = vmatpush2.xpose.msra.mxu0 0.0
    %1401 = vmatprep.subr.mxu0 0.0
    %1402 = vmatpush2.xpose.msra.mxu0 0.0
    %1403 = vmatprep.subr.mxu0 0.0
    %1404 = vmatpush2.xpose.msra.mxu0 0.0
    %1405 = vmatprep.subr.mxu0 0.0
    %1406 = vmatpush2.xpose.msra.mxu0 0.0
    %1407 = vmatprep.subr.mxu0 0.0
    %1408 = vmatpush2.xpose.msra.mxu0 0.0
    %1409 = vmatprep.subr.mxu0 0.0
    %1410 = vmatpush2.xpose.msra.mxu0 0.0
    %1411 = vmatprep.subr.mxu0 0.0
    %1412 = vmatpush2.xpose.msra.mxu0 0.0
    %1413 = vmatprep.subr.mxu0 0.0
    %1414 = vmatpush2.xpose.msra.mxu0 0.0
    %1415 = vmatprep.mubr.f32.mxu0 0.0
    %1416 = vmatmul.mubr.f32.gmra.mxu0 %v1347
    %v1417 = vpop.f32.mrf.mxu0
    %v1418 = vadd.f32 0.0, %v1417
    %v1419 = vpop.f32.mrf.mxu0
    %1420 = vdwg.mxu0
    %v1421 = vmul.f32 %v1418, 0.35355338
    %v1422 = vsel %vm168, %v1421, -inf
    %1423 = vmax.xlane.f32.xlu0 %v1422
    %v1424 = vpop.xlane.xlu0 %1423
    %v1425 = vsub.f32 %v1421, %v1424
    %v1426 = vmul.f32 %v1425, 1.442695
    %v1427 = vpow.pop %v1426
    %v1428 = vsel %vm168, %v1427, 0.0
    %1429 = vadd.xlane.f32.xlu0 %v1428
    %v1430 = vpop.xlane.xlu0 %1429
    %v1431 = vrcp.pop %v1430
    %v1432 = vmul.f32 %v1427, %v1431
    %1433 = vrot.lane.b32.xlu0 %v162, 40
    %v1434 = vpop.permute.xlu0 %1433
    %v1437 = vsel %vm168, %v1432, 0
    %1439 = vmatprep.subr.mxu0 0.0
    %1440 = vmatpush1.msra.mxu0 0.0
    %1441 = vmatprep.subr.mxu0 0.0
    %1442 = vmatpush1.msra.mxu0 0.0
    %1443 = vmatprep.subr.mxu0 0.0
    %1444 = vmatpush1.msra.mxu0 0.0
    %1445 = vmatprep.subr.mxu0 0.0
    %1446 = vmatpush1.msra.mxu0 0.0
    %1447 = vmatprep.subr.mxu0 0.0
    %1448 = vmatpush1.msra.mxu0 0.0
    %1449 = vmatprep.subr.mxu0 0.0
    %1450 = vmatpush1.msra.mxu0 0.0
    %1451 = vmatprep.subr.mxu0 0.0
    %1452 = vmatpush1.msra.mxu0 0.0
    %1453 = vmatprep.subr.mxu0 0.0
    %1454 = vmatpush1.msra.mxu0 0.0
    %1455 = vmatprep.subr.mxu0 0.0
    %1456 = vmatpush1.msra.mxu0 0.0
    %1457 = vmatprep.subr.mxu0 0.0
    %1458 = vmatpush1.msra.mxu0 0.0
    %1459 = vmatprep.subr.mxu0 0.0
    %1460 = vmatpush1.msra.mxu0 0.0
    %1461 = vmatprep.subr.mxu0 0.0
    %1462 = vmatpush1.msra.mxu0 0.0
    %1463 = vmatprep.subr.mxu0 0.0
    %1464 = vmatpush1.msra.mxu0 0.0
    %1465 = vmatprep.subr.mxu0 0.0
    %1466 = vmatpush1.msra.mxu0 0.0
    %1467 = vmatprep.subr.mxu0 0.0
    %1468 = vmatpush1.msra.mxu0 0.0
    %1469 = vmatprep.subr.mxu0 0.0
    %1470 = vmatpush1.msra.mxu0 %v1434
    %1471 = vmatprep.subr.mxu0 0.0
    %1472 = vmatpush2.msra.mxu0 0.0
    %1473 = vmatprep.subr.mxu0 0.0
    %1474 = vmatpush2.msra.mxu0 0.0
    %1475 = vmatprep.subr.mxu0 0.0
    %1476 = vmatpush2.msra.mxu0 0.0
    %1477 = vmatprep.subr.mxu0 0.0
    %1478 = vmatpush2.msra.mxu0 0.0
    %1479 = vmatprep.subr.mxu0 0.0
    %1480 = vmatpush2.msra.mxu0 0.0
    %1481 = vmatprep.subr.mxu0 0.0
    %1482 = vmatpush2.msra.mxu0 0.0
    %1483 = vmatprep.subr.mxu0 0.0
    %1484 = vmatpush2.msra.mxu0 0.0
    %1485 = vmatprep.subr.mxu0 0.0
    %1486 = vmatpush2.msra.mxu0 0.0
    %1487 = vmatprep.subr.mxu0 0.0
    %1488 = vmatpush2.msra.mxu0 0.0
    %1489 = vmatprep.subr.mxu0 0.0
    %1490 = vmatpush2.msra.mxu0 0.0
    %1491 = vmatprep.subr.mxu0 0.0
    %1492 = vmatpush2.msra.mxu0 0.0
    %1493 = vmatprep.subr.mxu0 0.0
    %1494 = vmatpush2.msra.mxu0 0.0
    %1495 = vmatprep.subr.mxu0 0.0
    %1496 = vmatpush2.msra.mxu0 0.0
    %1497 = vmatprep.subr.mxu0 0.0
    %1498 = vmatpush2.msra.mxu0 0.0
    %1499 = vmatprep.subr.mxu0 0.0
    %1500 = vmatpush2.msra.mxu0 0.0
    %1501 = vmatprep.subr.mxu0 0.0
    %1502 = vmatpush2.msra.mxu0 0.0
    %1503 = vmatprep.mubr.f32.mxu0 0.0
    %1504 = vmatmul.mubr.f32.gmra.mxu0 %v1437
    %v1505 = vpop.f32.mrf.mxu0
    %v1506 = vadd.f32 0.0, %v1505
    %v1507 = vpop.f32.mrf.mxu0
    %1508 = vdwg.mxu0
    %1510 = vrot.lane.b32.xlu0 %v1174, 8
    %v1511 = vpop.permute.xlu0 %1510
    %1514 = vrot.lane.b32.xlu0 %v1340, 16
    %v1515 = vpop.permute.xlu0 %1514
    %1518 = vrot.lane.b32.xlu0 %v1506, 24
    %v1519 = vpop.permute.xlu0 %1518
    %v1521 = vsel %vm168, %v1008, %v1511
    %v1522 = vsel %vm842, %v1521, %v1515
    %v1523 = vsel %vm844, %v1522, %v1519
    %v1524 = vld [vmem:[%s3] sm:$0xff]
    %v1525 = vld [vmem:[%s3 + $0x8] sm:$0xff]
    %v1526 = vld [vmem:[%s3 + $0x10] sm:$0xff]
    %v1527 = vld [vmem:[%s3 + $0x18] sm:$0xff]
    %v1528 = vld [vmem:[%s4] sm:$0x1]
    %v1530 = vlaneseq
    %v1531 = vshrl.u32 %v1530, 7
    %v1532 = vsub.s32 0, %v1531
    %v1533 = vrot.slane %v1528, %v1532
    %v1536 = vsel %vm83, %v845, 0
    %v1539 = vsel %vm83, %v1523, 0
    %1541 = vmatprep.subr.mxu0 0.0
    %1542 = vmatpush1.msra.mxu0 0.0
    %1543 = vmatprep.subr.mxu0 0.0
    %1544 = vmatpush1.msra.mxu0 0.0
    %1545 = vmatprep.subr.mxu0 0.0
    %1546 = vmatpush1.msra.mxu0 0.0
    %1547 = vmatprep.subr.mxu0 0.0
    %1548 = vmatpush1.msra.mxu0 0.0
    %1549 = vmatprep.subr.mxu0 0.0
    %1550 = vmatpush1.msra.mxu0 0.0
    %1551 = vmatprep.subr.mxu0 0.0
    %1552 = vmatpush1.msra.mxu0 0.0
    %1553 = vmatprep.subr.mxu0 0.0
    %1554 = vmatpush1.msra.mxu0 0.0
    %1555 = vmatprep.subr.mxu0 0.0
    %1556 = vmatpush1.msra.mxu0 0.0
    %1557 = vmatprep.subr.mxu0 0.0
    %1558 = vmatpush1.msra.mxu0 0.0
    %1559 = vmatprep.subr.mxu0 0.0
    %1560 = vmatpush1.msra.mxu0 0.0
    %1561 = vmatprep.subr.mxu0 0.0
    %1562 = vmatpush1.msra.mxu0 0.0
    %1563 = vmatprep.subr.mxu0 0.0
    %1564 = vmatpush1.msra.mxu0 0.0
    %1565 = vmatprep.subr.mxu0 0.0
    %1566 = vmatpush1.msra.mxu0 %v1527
    %1567 = vmatprep.subr.mxu0 0.0
    %1568 = vmatpush1.msra.mxu0 %v1526
    %1569 = vmatprep.subr.mxu0 0.0
    %1570 = vmatpush1.msra.mxu0 %v1525
    %1571 = vmatprep.subr.mxu0 0.0
    %1572 = vmatpush1.msra.mxu0 %v1524
    %1573 = vmatprep.subr.mxu0 0.0
    %1574 = vmatpush2.msra.mxu0 0.0
    %1575 = vmatprep.subr.mxu0 0.0
    %1576 = vmatpush2.msra.mxu0 0.0
    %1577 = vmatprep.subr.mxu0 0.0
    %1578 = vmatpush2.msra.mxu0 0.0
    %1579 = vmatprep.subr.mxu0 0.0
    %1580 = vmatpush2.msra.mxu0 0.0
    %1581 = vmatprep.subr.mxu0 0.0
    %1582 = vmatpush2.msra.mxu0 0.0
    %1583 = vmatprep.subr.mxu0 0.0
    %1584 = vmatpush2.msra.mxu0 0.0
    %1585 = vmatprep.subr.mxu0 0.0
    %1586 = vmatpush2.msra.mxu0 0.0
    %1587 = vmatprep.subr.mxu0 0.0
    %1588 = vmatpush2.msra.mxu0 0.0
    %1589 = vmatprep.subr.mxu0 0.0
    %1590 = vmatpush2.msra.mxu0 0.0
    %1591 = vmatprep.subr.mxu0 0.0
    %1592 = vmatpush2.msra.mxu0 0.0
    %1593 = vmatprep.subr.mxu0 0.0
    %1594 = vmatpush2.msra.mxu0 0.0
    %1595 = vmatprep.subr.mxu0 0.0
    %1596 = vmatpush2.msra.mxu0 0.0
    %1597 = vmatprep.subr.mxu0 0.0
    %1598 = vmatpush2.msra.mxu0 0.0
    %1599 = vmatprep.subr.mxu0 0.0
    %1600 = vmatpush2.msra.mxu0 0.0
    %1601 = vmatprep.subr.mxu0 0.0
    %1602 = vmatpush2.msra.mxu0 0.0
    %1603 = vmatprep.subr.mxu0 0.0
    %1604 = vmatpush2.msra.mxu0 0.0
    %1605 = vmatprep.mubr.f32.mxu0 0.0
    %1606 = vmatmul.mubr.f32.gmra.mxu0 %v1536
    %v1607 = vpop.f32.mrf.mxu0
    %v1608 = vadd.f32 %v1533, %v1607
    %v1609 = vpop.f32.mrf.mxu0
    %1610 = vmatprep.mubr.f32.mxu0 0.0
    %1611 = vmatmul.mubr.f32.gmra.mxu0 %v1539
    %v1612 = vpop.f32.mrf.mxu0
    %v1613 = vadd.f32 %v1533, %v1612
    %v1614 = vpop.f32.mrf.mxu0
    %1615 = vdwg.mxu0
    %v1616 = vadd.f32 %v1608, %v70
    %v1617 = vadd.f32 %v1613, %v71
    %v1618 = vld [vmem:[%s5] sm:$0x1]
    %v1619 = vld [vmem:[%s6] sm:$0x1]
    %v1620 = vsel %vm83, %v1616, 0.0
    %1621 = vadd.xlane.f32.xlu0 %v1620
    %v1622 = vpop.xlane.xlu0 %1621
    %v1623 = vsel %vm83, %v1617, 0.0
    %1624 = vadd.xlane.f32.xlu0 %v1623
    %v1625 = vpop.xlane.xlu0 %1624
    %v1626 = vrcp.pop 32.0
    %v1627 = vmul.f32 %v1622, %v1626
    %v1628 = vmul.f32 %v1625, %v1626
    %v1629 = vsub.f32 %v1616, %v1627
    %v1630 = vsub.f32 %v1617, %v1628
    %v1631 = vmul.f32 %v1629, %v1629
    %v1632 = vmul.f32 %v1630, %v1630
    %v1633 = vsel %vm83, %v1631, 0.0
    %1634 = vadd.xlane.f32.xlu0 %v1633
    %v1635 = vpop.xlane.xlu0 %1634
    %v1636 = vsel %vm83, %v1632, 0.0
    %1637 = vadd.xlane.f32.xlu0 %v1636
    %v1638 = vpop.xlane.xlu0 %1637
    %v1639 = vmul.f32 %v1635, %v1626
    %v1640 = vmul.f32 %v1638, %v1626
    %v1641 = vadd.f32 %v1639, 1e-12
    %v1642 = vadd.f32 %v1640, 1e-12
    %v1643 = vrsqrt.pop %v1641
    %v1644 = vrsqrt.pop %v1642
    %v1645 = vmul.f32 %v1629, %v1643
    %v1646 = vmul.f32 %v1630, %v1644
    %v1648 = vlaneseq
    %v1649 = vshrl.u32 %v1648, 7
    %v1650 = vsub.s32 0, %v1649
    %v1651 = vrot.slane %v1618, %v1650
    %v1653 = vmul.f32 %v1645, %v1651
    %v1654 = vmul.f32 %v1646, %v1651
    %v1656 = vlaneseq
    %v1657 = vshrl.u32 %v1656, 7
    %v1658 = vsub.s32 0, %v1657
    %v1659 = vrot.slane %v1619, %v1658
    %v1661 = vadd.f32 %v1653, %v1659
    %v1662 = vadd.f32 %v1654, %v1659
    %v1663 = vld [vmem:[%s7] sm:$0xff]
    %v1664 = vld [vmem:[%s7 + $0x8] sm:$0xff]
    %v1665 = vld [vmem:[%s7 + $0x10] sm:$0xff]
    %v1666 = vld [vmem:[%s7 + $0x18] sm:$0xff]
    %v1667 = vld [vmem:[%s8] sm:$0x1]
    %v1669 = vlaneseq
    %v1670 = vshrl.u32 %v1669, 7
    %v1671 = vsub.s32 0, %v1670
    %v1672 = vrot.slane %v1667, %v1671
    %v1675 = vsel %vm83, %v1661, 0
    %v1678 = vsel %vm83, %v1662, 0
    %1680 = vmatprep.subr.mxu0 0.0
    %1681 = vmatpush1.msra.mxu0 0.0
    %1682 = vmatprep.subr.mxu0 0.0
    %1683 = vmatpush1.msra.mxu0 0.0
    %1684 = vmatprep.subr.mxu0 0.0
    %1685 = vmatpush1.msra.mxu0 0.0
    %1686 = vmatprep.subr.mxu0 0.0
    %1687 = vmatpush1.msra.mxu0 0.0
    %1688 = vmatprep.subr.mxu0 0.0
    %1689 = vmatpush1.msra.mxu0 0.0
    %1690 = vmatprep.subr.mxu0 0.0
    %1691 = vmatpush1.msra.mxu0 0.0
    %1692 = vmatprep.subr.mxu0 0.0
    %1693 = vmatpush1.msra.mxu0 0.0
    %1694 = vmatprep.subr.mxu0 0.0
    %1695 = vmatpush1.msra.mxu0 0.0
    %1696 = vmatprep.subr.mxu0 0.0
    %1697 = vmatpush1.msra.mxu0 0.0
    %1698 = vmatprep.subr.mxu0 0.0
    %1699 = vmatpush1.msra.mxu0 0.0
    %1700 = vmatprep.subr.mxu0 0.0
    %1701 = vmatpush1.msra.mxu0 0.0
    %1702 = vmatprep.subr.mxu0 0.0
    %1703 = vmatpush1.msra.mxu0 0.0
    %1704 = vmatprep.subr.mxu0 0.0
    %1705 = vmatpush1.msra.mxu0 %v1666
    %1706 = vmatprep.subr.mxu0 0.0
    %1707 = vmatpush1.msra.mxu0 %v1665
    %1708 = vmatprep.subr.mxu0 0.0
    %1709 = vmatpush1.msra.mxu0 %v1664
    %1710 = vmatprep.subr.mxu0 0.0
    %1711 = vmatpush1.msra.mxu0 %v1663
    %1712 = vmatprep.subr.mxu0 0.0
    %1713 = vmatpush2.msra.mxu0 0.0
    %1714 = vmatprep.subr.mxu0 0.0
    %1715 = vmatpush2.msra.mxu0 0.0
    %1716 = vmatprep.subr.mxu0 0.0
    %1717 = vmatpush2.msra.mxu0 0.0
    %1718 = vmatprep.subr.mxu0 0.0
    %1719 = vmatpush2.msra.mxu0 0.0
    %1720 = vmatprep.subr.mxu0 0.0
    %1721 = vmatpush2.msra.mxu0 0.0
    %1722 = vmatprep.subr.mxu0 0.0
    %1723 = vmatpush2.msra.mxu0 0.0
    %1724 = vmatprep.subr.mxu0 0.0
    %1725 = vmatpush2.msra.mxu0 0.0
    %1726 = vmatprep.subr.mxu0 0.0
    %1727 = vmatpush2.msra.mxu0 0.0
    %1728 = vmatprep.subr.mxu0 0.0
    %1729 = vmatpush2.msra.mxu0 0.0
    %1730 = vmatprep.subr.mxu0 0.0
    %1731 = vmatpush2.msra.mxu0 0.0
    %1732 = vmatprep.subr.mxu0 0.0
    %1733 = vmatpush2.msra.mxu0 0.0
    %1734 = vmatprep.subr.mxu0 0.0
    %1735 = vmatpush2.msra.mxu0 0.0
    %1736 = vmatprep.subr.mxu0 0.0
    %1737 = vmatpush2.msra.mxu0 0.0
    %1738 = vmatprep.subr.mxu0 0.0
    %1739 = vmatpush2.msra.mxu0 0.0
    %1740 = vmatprep.subr.mxu0 0.0
    %1741 = vmatpush2.msra.mxu0 0.0
    %1742 = vmatprep.subr.mxu0 0.0
    %1743 = vmatpush2.msra.mxu0 0.0
    %1744 = vmatprep.mubr.f32.mxu0 0.0
    %1745 = vmatmul.mubr.f32.gmra.mxu0 %v1675
    %v1746 = vpop.f32.mrf.mxu0
    %v1747 = vadd.f32 %v1672, %v1746
    %v1748 = vpop.f32.mrf.mxu0
    %1749 = vmatprep.mubr.f32.mxu0 0.0
    %1750 = vmatmul.mubr.f32.gmra.mxu0 %v1678
    %v1751 = vpop.f32.mrf.mxu0
    %v1752 = vadd.f32 %v1672, %v1751
    %v1753 = vpop.f32.mrf.mxu0
    %1754 = vdwg.mxu0
    %v1755 = vmul.f32 %v1747, 0.5
    %v1756 = vmul.f32 %v1752, 0.5
    %v1757 = vmul.f32 %v1747, 0.044715
    %v1758 = vmul.f32 %v1752, 0.044715
    %v1759 = vmul.f32 %v1757, %v1747
    %v1760 = vmul.f32 %v1758, %v1752
    %v1761 = vmul.f32 %v1759, %v1747
    %v1762 = vmul.f32 %v1760, %v1752
    %v1763 = vadd.f32 %v1747, %v1761
    %v1764 = vadd.f32 %v1752, %v1762
    %v1765 = vmul.f32 %v1763, 0.7978846
    %v1766 = vmul.f32 %v1764, 0.7978846
    %v1767 = vtanh.pop %v1765
    %v1768 = vtanh.pop %v1766
    %v1769 = vadd.f32 %v1767, 1.0
    %v1770 = vadd.f32 %v1768, 1.0
    %v1771 = vmul.f32 %v1755, %v1769
    %v1772 = vmul.f32 %v1756, %v1770
    %v1773 = vld [vmem:[%s9] sm:$0xff]
    %v1774 = vld [vmem:[%s9 + $0x8] sm:$0xff]
    %v1775 = vld [vmem:[%s9 + $0x10] sm:$0xff]
    %v1776 = vld [vmem:[%s9 + $0x18] sm:$0xff]
    %v1777 = vld [vmem:[%s9 + $0x20] sm:$0xff]
    %v1778 = vld [vmem:[%s9 + $0x28] sm:$0xff]
    %v1779 = vld [vmem:[%s9 + $0x30] sm:$0xff]
    %v1780 = vld [vmem:[%s9 + $0x38] sm:$0xff]
    %v1781 = vld [vmem:[%s10] sm:$0x1]
    %v1783 = vlaneseq
    %v1784 = vshrl.u32 %v1783, 7
    %v1785 = vsub.s32 0, %v1784
    %v1786 = vrot.slane %v1781, %v1785
    %vm1788 = vcmask 523264
    %v1790 = vsel %vm1788, %v1771, 0
    %v1793 = vsel %vm1788, %v1772, 0
    %1795 = vmatprep.subr.mxu0 0.0
    %1796 = vmatpush1.msra.mxu0 0.0
    %1797 = vmatprep.subr.mxu0 0.0
    %1798 = vmatpush1.msra.mxu0 0.0
    %1799 = vmatprep.subr.mxu0 0.0
    %1800 = vmatpush1.msra.mxu0 0.0
    %1801 = vmatprep.subr.mxu0 0.0
    %1802 = vmatpush1.msra.mxu0 0.0
    %1803 = vmatprep.subr.mxu0 0.0
    %1804 = vmatpush1.msra.mxu0 0.0
    %1805 = vmatprep.subr.mxu0 0.0
    %1806 = vmatpush1.msra.mxu0 0.0
    %1807 = vmatprep.subr.mxu0 0.0
    %1808 = vmatpush1.msra.mxu0 0.0
    %1809 = vmatprep.subr.mxu0 0.0
    %1810 = vmatpush1.msra.mxu0 0.0
    %1811 = vmatprep.subr.mxu0 0.0
    %1812 = vmatpush1.msra.mxu0 %v1780
    %1813 = vmatprep.subr.mxu0 0.0
    %1814 = vmatpush1.msra.mxu0 %v1779
    %1815 = vmatprep.subr.mxu0 0.0
    %1816 = vmatpush1.msra.mxu0 %v1778
    %1817 = vmatprep.subr.mxu0 0.0
    %1818 = vmatpush1.msra.mxu0 %v1777
    %1819 = vmatprep.subr.mxu0 0.0
    %1820 = vmatpush1.msra.mxu0 %v1776
    %1821 = vmatprep.subr.mxu0 0.0
    %1822 = vmatpush1.msra.mxu0 %v1775
    %1823 = vmatprep.subr.mxu0 0.0
    %1824 = vmatpush1.msra.mxu0 %v1774
    %1825 = vmatprep.subr.mxu0 0.0
    %1826 = vmatpush1.msra.mxu0 %v1773
    %1827 = vmatprep.subr.mxu0 0.0
    %1828 = vmatpush2.msra.mxu0 0.0
    %1829 = vmatprep.subr.mxu0 0.0
    %1830 = vmatpush2.msra.mxu0 0.0
    %1831 = vmatprep.subr.mxu0 0.0
    %1832 = vmatpush2.msra.mxu0 0.0
    %1833 = vmatprep.subr.mxu0 0.0
    %1834 = vmatpush2.msra.mxu0 0.0
    %1835 = vmatprep.subr.mxu0 0.0
    %1836 = vmatpush2.msra.mxu0 0.0
    %1837 = vmatprep.subr.mxu0 0.0
    %1838 = vmatpush2.msra.mxu0 0.0
    %1839 = vmatprep.subr.mxu0 0.0
    %1840 = vmatpush2.msra.mxu0 0.0
    %1841 = vmatprep.subr.mxu0 0.0
    %1842 = vmatpush2.msra.mxu0 0.0
    %1843 = vmatprep.subr.mxu0 0.0
    %1844 = vmatpush2.msra.mxu0 0.0
    %1845 = vmatprep.subr.mxu0 0.0
    %1846 = vmatpush2.msra.mxu0 0.0
    %1847 = vmatprep.subr.mxu0 0.0
    %1848 = vmatpush2.msra.mxu0 0.0
    %1849 = vmatprep.subr.mxu0 0.0
    %1850 = vmatpush2.msra.mxu0 0.0
    %1851 = vmatprep.subr.mxu0 0.0
    %1852 = vmatpush2.msra.mxu0 0.0
    %1853 = vmatprep.subr.mxu0 0.0
    %1854 = vmatpush2.msra.mxu0 0.0
    %1855 = vmatprep.subr.mxu0 0.0
    %1856 = vmatpush2.msra.mxu0 0.0
    %1857 = vmatprep.subr.mxu0 0.0
    %1858 = vmatpush2.msra.mxu0 0.0
    %1859 = vmatprep.mubr.f32.mxu0 0.0
    %1860 = vmatmul.mubr.f32.gmra.mxu0 %v1790
    %v1861 = vpop.f32.mrf.mxu0
    %v1862 = vadd.f32 %v1786, %v1861
    %v1863 = vpop.f32.mrf.mxu0
    %1864 = vmatprep.mubr.f32.mxu0 0.0
    %1865 = vmatmul.mubr.f32.gmra.mxu0 %v1793
    %v1866 = vpop.f32.mrf.mxu0
    %v1867 = vadd.f32 %v1786, %v1866
    %v1868 = vpop.f32.mrf.mxu0
    %1869 = vdwg.mxu0
    %v1870 = vadd.f32 %v1862, %v1661
    %v1871 = vadd.f32 %v1867, %v1662
    %v1872 = vld [vmem:[%s11] sm:$0x1]
    %v1873 = vld [vmem:[%s12] sm:$0x1]
    %v1874 = vsel %vm83, %v1870, 0.0
    %1875 = vadd.xlane.f32.xlu0 %v1874
    %v1876 = vpop.xlane.xlu0 %1875
    %v1877 = vsel %vm83, %v1871, 0.0
    %1878 = vadd.xlane.f32.xlu0 %v1877
    %v1879 = vpop.xlane.xlu0 %1878
    %v1880 = vmul.f32 %v1876, %v1626
    %v1881 = vmul.f32 %v1879, %v1626
    %v1882 = vsub.f32 %v1870, %v1880
    %v1883 = vsub.f32 %v1871, %v1881
    %v1884 = vmul.f32 %v1882, %v1882
    %v1885 = vmul.f32 %v1883, %v1883
    %v1886 = vsel %vm83, %v1884, 0.0
    %1887 = vadd.xlane.f32.xlu0 %v1886
    %v1888 = vpop.xlane.xlu0 %1887
    %v1889 = vsel %vm83, %v1885, 0.0
    %1890 = vadd.xlane.f32.xlu0 %v1889
    %v1891 = vpop.xlane.xlu0 %1890
    %v1892 = vmul.f32 %v1888, %v1626
    %v1893 = vmul.f32 %v1891, %v1626
    %v1894 = vadd.f32 %v1892, 1e-12
    %v1895 = vadd.f32 %v1893, 1e-12
    %v1896 = vrsqrt.pop %v1894
    %v1897 = vrsqrt.pop %v1895
    %v1898 = vmul.f32 %v1882, %v1896
    %v1899 = vmul.f32 %v1883, %v1897
    %v1901 = vlaneseq
    %v1902 = vshrl.u32 %v1901, 7
    %v1903 = vsub.s32 0, %v1902
    %v1904 = vrot.slane %v1872, %v1903
    %v1906 = vmul.f32 %v1898, %v1904
    %v1907 = vmul.f32 %v1899, %v1904
    %v1909 = vlaneseq
    %v1910 = vshrl.u32 %v1909, 7
    %v1911 = vsub.s32 0, %v1910
    %v1912 = vrot.slane %v1873, %v1911
    %v1914 = vadd.f32 %v1906, %v1912
    %v1915 = vadd.f32 %v1907, %v1912
    %s1916 = scalar_lea.vmem %s1, 32
    %v1917 = vld [vmem:[%s1916] sm:$0xff]
    %v1918 = vld [vmem:[%s1916 + $0x8] sm:$0xff]
    %v1919 = vld [vmem:[%s1916 + $0x10] sm:$0xff]
    %v1920 = vld [vmem:[%s1916 + $0x18] sm:$0xff]
    %s1921 = scalar_lea.vmem %s2, 1
    %v1922 = vld [vmem:[%s1921] sm:$0x1]
    %v1924 = vlaneseq
    %v1925 = vshrl.u32 %v1924, 7
    %v1926 = vsub.s32 0, %v1925
    %v1927 = vrot.slane %v1922, %v1926
    %v1930 = vsel %vm83, %v1914, 0
    %v1933 = vsel %vm83, %v1915, 0
    %1935 = vmatprep.subr.mxu0 0.0
    %1936 = vmatpush1.msra.mxu0 0.0
    %1937 = vmatprep.subr.mxu0 0.0
    %1938 = vmatpush1.msra.mxu0 0.0
    %1939 = vmatprep.subr.mxu0 0.0
    %1940 = vmatpush1.msra.mxu0 0.0
    %1941 = vmatprep.subr.mxu0 0.0
    %1942 = vmatpush1.msra.mxu0 0.0
    %1943 = vmatprep.subr.mxu0 0.0
    %1944 = vmatpush1.msra.mxu0 0.0
    %1945 = vmatprep.subr.mxu0 0.0
    %1946 = vmatpush1.msra.mxu0 0.0
    %1947 = vmatprep.subr.mxu0 0.0
    %1948 = vmatpush1.msra.mxu0 0.0
    %1949 = vmatprep.subr.mxu0 0.0
    %1950 = vmatpush1.msra.mxu0 0.0
    %1951 = vmatprep.subr.mxu0 0.0
    %1952 = vmatpush1.msra.mxu0 0.0
    %1953 = vmatprep.subr.mxu0 0.0
    %1954 = vmatpush1.msra.mxu0 0.0
    %1955 = vmatprep.subr.mxu0 0.0
    %1956 = vmatpush1.msra.mxu0 0.0
    %1957 = vmatprep.subr.mxu0 0.0
    %1958 = vmatpush1.msra.mxu0 0.0
    %1959 = vmatprep.subr.mxu0 0.0
    %1960 = vmatpush1.msra.mxu0 %v1920
    %1961 = vmatprep.subr.mxu0 0.0
    %1962 = vmatpush1.msra.mxu0 %v1919
    %1963 = vmatprep.subr.mxu0 0.0
    %1964 = vmatpush1.msra.mxu0 %v1918
    %1965 = vmatprep.subr.mxu0 0.0
    %1966 = vmatpush1.msra.mxu0 %v1917
    %1967 = vmatprep.subr.mxu0 0.0
    %1968 = vmatpush2.msra.mxu0 0.0
    %1969 = vmatprep.subr.mxu0 0.0
    %1970 = vmatpush2.msra.mxu0 0.0
    %1971 = vmatprep.subr.mxu0 0.0
    %1972 = vmatpush2.msra.mxu0 0.0
    %1973 = vmatprep.subr.mxu0 0.0
    %1974 = vmatpush2.msra.mxu0 0.0
    %1975 = vmatprep.subr.mxu0 0.0
    %1976 = vmatpush2.msra.mxu0 0.0
    %1977 = vmatprep.subr.mxu0 0.0
    %1978 = vmatpush2.msra.mxu0 0.0
    %1979 = vmatprep.subr.mxu0 0.0
    %1980 = vmatpush2.msra.mxu0 0.0
    %1981 = vmatprep.subr.mxu0 0.0
    %1982 = vmatpush2.msra.mxu0 0.0
    %1983 = vmatprep.subr.mxu0 0.0
    %1984 = vmatpush2.msra.mxu0 0.0
    %1985 = vmatprep.subr.mxu0 0.0
    %1986 = vmatpush2.msra.mxu0 0.0
    %1987 = vmatprep.subr.mxu0 0.0
    %1988 = vmatpush2.msra.mxu0 0.0
    %1989 = vmatprep.subr.mxu0 0.0
    %1990 = vmatpush2.msra.mxu0 0.0
    %1991 = vmatprep.subr.mxu0 0.0
    %1992 = vmatpush2.msra.mxu0 0.0
    %1993 = vmatprep.subr.mxu0 0.0
    %1994 = vmatpush2.msra.mxu0 0.0
    %1995 = vmatprep.subr.mxu0 0.0
    %1996 = vmatpush2.msra.mxu0 0.0
    %1997 = vmatprep.subr.mxu0 0.0
    %1998 = vmatpush2.msra.mxu0 0.0
    %1999 = vmatprep.mubr.f32.mxu0 0.0
    %2000 = vmatmul.mubr.f32.gmra.mxu0 %v1930
    %v2001 = vpop.f32.mrf.mxu0
    %v2002 = vadd.f32 %v1927, %v2001
    %v2003 = vpop.f32.mrf.mxu0
    %2004 = vmatprep.mubr.f32.mxu0 0.0
    %2005 = vmatmul.mubr.f32.gmra.mxu0 %v1933
    %v2006 = vpop.f32.mrf.mxu0
    %v2007 = vadd.f32 %v1927, %v2006
    %v2008 = vpop.f32.mrf.mxu0
    %2009 = vdwg.mxu0
    %2011 = vrot.lane.b32.xlu0 %v2002, 96
    %v2012 = vpop.permute.xlu0 %2011
    %v2013 = vsel %vm168, %v2002, 0
    %v2015 = vsel %vm168, %v2012, 0
    %2017 = vmatprep.subr.mxu0 0.0
    %2018 = vmatpush1.xpose.msra.mxu0 0.0
    %2019 = vmatprep.subr.mxu0 0.0
    %2020 = vmatpush1.xpose.msra.mxu0 0.0
    %2021 = vmatprep.subr.mxu0 0.0
    %2022 = vmatpush1.xpose.msra.mxu0 0.0
    %2023 = vmatprep.subr.mxu0 0.0
    %2024 = vmatpush1.xpose.msra.mxu0 0.0
    %2025 = vmatprep.subr.mxu0 0.0
    %2026 = vmatpush1.xpose.msra.mxu0 0.0
    %2027 = vmatprep.subr.mxu0 0.0
    %2028 = vmatpush1.xpose.msra.mxu0 0.0
    %2029 = vmatprep.subr.mxu0 0.0
    %2030 = vmatpush1.xpose.msra.mxu0 0.0
    %2031 = vmatprep.subr.mxu0 0.0
    %2032 = vmatpush1.xpose.msra.mxu0 0.0
    %2033 = vmatprep.subr.mxu0 0.0
    %2034 = vmatpush1.xpose.msra.mxu0 0.0
    %2035 = vmatprep.subr.mxu0 0.0
    %2036 = vmatpush1.xpose.msra.mxu0 0.0
    %2037 = vmatprep.subr.mxu0 0.0
    %2038 = vmatpush1.xpose.msra.mxu0 0.0
    %2039 = vmatprep.subr.mxu0 0.0
    %2040 = vmatpush1.xpose.msra.mxu0 0.0
    %2041 = vmatprep.subr.mxu0 0.0
    %2042 = vmatpush1.xpose.msra.mxu0 0.0
    %2043 = vmatprep.subr.mxu0 0.0
    %2044 = vmatpush1.xpose.msra.mxu0 0.0
    %2045 = vmatprep.subr.mxu0 0.0
    %2046 = vmatpush1.xpose.msra.mxu0 0.0
    %2047 = vmatprep.subr.mxu0 0.0
    %2048 = vmatpush1.xpose.msra.mxu0 %v2015
    %2049 = vmatprep.subr.mxu0 0.0
    %2050 = vmatpush2.xpose.msra.mxu0 0.0
    %2051 = vmatprep.subr.mxu0 0.0
    %2052 = vmatpush2.xpose.msra.mxu0 0.0
    %2053 = vmatprep.subr.mxu0 0.0
    %2054 = vmatpush2.xpose.msra.mxu0 0.0
    %2055 = vmatprep.subr.mxu0 0.0
    %2056 = vmatpush2.xpose.msra.mxu0 0.0
    %2057 = vmatprep.subr.mxu0 0.0
    %2058 = vmatpush2.xpose.msra.mxu0 0.0
    %2059 = vmatprep.subr.mxu0 0.0
    %2060 = vmatpush2.xpose.msra.mxu0 0.0
    %2061 = vmatprep.subr.mxu0 0.0
    %2062 = vmatpush2.xpose.msra.mxu0 0.0
    %2063 = vmatprep.subr.mxu0 0.0
    %2064 = vmatpush2.xpose.msra.mxu0 0.0
    %2065 = vmatprep.subr.mxu0 0.0
    %2066 = vmatpush2.xpose.msra.mxu0 0.0
    %2067 = vmatprep.subr.mxu0 0.0
    %2068 = vmatpush2.xpose.msra.mxu0 0.0
    %2069 = vmatprep.subr.mxu0 0.0
    %2070 = vmatpush2.xpose.msra.mxu0 0.0
    %2071 = vmatprep.subr.mxu0 0.0
    %2072 = vmatpush2.xpose.msra.mxu0 0.0
    %2073 = vmatprep.subr.mxu0 0.0
    %2074 = vmatpush2.xpose.msra.mxu0 0.0
    %2075 = vmatprep.subr.mxu0 0.0
    %2076 = vmatpush2.xpose.msra.mxu0 0.0
    %2077 = vmatprep.subr.mxu0 0.0
    %2078 = vmatpush2.xpose.msra.mxu0 0.0
    %2079 = vmatprep.subr.mxu0 0.0
    %2080 = vmatpush2.xpose.msra.mxu0 0.0
    %2081 = vmatprep.mubr.f32.mxu0 0.0
    %2082 = vmatmul.mubr.f32.gmra.mxu0 %v2013
    %v2083 = vpop.f32.mrf.mxu0
    %v2084 = vadd.f32 0.0, %v2083
    %v2085 = vpop.f32.mrf.mxu0
    %2086 = vdwg.mxu0
    %v2087 = vmul.f32 %v2084, 0.35355338
    %v2088 = vsel %vm168, %v2087, -inf
    %2089 = vmax.xlane.f32.xlu0 %v2088
    %v2090 = vpop.xlane.xlu0 %2089
    %v2091 = vsub.f32 %v2087, %v2090
    %v2092 = vmul.f32 %v2091, 1.442695
    %v2093 = vpow.pop %v2092
    %v2094 = vsel %vm168, %v2093, 0.0
    %2095 = vadd.xlane.f32.xlu0 %v2094
    %v2096 = vpop.xlane.xlu0 %2095
    %v2097 = vrcp.pop %v2096
    %v2098 = vmul.f32 %v2093, %v2097
    %2099 = vrot.lane.b32.xlu0 %v2002, 64
    %v2100 = vpop.permute.xlu0 %2099
    %v2103 = vsel %vm168, %v2098, 0
    %2105 = vmatprep.subr.mxu0 0.0
    %2106 = vmatpush1.msra.mxu0 0.0
    %2107 = vmatprep.subr.mxu0 0.0
    %2108 = vmatpush1.msra.mxu0 0.0
    %2109 = vmatprep.subr.mxu0 0.0
    %2110 = vmatpush1.msra.mxu0 0.0
    %2111 = vmatprep.subr.mxu0 0.0
    %2112 = vmatpush1.msra.mxu0 0.0
    %2113 = vmatprep.subr.mxu0 0.0
    %2114 = vmatpush1.msra.mxu0 0.0
    %2115 = vmatprep.subr.mxu0 0.0
    %2116 = vmatpush1.msra.mxu0 0.0
    %2117 = vmatprep.subr.mxu0 0.0
    %2118 = vmatpush1.msra.mxu0 0.0
    %2119 = vmatprep.subr.mxu0 0.0
    %2120 = vmatpush1.msra.mxu0 0.0
    %2121 = vmatprep.subr.mxu0 0.0
    %2122 = vmatpush1.msra.mxu0 0.0
    %2123 = vmatprep.subr.mxu0 0.0
    %2124 = vmatpush1.msra.mxu0 0.0
    %2125 = vmatprep.subr.mxu0 0.0
    %2126 = vmatpush1.msra.mxu0 0.0
    %2127 = vmatprep.subr.mxu0 0.0
    %2128 = vmatpush1.msra.mxu0 0.0
    %2129 = vmatprep.subr.mxu0 0.0
    %2130 = vmatpush1.msra.mxu0 0.0
    %2131 = vmatprep.subr.mxu0 0.0
    %2132 = vmatpush1.msra.mxu0 0.0
    %2133 = vmatprep.subr.mxu0 0.0
    %2134 = vmatpush1.msra.mxu0 0.0
    %2135 = vmatprep.subr.mxu0 0.0
    %2136 = vmatpush1.msra.mxu0 %v2100
    %2137 = vmatprep.subr.mxu0 0.0
    %2138 = vmatpush2.msra.mxu0 0.0
    %2139 = vmatprep.subr.mxu0 0.0
    %2140 = vmatpush2.msra.mxu0 0.0
    %2141 = vmatprep.subr.mxu0 0.0
    %2142 = vmatpush2.msra.mxu0 0.0
    %2143 = vmatprep.subr.mxu0 0.0
    %2144 = vmatpush2.msra.mxu0 0.0
    %2145 = vmatprep.subr.mxu0 0.0
    %2146 = vmatpush2.msra.mxu0 0.0
    %2147 = vmatprep.subr.mxu0 0.0
    %2148 = vmatpush2.msra.mxu0 0.0
    %2149 = vmatprep.subr.mxu0 0.0
    %2150 = vmatpush2.msra.mxu0 0.0
    %2151 = vmatprep.subr.mxu0 0.0
    %2152 = vmatpush2.msra.mxu0 0.0
    %2153 = vmatprep.subr.mxu0 0.0
    %2154 = vmatpush2.msra.mxu0 0.0
    %2155 = vmatprep.subr.mxu0 0.0
    %2156 = vmatpush2.msra.mxu0 0.0
    %2157 = vmatprep.subr.mxu0 0.0
    %2158 = vmatpush2.msra.mxu0 0.0
    %2159 = vmatprep.subr.mxu0 0.0
    %2160 = vmatpush2.msra.mxu0 0.0
    %2161 = vmatprep.subr.mxu0 0.0
    %2162 = vmatpush2.msra.mxu0 0.0
    %2163 = vmatprep.subr.mxu0 0.0
    %2164 = vmatpush2.msra.mxu0 0.0
    %2165 = vmatprep.subr.mxu0 0.0
    %2166 = vmatpush2.msra.mxu0 0.0
    %2167 = vmatprep.subr.mxu0 0.0
    %2168 = vmatpush2.msra.mxu0 0.0
    %2169 = vmatprep.mubr.f32.mxu0 0.0
    %2170 = vmatmul.mubr.f32.gmra.mxu0 %v2103
    %v2171 = vpop.f32.mrf.mxu0
    %v2172 = vadd.f32 0.0, %v2171
    %v2173 = vpop.f32.mrf.mxu0
    %2174 = vdwg.mxu0
    %2175 = vrot.lane.b32.xlu0 %v2002, 120
    %v2176 = vpop.permute.xlu0 %2175
    %2177 = vrot.lane.b32.xlu0 %v2002, 88
    %v2178 = vpop.permute.xlu0 %2177
    %v2179 = vsel %vm168, %v2176, 0
    %v2181 = vsel %vm168, %v2178, 0
    %2183 = vmatprep.subr.mxu0 0.0
    %2184 = vmatpush1.xpose.msra.mxu0 0.0
    %2185 = vmatprep.subr.mxu0 0.0
    %2186 = vmatpush1.xpose.msra.mxu0 0.0
    %2187 = vmatprep.subr.mxu0 0.0
    %2188 = vmatpush1.xpose.msra.mxu0 0.0
    %2189 = vmatprep.subr.mxu0 0.0
    %2190 = vmatpush1.xpose.msra.mxu0 0.0
    %2191 = vmatprep.subr.mxu0 0.0
    %2192 = vmatpush1.xpose.msra.mxu0 0.0
    %2193 = vmatprep.subr.mxu0 0.0
    %2194 = vmatpush1.xpose.msra.mxu0 0.0
    %2195 = vmatprep.subr.mxu0 0.0
    %2196 = vmatpush1.xpose.msra.mxu0 0.0
    %2197 = vmatprep.subr.mxu0 0.0
    %2198 = vmatpush1.xpose.msra.mxu0 0.0
    %2199 = vmatprep.subr.mxu0 0.0
    %2200 = vmatpush1.xpose.msra.mxu0 0.0
    %2201 = vmatprep.subr.mxu0 0.0
    %2202 = vmatpush1.xpose.msra.mxu0 0.0
    %2203 = vmatprep.subr.mxu0 0.0
    %2204 = vmatpush1.xpose.msra.mxu0 0.0
    %2205 = vmatprep.subr.mxu0 0.0
    %2206 = vmatpush1.xpose.msra.mxu0 0.0
    %2207 = vmatprep.subr.mxu0 0.0
    %2208 = vmatpush1.xpose.msra.mxu0 0.0
    %2209 = vmatprep.subr.mxu0 0.0
    %2210 = vmatpush1.xpose.msra.mxu0 0.0
    %2211 = vmatprep.subr.mxu0 0.0
    %2212 = vmatpush1.xpose.msra.mxu0 0.0
    %2213 = vmatprep.subr.mxu0 0.0
    %2214 = vmatpush1.xpose.msra.mxu0 %v2181
    %2215 = vmatprep.subr.mxu0 0.0
    %2216 = vmatpush2.xpose.msra.mxu0 0.0
    %2217 = vmatprep.subr.mxu0 0.0
    %2218 = vmatpush2.xpose.msra.mxu0 0.0
    %2219 = vmatprep.subr.mxu0 0.0
    %2220 = vmatpush2.xpose.msra.mxu0 0.0
    %2221 = vmatprep.subr.mxu0 0.0
    %2222 = vmatpush2.xpose.msra.mxu0 0.0
    %2223 = vmatprep.subr.mxu0 0.0
    %2224 = vmatpush2.xpose.msra.mxu0 0.0
    %2225 = vmatprep.subr.mxu0 0.0
    %2226 = vmatpush2.xpose.msra.mxu0 0.0
    %2227 = vmatprep.subr.mxu0 0.0
    %2228 = vmatpush2.xpose.msra.mxu0 0.0
    %2229 = vmatprep.subr.mxu0 0.0
    %2230 = vmatpush2.xpose.msra.mxu0 0.0
    %2231 = vmatprep.subr.mxu0 0.0
    %2232 = vmatpush2.xpose.msra.mxu0 0.0
    %2233 = vmatprep.subr.mxu0 0.0
    %2234 = vmatpush2.xpose.msra.mxu0 0.0
    %2235 = vmatprep.subr.mxu0 0.0
    %2236 = vmatpush2.xpose.msra.mxu0 0.0
    %2237 = vmatprep.subr.mxu0 0.0
    %2238 = vmatpush2.xpose.msra.mxu0 0.0
    %2239 = vmatprep.subr.mxu0 0.0
    %2240 = vmatpush2.xpose.msra.mxu0 0.0
    %2241 = vmatprep.subr.mxu0 0.0
    %2242 = vmatpush2.xpose.msra.mxu0 0.0
    %2243 = vmatprep.subr.mxu0 0.0
    %2244 = vmatpush2.xpose.msra.mxu0 0.0
    %2245 = vmatprep.subr.mxu0 0.0
    %2246 = vmatpush2.xpose.msra.mxu0 0.0
    %2247 = vmatprep.mubr.f32.mxu0 0.0
    %2248 = vmatmul.mubr.f32.gmra.mxu0 %v2179
    %v2249 = vpop.f32.mrf.mxu0
    %v2250 = vadd.f32 0.0, %v2249
    %v2251 = vpop.f32.mrf.mxu0
    %2252 = vdwg.mxu0
    %v2253 = vmul.f32 %v2250, 0.35355338
    %v2254 = vsel %vm168, %v2253, -inf
    %2255 = vmax.xlane.f32.xlu0 %v2254
    %v2256 = vpop.xlane.xlu0 %2255
    %v2257 = vsub.f32 %v2253, %v2256
    %v2258 = vmul.f32 %v2257, 1.442695
    %v2259 = vpow.pop %v2258
    %v2260 = vsel %vm168, %v2259, 0.0
    %2261 = vadd.xlane.f32.xlu0 %v2260
    %v2262 = vpop.xlane.xlu0 %2261
    %v2263 = vrcp.pop %v2262
    %v2264 = vmul.f32 %v2259, %v2263
    %2265 = vrot.lane.b32.xlu0 %v2002, 56
    %v2266 = vpop.permute.xlu0 %2265
    %v2269 = vsel %vm168, %v2264, 0
    %2271 = vmatprep.subr.mxu0 0.0
    %2272 = vmatpush1.msra.mxu0 0.0
    %2273 = vmatprep.subr.mxu0 0.0
    %2274 = vmatpush1.msra.mxu0 0.0
    %2275 = vmatprep.subr.mxu0 0.0
    %2276 = vmatpush1.msra.mxu0 0.0
    %2277 = vmatprep.subr.mxu0 0.0
    %2278 = vmatpush1.msra.mxu0 0.0
    %2279 = vmatprep.subr.mxu0 0.0
    %2280 = vmatpush1.msra.mxu0 0.0
    %2281 = vmatprep.subr.mxu0 0.0
    %2282 = vmatpush1.msra.mxu0 0.0
    %2283 = vmatprep.subr.mxu0 0.0
    %2284 = vmatpush1.msra.mxu0 0.0
    %2285 = vmatprep.subr.mxu0 0.0
    %2286 = vmatpush1.msra.mxu0 0.0
    %2287 = vmatprep.subr.mxu0 0.0
    %2288 = vmatpush1.msra.mxu0 0.0
    %2289 = vmatprep.subr.mxu0 0.0
    %2290 = vmatpush1.msra.mxu0 0.0
    %2291 = vmatprep.subr.mxu0 0.0
    %2292 = vmatpush1.msra.mxu0 0.0
    %2293 = vmatprep.subr.mxu0 0.0
    %2294 = vmatpush1.msra.mxu0 0.0
    %2295 = vmatprep.subr.mxu0 0.0
    %2296 = vmatpush1.msra.mxu0 0.0
    %2297 = vmatprep.subr.mxu0 0.0
    %2298 = vmatpush1.msra.mxu0 0.0
    %2299 = vmatprep.subr.mxu0 0.0
    %2300 = vmatpush1.msra.mxu0 0.0
    %2301 = vmatprep.subr.mxu0 0.0
    %2302 = vmatpush1.msra.mxu0 %v2266
    %2303 = vmatprep.subr.mxu0 0.0
    %2304 = vmatpush2.msra.mxu0 0.0
    %2305 = vmatprep.subr.mxu0 0.0
    %2306 = vmatpush2.msra.mxu0 0.0
    %2307 = vmatprep.subr.mxu0 0.0
    %2308 = vmatpush2.msra.mxu0 0.0
    %2309 = vmatprep.subr.mxu0 0.0
    %2310 = vmatpush2.msra.mxu0 0.0
    %2311 = vmatprep.subr.mxu0 0.0
    %2312 = vmatpush2.msra.mxu0 0.0
    %2313 = vmatprep.subr.mxu0 0.0
    %2314 = vmatpush2.msra.mxu0 0.0
    %2315 = vmatprep.subr.mxu0 0.0
    %2316 = vmatpush2.msra.mxu0 0.0
    %2317 = vmatprep.subr.mxu0 0.0
    %2318 = vmatpush2.msra.mxu0 0.0
    %2319 = vmatprep.subr.mxu0 0.0
    %2320 = vmatpush2.msra.mxu0 0.0
    %2321 = vmatprep.subr.mxu0 0.0
    %2322 = vmatpush2.msra.mxu0 0.0
    %2323 = vmatprep.subr.mxu0 0.0
    %2324 = vmatpush2.msra.mxu0 0.0
    %2325 = vmatprep.subr.mxu0 0.0
    %2326 = vmatpush2.msra.mxu0 0.0
    %2327 = vmatprep.subr.mxu0 0.0
    %2328 = vmatpush2.msra.mxu0 0.0
    %2329 = vmatprep.subr.mxu0 0.0
    %2330 = vmatpush2.msra.mxu0 0.0
    %2331 = vmatprep.subr.mxu0 0.0
    %2332 = vmatpush2.msra.mxu0 0.0
    %2333 = vmatprep.subr.mxu0 0.0
    %2334 = vmatpush2.msra.mxu0 0.0
    %2335 = vmatprep.mubr.f32.mxu0 0.0
    %2336 = vmatmul.mubr.f32.gmra.mxu0 %v2269
    %v2337 = vpop.f32.mrf.mxu0
    %v2338 = vadd.f32 0.0, %v2337
    %v2339 = vpop.f32.mrf.mxu0
    %2340 = vdwg.mxu0
    %2341 = vrot.lane.b32.xlu0 %v2002, 112
    %v2342 = vpop.permute.xlu0 %2341
    %2343 = vrot.lane.b32.xlu0 %v2002, 80
    %v2344 = vpop.permute.xlu0 %2343
    %v2345 = vsel %vm168, %v2342, 0
    %v2347 = vsel %vm168, %v2344, 0
    %2349 = vmatprep.subr.mxu0 0.0
    %2350 = vmatpush1.xpose.msra.mxu0 0.0
    %2351 = vmatprep.subr.mxu0 0.0
    %2352 = vmatpush1.xpose.msra.mxu0 0.0
    %2353 = vmatprep.subr.mxu0 0.0
    %2354 = vmatpush1.xpose.msra.mxu0 0.0
    %2355 = vmatprep.subr.mxu0 0.0
    %2356 = vmatpush1.xpose.msra.mxu0 0.0
    %2357 = vmatprep.subr.mxu0 0.0
    %2358 = vmatpush1.xpose.msra.mxu0 0.0
    %2359 = vmatprep.subr.mxu0 0.0
    %2360 = vmatpush1.xpose.msra.mxu0 0.0
    %2361 = vmatprep.subr.mxu0 0.0
    %2362 = vmatpush1.xpose.msra.mxu0 0.0
    %2363 = vmatprep.subr.mxu0 0.0
    %2364 = vmatpush1.xpose.msra.mxu0 0.0
    %2365 = vmatprep.subr.mxu0 0.0
    %2366 = vmatpush1.xpose.msra.mxu0 0.0
    %2367 = vmatprep.subr.mxu0 0.0
    %2368 = vmatpush1.xpose.msra.mxu0 0.0
    %2369 = vmatprep.subr.mxu0 0.0
    %2370 = vmatpush1.xpose.msra.mxu0 0.0
    %2371 = vmatprep.subr.mxu0 0.0
    %2372 = vmatpush1.xpose.msra.mxu0 0.0
    %2373 = vmatprep.subr.mxu0 0.0
    %2374 = vmatpush1.xpose.msra.mxu0 0.0
    %2375 = vmatprep.subr.mxu0 0.0
    %2376 = vmatpush1.xpose.msra.mxu0 0.0
    %2377 = vmatprep.subr.mxu0 0.0
    %2378 = vmatpush1.xpose.msra.mxu0 0.0
    %2379 = vmatprep.subr.mxu0 0.0
    %2380 = vmatpush1.xpose.msra.mxu0 %v2347
    %2381 = vmatprep.subr.mxu0 0.0
    %2382 = vmatpush2.xpose.msra.mxu0 0.0
    %2383 = vmatprep.subr.mxu0 0.0
    %2384 = vmatpush2.xpose.msra.mxu0 0.0
    %2385 = vmatprep.subr.mxu0 0.0
    %2386 = vmatpush2.xpose.msra.mxu0 0.0
    %2387 = vmatprep.subr.mxu0 0.0
    %2388 = vmatpush2.xpose.msra.mxu0 0.0
    %2389 = vmatprep.subr.mxu0 0.0
    %2390 = vmatpush2.xpose.msra.mxu0 0.0
    %2391 = vmatprep.subr.mxu0 0.0
    %2392 = vmatpush2.xpose.msra.mxu0 0.0
    %2393 = vmatprep.subr.mxu0 0.0
    %2394 = vmatpush2.xpose.msra.mxu0 0.0
    %2395 = vmatprep.subr.mxu0 0.0
    %2396 = vmatpush2.xpose.msra.mxu0 0.0
    %2397 = vmatprep.subr.mxu0 0.0
    %2398 = vmatpush2.xpose.msra.mxu0 0.0
    %2399 = vmatprep.subr.mxu0 0.0
    %2400 = vmatpush2.xpose.msra.mxu0 0.0
    %2401 = vmatprep.subr.mxu0 0.0
    %2402 = vmatpush2.xpose.msra.mxu0 0.0
    %2403 = vmatprep.subr.mxu0 0.0
    %2404 = vmatpush2.xpose.msra.mxu0 0.0
    %2405 = vmatprep.subr.mxu0 0.0
    %2406 = vmatpush2.xpose.msra.mxu0 0.0
    %2407 = vmatprep.subr.mxu0 0.0
    %2408 = vmatpush2.xpose.msra.mxu0 0.0
    %2409 = vmatprep.subr.mxu0 0.0
    %2410 = vmatpush2.xpose.msra.mxu0 0.0
    %2411 = vmatprep.subr.mxu0 0.0
    %2412 = vmatpush2.xpose.msra.mxu0 0.0
    %2413 = vmatprep.mubr.f32.mxu0 0.0
    %2414 = vmatmul.mubr.f32.gmra.mxu0 %v2345
    %v2415 = vpop.f32.mrf.mxu0
    %v2416 = vadd.f32 0.0, %v2415
    %v2417 = vpop.f32.mrf.mxu0
    %2418 = vdwg.mxu0
    %v2419 = vmul.f32 %v2416, 0.35355338
    %v2420 = vsel %vm168, %v2419, -inf
    %2421 = vmax.xlane.f32.xlu0 %v2420
    %v2422 = vpop.xlane.xlu0 %2421
    %v2423 = vsub.f32 %v2419, %v2422
    %v2424 = vmul.f32 %v2423, 1.442695
    %v2425 = vpow.pop %v2424
    %v2426 = vsel %vm168, %v2425, 0.0
    %2427 = vadd.xlane.f32.xlu0 %v2426
    %v2428 = vpop.xlane.xlu0 %2427
    %v2429 = vrcp.pop %v2428
    %v2430 = vmul.f32 %v2425, %v2429
    %2431 = vrot.lane.b32.xlu0 %v2002, 48
    %v2432 = vpop.permute.xlu0 %2431
    %v2435 = vsel %vm168, %v2430, 0
    %2437 = vmatprep.subr.mxu0 0.0
    %2438 = vmatpush1.msra.mxu0 0.0
    %2439 = vmatprep.subr.mxu0 0.0
    %2440 = vmatpush1.msra.mxu0 0.0
    %2441 = vmatprep.subr.mxu0 0.0
    %2442 = vmatpush1.msra.mxu0 0.0
    %2443 = vmatprep.subr.mxu0 0.0
    %2444 = vmatpush1.msra.mxu0 0.0
    %2445 = vmatprep.subr.mxu0 0.0
    %2446 = vmatpush1.msra.mxu0 0.0
    %2447 = vmatprep.subr.mxu0 0.0
    %2448 = vmatpush1.msra.mxu0 0.0
    %2449 = vmatprep.subr.mxu0 0.0
    %2450 = vmatpush1.msra.mxu0 0.0
    %2451 = vmatprep.subr.mxu0 0.0
    %2452 = vmatpush1.msra.mxu0 0.0
    %2453 = vmatprep.subr.mxu0 0.0
    %2454 = vmatpush1.msra.mxu0 0.0
    %2455 = vmatprep.subr.mxu0 0.0
    %2456 = vmatpush1.msra.mxu0 0.0
    %2457 = vmatprep.subr.mxu0 0.0
    %2458 = vmatpush1.msra.mxu0 0.0
    %2459 = vmatprep.subr.mxu0 0.0
    %2460 = vmatpush1.msra.mxu0 0.0
    %2461 = vmatprep.subr.mxu0 0.0
    %2462 = vmatpush1.msra.mxu0 0.0
    %2463 = vmatprep.subr.mxu0 0.0
    %2464 = vmatpush1.msra.mxu0 0.0
    %2465 = vmatprep.subr.mxu0 0.0
    %2466 = vmatpush1.msra.mxu0 0.0
    %2467 = vmatprep.subr.mxu0 0.0
    %2468 = vmatpush1.msra.mxu0 %v2432
    %2469 = vmatprep.subr.mxu0 0.0
    %2470 = vmatpush2.msra.mxu0 0.0
    %2471 = vmatprep.subr.mxu0 0.0
    %2472 = vmatpush2.msra.mxu0 0.0
    %2473 = vmatprep.subr.mxu0 0.0
    %2474 = vmatpush2.msra.mxu0 0.0
    %2475 = vmatprep.subr.mxu0 0.0
    %2476 = vmatpush2.msra.mxu0 0.0
    %2477 = vmatprep.subr.mxu0 0.0
    %2478 = vmatpush2.msra.mxu0 0.0
    %2479 = vmatprep.subr.mxu0 0.0
    %2480 = vmatpush2.msra.mxu0 0.0
    %2481 = vmatprep.subr.mxu0 0.0
    %2482 = vmatpush2.msra.mxu0 0.0
    %2483 = vmatprep.subr.mxu0 0.0
    %2484 = vmatpush2.msra.mxu0 0.0
    %2485 = vmatprep.subr.mxu0 0.0
    %2486 = vmatpush2.msra.mxu0 0.0
    %2487 = vmatprep.subr.mxu0 0.0
    %2488 = vmatpush2.msra.mxu0 0.0
    %2489 = vmatprep.subr.mxu0 0.0
    %2490 = vmatpush2.msra.mxu0 0.0
    %2491 = vmatprep.subr.mxu0 0.0
    %2492 = vmatpush2.msra.mxu0 0.0
    %2493 = vmatprep.subr.mxu0 0.0
    %2494 = vmatpush2.msra.mxu0 0.0
    %2495 = vmatprep.subr.mxu0 0.0
    %2496 = vmatpush2.msra.mxu0 0.0
    %2497 = vmatprep.subr.mxu0 0.0
    %2498 = vmatpush2.msra.mxu0 0.0
    %2499 = vmatprep.subr.mxu0 0.0
    %2500 = vmatpush2.msra.mxu0 0.0
    %2501 = vmatprep.mubr.f32.mxu0 0.0
    %2502 = vmatmul.mubr.f32.gmra.mxu0 %v2435
    %v2503 = vpop.f32.mrf.mxu0
    %v2504 = vadd.f32 0.0, %v2503
    %v2505 = vpop.f32.mrf.mxu0
    %2506 = vdwg.mxu0
    %2507 = vrot.lane.b32.xlu0 %v2002, 104
    %v2508 = vpop.permute.xlu0 %2507
    %2509 = vrot.lane.b32.xlu0 %v2002, 72
    %v2510 = vpop.permute.xlu0 %2509
    %v2511 = vsel %vm168, %v2508, 0
    %v2513 = vsel %vm168, %v2510, 0
    %2515 = vmatprep.subr.mxu0 0.0
    %2516 = vmatpush1.xpose.msra.mxu0 0.0
    %2517 = vmatprep.subr.mxu0 0.0
    %2518 = vmatpush1.xpose.msra.mxu0 0.0
    %2519 = vmatprep.subr.mxu0 0.0
    %2520 = vmatpush1.xpose.msra.mxu0 0.0
    %2521 = vmatprep.subr.mxu0 0.0
    %2522 = vmatpush1.xpose.msra.mxu0 0.0
    %2523 = vmatprep.subr.mxu0 0.0
    %2524 = vmatpush1.xpose.msra.mxu0 0.0
    %2525 = vmatprep.subr.mxu0 0.0
    %2526 = vmatpush1.xpose.msra.mxu0 0.0
    %2527 = vmatprep.subr.mxu0 0.0
    %2528 = vmatpush1.xpose.msra.mxu0 0.0
    %2529 = vmatprep.subr.mxu0 0.0
    %2530 = vmatpush1.xpose.msra.mxu0 0.0
    %2531 = vmatprep.subr.mxu0 0.0
    %2532 = vmatpush1.xpose.msra.mxu0 0.0
    %2533 = vmatprep.subr.mxu0 0.0
    %2534 = vmatpush1.xpose.msra.mxu0 0.0
    %2535 = vmatprep.subr.mxu0 0.0
    %2536 = vmatpush1.xpose.msra.mxu0 0.0
    %2537 = vmatprep.subr.mxu0 0.0
    %2538 = vmatpush1.xpose.msra.mxu0 0.0
    %2539 = vmatprep.subr.mxu0 0.0
    %2540 = vmatpush1.xpose.msra.mxu0 0.0
    %2541 = vmatprep.subr.mxu0 0.0
    %2542 = vmatpush1.xpose.msra.mxu0 0.0
    %2543 = vmatprep.subr.mxu0 0.0
    %2544 = vmatpush1.xpose.msra.mxu0 0.0
    %2545 = vmatprep.subr.mxu0 0.0
    %2546 = vmatpush1.xpose.msra.mxu0 %v2513
    %2547 = vmatprep.subr.mxu0 0.0
    %2548 = vmatpush2.xpose.msra.mxu0 0.0
    %2549 = vmatprep.subr.mxu0 0.0
    %2550 = vmatpush2.xpose.msra.mxu0 0.0
    %2551 = vmatprep.subr.mxu0 0.0
    %2552 = vmatpush2.xpose.msra.mxu0 0.0
    %2553 = vmatprep.subr.mxu0 0.0
    %2554 = vmatpush2.xpose.msra.mxu0 0.0
    %2555 = vmatprep.subr.mxu0 0.0
    %2556 = vmatpush2.xpose.msra.mxu0 0.0
    %2557 = vmatprep.subr.mxu0 0.0
    %2558 = vmatpush2.xpose.msra.mxu0 0.0
    %2559 = vmatprep.subr.mxu0 0.0
    %2560 = vmatpush2.xpose.msra.mxu0 0.0
    %2561 = vmatprep.subr.mxu0 0.0
    %2562 = vmatpush2.xpose.msra.mxu0 0.0
    %2563 = vmatprep.subr.mxu0 0.0
    %2564 = vmatpush2.xpose.msra.mxu0 0.0
    %2565 = vmatprep.subr.mxu0 0.0
    %2566 = vmatpush2.xpose.msra.mxu0 0.0
    %2567 = vmatprep.subr.mxu0 0.0
    %2568 = vmatpush2.xpose.msra.mxu0 0.0
    %2569 = vmatprep.subr.mxu0 0.0
    %2570 = vmatpush2.xpose.msra.mxu0 0.0
    %2571 = vmatprep.subr.mxu0 0.0
    %2572 = vmatpush2.xpose.msra.mxu0 0.0
    %2573 = vmatprep.subr.mxu0 0.0
    %2574 = vmatpush2.xpose.msra.mxu0 0.0
    %2575 = vmatprep.subr.mxu0 0.0
    %2576 = vmatpush2.xpose.msra.mxu0 0.0
    %2577 = vmatprep.subr.mxu0 0.0
    %2578 = vmatpush2.xpose.msra.mxu0 0.0
    %2579 = vmatprep.mubr.f32.mxu0 0.0
    %2580 = vmatmul.mubr.f32.gmra.mxu0 %v2511
    %v2581 = vpop.f32.mrf.mxu0
    %v2582 = vadd.f32 0.0, %v2581
    %v2583 = vpop.f32.mrf.mxu0
    %2584 = vdwg.mxu0
    %v2585 = vmul.f32 %v2582, 0.35355338
    %v2586 = vsel %vm168, %v2585, -inf
    %2587 = vmax.xlane.f32.xlu0 %v2586
    %v2588 = vpop.xlane.xlu0 %2587
    %v2589 = vsub.f32 %v2585, %v2588
    %v2590 = vmul.f32 %v2589, 1.442695
    %v2591 = vpow.pop %v2590
    %v2592 = vsel %vm168, %v2591, 0.0
    %2593 = vadd.xlane.f32.xlu0 %v2592
    %v2594 = vpop.xlane.xlu0 %2593
    %v2595 = vrcp.pop %v2594
    %v2596 = vmul.f32 %v2591, %v2595
    %2597 = vrot.lane.b32.xlu0 %v2002, 40
    %v2598 = vpop.permute.xlu0 %2597
    %v2601 = vsel %vm168, %v2596, 0
    %2603 = vmatprep.subr.mxu0 0.0
    %2604 = vmatpush1.msra.mxu0 0.0
    %2605 = vmatprep.subr.mxu0 0.0
    %2606 = vmatpush1.msra.mxu0 0.0
    %2607 = vmatprep.subr.mxu0 0.0
    %2608 = vmatpush1.msra.mxu0 0.0
    %2609 = vmatprep.subr.mxu0 0.0
    %2610 = vmatpush1.msra.mxu0 0.0
    %2611 = vmatprep.subr.mxu0 0.0
    %2612 = vmatpush1.msra.mxu0 0.0
    %2613 = vmatprep.subr.mxu0 0.0
    %2614 = vmatpush1.msra.mxu0 0.0
    %2615 = vmatprep.subr.mxu0 0.0
    %2616 = vmatpush1.msra.mxu0 0.0
    %2617 = vmatprep.subr.mxu0 0.0
    %2618 = vmatpush1.msra.mxu0 0.0
    %2619 = vmatprep.subr.mxu0 0.0
    %2620 = vmatpush1.msra.mxu0 0.0
    %2621 = vmatprep.subr.mxu0 0.0
    %2622 = vmatpush1.msra.mxu0 0.0
    %2623 = vmatprep.subr.mxu0 0.0
    %2624 = vmatpush1.msra.mxu0 0.0
    %2625 = vmatprep.subr.mxu0 0.0
    %2626 = vmatpush1.msra.mxu0 0.0
    %2627 = vmatprep.subr.mxu0 0.0
    %2628 = vmatpush1.msra.mxu0 0.0
    %2629 = vmatprep.subr.mxu0 0.0
    %2630 = vmatpush1.msra.mxu0 0.0
    %2631 = vmatprep.subr.mxu0 0.0
    %2632 = vmatpush1.msra.mxu0 0.0
    %2633 = vmatprep.subr.mxu0 0.0
    %2634 = vmatpush1.msra.mxu0 %v2598
    %2635 = vmatprep.subr.mxu0 0.0
    %2636 = vmatpush2.msra.mxu0 0.0
    %2637 = vmatprep.subr.mxu0 0.0
    %2638 = vmatpush2.msra.mxu0 0.0
    %2639 = vmatprep.subr.mxu0 0.0
    %2640 = vmatpush2.msra.mxu0 0.0
    %2641 = vmatprep.subr.mxu0 0.0
    %2642 = vmatpush2.msra.mxu0 0.0
    %2643 = vmatprep.subr.mxu0 0.0
    %2644 = vmatpush2.msra.mxu0 0.0
    %2645 = vmatprep.subr.mxu0 0.0
    %2646 = vmatpush2.msra.mxu0 0.0
    %2647 = vmatprep.subr.mxu0 0.0
    %2648 = vmatpush2.msra.mxu0 0.0
    %2649 = vmatprep.subr.mxu0 0.0
    %2650 = vmatpush2.msra.mxu0 0.0
    %2651 = vmatprep.subr.mxu0 0.0
    %2652 = vmatpush2.msra.mxu0 0.0
    %2653 = vmatprep.subr.mxu0 0.0
    %2654 = vmatpush2.msra.mxu0 0.0
    %2655 = vmatprep.subr.mxu0 0.0
    %2656 = vmatpush2.msra.mxu0 0.0
    %2657 = vmatprep.subr.mxu0 0.0
    %2658 = vmatpush2.msra.mxu0 0.0
    %2659 = vmatprep.subr.mxu0 0.0
    %2660 = vmatpush2.msra.mxu0 0.0
    %2661 = vmatprep.subr.mxu0 0.0
    %2662 = vmatpush2.msra.mxu0 0.0
    %2663 = vmatprep.subr.mxu0 0.0
    %2664 = vmatpush2.msra.mxu0 0.0
    %2665 = vmatprep.subr.mxu0 0.0
    %2666 = vmatpush2.msra.mxu0 0.0
    %2667 = vmatprep.mubr.f32.mxu0 0.0
    %2668 = vmatmul.mubr.f32.gmra.mxu0 %v2601
    %v2669 = vpop.f32.mrf.mxu0
    %v2670 = vadd.f32 0.0, %v2669
    %v2671 = vpop.f32.mrf.mxu0
    %2672 = vdwg.mxu0
    %2674 = vrot.lane.b32.xlu0 %v2338, 8
    %v2675 = vpop.permute.xlu0 %2674
    %2678 = vrot.lane.b32.xlu0 %v2504, 16
    %v2679 = vpop.permute.xlu0 %2678
    %2682 = vrot.lane.b32.xlu0 %v2670, 24
    %v2683 = vpop.permute.xlu0 %2682
    %v2685 = vsel %vm168, %v2172, %v2675
    %v2686 = vsel %vm842, %v2685, %v2679
    %v2687 = vsel %vm844, %v2686, %v2683
    %2689 = vrot.lane.b32.xlu0 %v2007, 96
    %v2690 = vpop.permute.xlu0 %2689
    %v2691 = vsel %vm168, %v2007, 0
    %v2693 = vsel %vm168, %v2690, 0
    %2695 = vmatprep.subr.mxu0 0.0
    %2696 = vmatpush1.xpose.msra.mxu0 0.0
    %2697 = vmatprep.subr.mxu0 0.0
    %2698 = vmatpush1.xpose.msra.mxu0 0.0
    %2699 = vmatprep.subr.mxu0 0.0
    %2700 = vmatpush1.xpose.msra.mxu0 0.0
    %2701 = vmatprep.subr.mxu0 0.0
    %2702 = vmatpush1.xpose.msra.mxu0 0.0
    %2703 = vmatprep.subr.mxu0 0.0
    %2704 = vmatpush1.xpose.msra.mxu0 0.0
    %2705 = vmatprep.subr.mxu0 0.0
    %2706 = vmatpush1.xpose.msra.mxu0 0.0
    %2707 = vmatprep.subr.mxu0 0.0
    %2708 = vmatpush1.xpose.msra.mxu0 0.0
    %2709 = vmatprep.subr.mxu0 0.0
    %2710 = vmatpush1.xpose.msra.mxu0 0.0
    %2711 = vmatprep.subr.mxu0 0.0
    %2712 = vmatpush1.xpose.msra.mxu0 0.0
    %2713 = vmatprep.subr.mxu0 0.0
    %2714 = vmatpush1.xpose.msra.mxu0 0.0
    %2715 = vmatprep.subr.mxu0 0.0
    %2716 = vmatpush1.xpose.msra.mxu0 0.0
    %2717 = vmatprep.subr.mxu0 0.0
    %2718 = vmatpush1.xpose.msra.mxu0 0.0
    %2719 = vmatprep.subr.mxu0 0.0
    %2720 = vmatpush1.xpose.msra.mxu0 0.0
    %2721 = vmatprep.subr.mxu0 0.0
    %2722 = vmatpush1.xpose.msra.mxu0 0.0
    %2723 = vmatprep.subr.mxu0 0.0
    %2724 = vmatpush1.xpose.msra.mxu0 0.0
    %2725 = vmatprep.subr.mxu0 0.0
    %2726 = vmatpush1.xpose.msra.mxu0 %v2693
    %2727 = vmatprep.subr.mxu0 0.0
    %2728 = vmatpush2.xpose.msra.mxu0 0.0
    %2729 = vmatprep.subr.mxu0 0.0
    %2730 = vmatpush2.xpose.msra.mxu0 0.0
    %2731 = vmatprep.subr.mxu0 0.0
    %2732 = vmatpush2.xpose.msra.mxu0 0.0
    %2733 = vmatprep.subr.mxu0 0.0
    %2734 = vmatpush2.xpose.msra.mxu0 0.0
    %2735 = vmatprep.subr.mxu0 0.0
    %2736 = vmatpush2.xpose.msra.mxu0 0.0
    %2737 = vmatprep.subr.mxu0 0.0
    %2738 = vmatpush2.xpose.msra.mxu0 0.0
    %2739 = vmatprep.subr.mxu0 0.0
    %2740 = vmatpush2.xpose.msra.mxu0 0.0
    %2741 = vmatprep.subr.mxu0 0.0
    %2742 = vmatpush2.xpose.msra.mxu0 0.0
    %2743 = vmatprep.subr.mxu0 0.0
    %2744 = vmatpush2.xpose.msra.mxu0 0.0
    %2745 = vmatprep.subr.mxu0 0.0
    %2746 = vmatpush2.xpose.msra.mxu0 0.0
    %2747 = vmatprep.subr.mxu0 0.0
    %2748 = vmatpush2.xpose.msra.mxu0 0.0
    %2749 = vmatprep.subr.mxu0 0.0
    %2750 = vmatpush2.xpose.msra.mxu0 0.0
    %2751 = vmatprep.subr.mxu0 0.0
    %2752 = vmatpush2.xpose.msra.mxu0 0.0
    %2753 = vmatprep.subr.mxu0 0.0
    %2754 = vmatpush2.xpose.msra.mxu0 0.0
    %2755 = vmatprep.subr.mxu0 0.0
    %2756 = vmatpush2.xpose.msra.mxu0 0.0
    %2757 = vmatprep.subr.mxu0 0.0
    %2758 = vmatpush2.xpose.msra.mxu0 0.0
    %2759 = vmatprep.mubr.f32.mxu0 0.0
    %2760 = vmatmul.mubr.f32.gmra.mxu0 %v2691
    %v2761 = vpop.f32.mrf.mxu0
    %v2762 = vadd.f32 0.0, %v2761
    %v2763 = vpop.f32.mrf.mxu0
    %2764 = vdwg.mxu0
    %v2765 = vmul.f32 %v2762, 0.35355338
    %v2766 = vsel %vm168, %v2765, -inf
    %2767 = vmax.xlane.f32.xlu0 %v2766
    %v2768 = vpop.xlane.xlu0 %2767
    %v2769 = vsub.f32 %v2765, %v2768
    %v2770 = vmul.f32 %v2769, 1.442695
    %v2771 = vpow.pop %v2770
    %v2772 = vsel %vm168, %v2771, 0.0
    %2773 = vadd.xlane.f32.xlu0 %v2772
    %v2774 = vpop.xlane.xlu0 %2773
    %v2775 = vrcp.pop %v2774
    %v2776 = vmul.f32 %v2771, %v2775
    %2777 = vrot.lane.b32.xlu0 %v2007, 64
    %v2778 = vpop.permute.xlu0 %2777
    %v2781 = vsel %vm168, %v2776, 0
    %2783 = vmatprep.subr.mxu0 0.0
    %2784 = vmatpush1.msra.mxu0 0.0
    %2785 = vmatprep.subr.mxu0 0.0
    %2786 = vmatpush1.msra.mxu0 0.0
    %2787 = vmatprep.subr.mxu0 0.0
    %2788 = vmatpush1.msra.mxu0 0.0
    %2789 = vmatprep.subr.mxu0 0.0
    %2790 = vmatpush1.msra.mxu0 0.0
    %2791 = vmatprep.subr.mxu0 0.0
    %2792 = vmatpush1.msra.mxu0 0.0
    %2793 = vmatprep.subr.mxu0 0.0
    %2794 = vmatpush1.msra.mxu0 0.0
    %2795 = vmatprep.subr.mxu0 0.0
    %2796 = vmatpush1.msra.mxu0 0.0
    %2797 = vmatprep.subr.mxu0 0.0
    %2798 = vmatpush1.msra.mxu0 0.0
    %2799 = vmatprep.subr.mxu0 0.0
    %2800 = vmatpush1.msra.mxu0 0.0
    %2801 = vmatprep.subr.mxu0 0.0
    %2802 = vmatpush1.msra.mxu0 0.0
    %2803 = vmatprep.subr.mxu0 0.0
    %2804 = vmatpush1.msra.mxu0 0.0
    %2805 = vmatprep.subr.mxu0 0.0
    %2806 = vmatpush1.msra.mxu0 0.0
    %2807 = vmatprep.subr.mxu0 0.0
    %2808 = vmatpush1.msra.mxu0 0.0
    %2809 = vmatprep.subr.mxu0 0.0
    %2810 = vmatpush1.msra.mxu0 0.0
    %2811 = vmatprep.subr.mxu0 0.0
    %2812 = vmatpush1.msra.mxu0 0.0
    %2813 = vmatprep.subr.mxu0 0.0
    %2814 = vmatpush1.msra.mxu0 %v2778
    %2815 = vmatprep.subr.mxu0 0.0
    %2816 = vmatpush2.msra.mxu0 0.0
    %2817 = vmatprep.subr.mxu0 0.0
    %2818 = vmatpush2.msra.mxu0 0.0
    %2819 = vmatprep.subr.mxu0 0.0
    %2820 = vmatpush2.msra.mxu0 0.0
    %2821 = vmatprep.subr.mxu0 0.0
    %2822 = vmatpush2.msra.mxu0 0.0
    %2823 = vmatprep.subr.mxu0 0.0
    %2824 = vmatpush2.msra.mxu0 0.0
    %2825 = vmatprep.subr.mxu0 0.0
    %2826 = vmatpush2.msra.mxu0 0.0
    %2827 = vmatprep.subr.mxu0 0.0
    %2828 = vmatpush2.msra.mxu0 0.0
    %2829 = vmatprep.subr.mxu0 0.0
    %2830 = vmatpush2.msra.mxu0 0.0
    %2831 = vmatprep.subr.mxu0 0.0
    %2832 = vmatpush2.msra.mxu0 0.0
    %2833 = vmatprep.subr.mxu0 0.0
    %2834 = vmatpush2.msra.mxu0 0.0
    %2835 = vmatprep.subr.mxu0 0.0
    %2836 = vmatpush2.msra.mxu0 0.0
    %2837 = vmatprep.subr.mxu0 0.0
    %2838 = vmatpush2.msra.mxu0 0.0
    %2839 = vmatprep.subr.mxu0 0.0
    %2840 = vmatpush2.msra.mxu0 0.0
    %2841 = vmatprep.subr.mxu0 0.0
    %2842 = vmatpush2.msra.mxu0 0.0
    %2843 = vmatprep.subr.mxu0 0.0
    %2844 = vmatpush2.msra.mxu0 0.0
    %2845 = vmatprep.subr.mxu0 0.0
    %2846 = vmatpush2.msra.mxu0 0.0
    %2847 = vmatprep.mubr.f32.mxu0 0.0
    %2848 = vmatmul.mubr.f32.gmra.mxu0 %v2781
    %v2849 = vpop.f32.mrf.mxu0
    %v2850 = vadd.f32 0.0, %v2849
    %v2851 = vpop.f32.mrf.mxu0
    %2852 = vdwg.mxu0
    %2853 = vrot.lane.b32.xlu0 %v2007, 120
    %v2854 = vpop.permute.xlu0 %2853
    %2855 = vrot.lane.b32.xlu0 %v2007, 88
    %v2856 = vpop.permute.xlu0 %2855
    %v2857 = vsel %vm168, %v2854, 0
    %v2859 = vsel %vm168, %v2856, 0
    %2861 = vmatprep.subr.mxu0 0.0
    %2862 = vmatpush1.xpose.msra.mxu0 0.0
    %2863 = vmatprep.subr.mxu0 0.0
    %2864 = vmatpush1.xpose.msra.mxu0 0.0
    %2865 = vmatprep.subr.mxu0 0.0
    %2866 = vmatpush1.xpose.msra.mxu0 0.0
    %2867 = vmatprep.subr.mxu0 0.0
    %2868 = vmatpush1.xpose.msra.mxu0 0.0
    %2869 = vmatprep.subr.mxu0 0.0
    %2870 = vmatpush1.xpose.msra.mxu0 0.0
    %2871 = vmatprep.subr.mxu0 0.0
    %2872 = vmatpush1.xpose.msra.mxu0 0.0
    %2873 = vmatprep.subr.mxu0 0.0
    %2874 = vmatpush1.xpose.msra.mxu0 0.0
    %2875 = vmatprep.subr.mxu0 0.0
    %2876 = vmatpush1.xpose.msra.mxu0 0.0
    %2877 = vmatprep.subr.mxu0 0.0
    %2878 = vmatpush1.xpose.msra.mxu0 0.0
    %2879 = vmatprep.subr.mxu0 0.0
    %2880 = vmatpush1.xpose.msra.mxu0 0.0
    %2881 = vmatprep.subr.mxu0 0.0
    %2882 = vmatpush1.xpose.msra.mxu0 0.0
    %2883 = vmatprep.subr.mxu0 0.0
    %2884 = vmatpush1.xpose.msra.mxu0 0.0
    %2885 = vmatprep.subr.mxu0 0.0
    %2886 = vmatpush1.xpose.msra.mxu0 0.0
    %2887 = vmatprep.subr.mxu0 0.0
    %2888 = vmatpush1.xpose.msra.mxu0 0.0
    %2889 = vmatprep.subr.mxu0 0.0
    %2890 = vmatpush1.xpose.msra.mxu0 0.0
    %2891 = vmatprep.subr.mxu0 0.0
    %2892 = vmatpush1.xpose.msra.mxu0 %v2859
    %2893 = vmatprep.subr.mxu0 0.0
    %2894 = vmatpush2.xpose.msra.mxu0 0.0
    %2895 = vmatprep.subr.mxu0 0.0
    %2896 = vmatpush2.xpose.msra.mxu0 0.0
    %2897 = vmatprep.subr.mxu0 0.0
    %2898 = vmatpush2.xpose.msra.mxu0 0.0
    %2899 = vmatprep.subr.mxu0 0.0
    %2900 = vmatpush2.xpose.msra.mxu0 0.0
    %2901 = vmatprep.subr.mxu0 0.0
    %2902 = vmatpush2.xpose.msra.mxu0 0.0
    %2903 = vmatprep.subr.mxu0 0.0
    %2904 = vmatpush2.xpose.msra.mxu0 0.0
    %2905 = vmatprep.subr.mxu0 0.0
    %2906 = vmatpush2.xpose.msra.mxu0 0.0
    %2907 = vmatprep.subr.mxu0 0.0
    %2908 = vmatpush2.xpose.msra.mxu0 0.0
    %2909 = vmatprep.subr.mxu0 0.0
    %2910 = vmatpush2.xpose.msra.mxu0 0.0
    %2911 = vmatprep.subr.mxu0 0.0
    %2912 = vmatpush2.xpose.msra.mxu0 0.0
    %2913 = vmatprep.subr.mxu0 0.0
    %2914 = vmatpush2.xpose.msra.mxu0 0.0
    %2915 = vmatprep.subr.mxu0 0.0
    %2916 = vmatpush2.xpose.msra.mxu0 0.0
    %2917 = vmatprep.subr.mxu0 0.0
    %2918 = vmatpush2.xpose.msra.mxu0 0.0
    %2919 = vmatprep.subr.mxu0 0.0
    %2920 = vmatpush2.xpose.msra.mxu0 0.0
    %2921 = vmatprep.subr.mxu0 0.0
    %2922 = vmatpush2.xpose.msra.mxu0 0.0
    %2923 = vmatprep.subr.mxu0 0.0
    %2924 = vmatpush2.xpose.msra.mxu0 0.0
    %2925 = vmatprep.mubr.f32.mxu0 0.0
    %2926 = vmatmul.mubr.f32.gmra.mxu0 %v2857
    %v2927 = vpop.f32.mrf.mxu0
    %v2928 = vadd.f32 0.0, %v2927
    %v2929 = vpop.f32.mrf.mxu0
    %2930 = vdwg.mxu0
    %v2931 = vmul.f32 %v2928, 0.35355338
    %v2932 = vsel %vm168, %v2931, -inf
    %2933 = vmax.xlane.f32.xlu0 %v2932
    %v2934 = vpop.xlane.xlu0 %2933
    %v2935 = vsub.f32 %v2931, %v2934
    %v2936 = vmul.f32 %v2935, 1.442695
    %v2937 = vpow.pop %v2936
    %v2938 = vsel %vm168, %v2937, 0.0
    %2939 = vadd.xlane.f32.xlu0 %v2938
    %v2940 = vpop.xlane.xlu0 %2939
    %v2941 = vrcp.pop %v2940
    %v2942 = vmul.f32 %v2937, %v2941
    %2943 = vrot.lane.b32.xlu0 %v2007, 56
    %v2944 = vpop.permute.xlu0 %2943
    %v2947 = vsel %vm168, %v2942, 0
    %2949 = vmatprep.subr.mxu0 0.0
    %2950 = vmatpush1.msra.mxu0 0.0
    %2951 = vmatprep.subr.mxu0 0.0
    %2952 = vmatpush1.msra.mxu0 0.0
    %2953 = vmatprep.subr.mxu0 0.0
    %2954 = vmatpush1.msra.mxu0 0.0
    %2955 = vmatprep.subr.mxu0 0.0
    %2956 = vmatpush1.msra.mxu0 0.0
    %2957 = vmatprep.subr.mxu0 0.0
    %2958 = vmatpush1.msra.mxu0 0.0
    %2959 = vmatprep.subr.mxu0 0.0
    %2960 = vmatpush1.msra.mxu0 0.0
    %2961 = vmatprep.subr.mxu0 0.0
    %2962 = vmatpush1.msra.mxu0 0.0
    %2963 = vmatprep.subr.mxu0 0.0
    %2964 = vmatpush1.msra.mxu0 0.0
    %2965 = vmatprep.subr.mxu0 0.0
    %2966 = vmatpush1.msra.mxu0 0.0
    %2967 = vmatprep.subr.mxu0 0.0
    %2968 = vmatpush1.msra.mxu0 0.0
    %2969 = vmatprep.subr.mxu0 0.0
    %2970 = vmatpush1.msra.mxu0 0.0
    %2971 = vmatprep.subr.mxu0 0.0
    %2972 = vmatpush1.msra.mxu0 0.0
    %2973 = vmatprep.subr.mxu0 0.0
    %2974 = vmatpush1.msra.mxu0 0.0
    %2975 = vmatprep.subr.mxu0 0.0
    %2976 = vmatpush1.msra.mxu0 0.0
    %2977 = vmatprep.subr.mxu0 0.0
    %2978 = vmatpush1.msra.mxu0 0.0
    %2979 = vmatprep.subr.mxu0 0.0
    %2980 = vmatpush1.msra.mxu0 %v2944
    %2981 = vmatprep.subr.mxu0 0.0
    %2982 = vmatpush2.msra.mxu0 0.0
    %2983 = vmatprep.subr.mxu0 0.0
    %2984 = vmatpush2.msra.mxu0 0.0
    %2985 = vmatprep.subr.mxu0 0.0
    %2986 = vmatpush2.msra.mxu0 0.0
    %2987 = vmatprep.subr.mxu0 0.0
    %2988 = vmatpush2.msra.mxu0 0.0
    %2989 = vmatprep.subr.mxu0 0.0
    %2990 = vmatpush2.msra.mxu0 0.0
    %2991 = vmatprep.subr.mxu0 0.0
    %2992 = vmatpush2.msra.mxu0 0.0
    %2993 = vmatprep.subr.mxu0 0.0
    %2994 = vmatpush2.msra.mxu0 0.0
    %2995 = vmatprep.subr.mxu0 0.0
    %2996 = vmatpush2.msra.mxu0 0.0
    %2997 = vmatprep.subr.mxu0 0.0
    %2998 = vmatpush2.msra.mxu0 0.0
    %2999 = vmatprep.subr.mxu0 0.0
    %3000 = vmatpush2.msra.mxu0 0.0
    %3001 = vmatprep.subr.mxu0 0.0
    %3002 = vmatpush2.msra.mxu0 0.0
    %3003 = vmatprep.subr.mxu0 0.0
    %3004 = vmatpush2.msra.mxu0 0.0
    %3005 = vmatprep.subr.mxu0 0.0
    %3006 = vmatpush2.msra.mxu0 0.0
    %3007 = vmatprep.subr.mxu0 0.0
    %3008 = vmatpush2.msra.mxu0 0.0
    %3009 = vmatprep.subr.mxu0 0.0
    %3010 = vmatpush2.msra.mxu0 0.0
    %3011 = vmatprep.subr.mxu0 0.0
    %3012 = vmatpush2.msra.mxu0 0.0
    %3013 = vmatprep.mubr.f32.mxu0 0.0
    %3014 = vmatmul.mubr.f32.gmra.mxu0 %v2947
    %v3015 = vpop.f32.mrf.mxu0
    %v3016 = vadd.f32 0.0, %v3015
    %v3017 = vpop.f32.mrf.mxu0
    %3018 = vdwg.mxu0
    %3019 = vrot.lane.b32.xlu0 %v2007, 112
    %v3020 = vpop.permute.xlu0 %3019
    %3021 = vrot.lane.b32.xlu0 %v2007, 80
    %v3022 = vpop.permute.xlu0 %3021
    %v3023 = vsel %vm168, %v3020, 0
    %v3025 = vsel %vm168, %v3022, 0
    %3027 = vmatprep.subr.mxu0 0.0
    %3028 = vmatpush1.xpose.msra.mxu0 0.0
    %3029 = vmatprep.subr.mxu0 0.0
    %3030 = vmatpush1.xpose.msra.mxu0 0.0
    %3031 = vmatprep.subr.mxu0 0.0
    %3032 = vmatpush1.xpose.msra.mxu0 0.0
    %3033 = vmatprep.subr.mxu0 0.0
    %3034 = vmatpush1.xpose.msra.mxu0 0.0
    %3035 = vmatprep.subr.mxu0 0.0
    %3036 = vmatpush1.xpose.msra.mxu0 0.0
    %3037 = vmatprep.subr.mxu0 0.0
    %3038 = vmatpush1.xpose.msra.mxu0 0.0
    %3039 = vmatprep.subr.mxu0 0.0
    %3040 = vmatpush1.xpose.msra.mxu0 0.0
    %3041 = vmatprep.subr.mxu0 0.0
    %3042 = vmatpush1.xpose.msra.mxu0 0.0
    %3043 = vmatprep.subr.mxu0 0.0
    %3044 = vmatpush1.xpose.msra.mxu0 0.0
    %3045 = vmatprep.subr.mxu0 0.0
    %3046 = vmatpush1.xpose.msra.mxu0 0.0
    %3047 = vmatprep.subr.mxu0 0.0
    %3048 = vmatpush1.xpose.msra.mxu0 0.0
    %3049 = vmatprep.subr.mxu0 0.0
    %3050 = vmatpush1.xpose.msra.mxu0 0.0
    %3051 = vmatprep.subr.mxu0 0.0
    %3052 = vmatpush1.xpose.msra.mxu0 0.0
    %3053 = vmatprep.subr.mxu0 0.0
    %3054 = vmatpush1.xpose.msra.mxu0 0.0
    %3055 = vmatprep.subr.mxu0 0.0
    %3056 = vmatpush1.xpose.msra.mxu0 0.0
    %3057 = vmatprep.subr.mxu0 0.0
    %3058 = vmatpush1.xpose.msra.mxu0 %v3025
    %3059 = vmatprep.subr.mxu0 0.0
    %3060 = vmatpush2.xpose.msra.mxu0 0.0
    %3061 = vmatprep.subr.mxu0 0.0
    %3062 = vmatpush2.xpose.msra.mxu0 0.0
    %3063 = vmatprep.subr.mxu0 0.0
    %3064 = vmatpush2.xpose.msra.mxu0 0.0
    %3065 = vmatprep.subr.mxu0 0.0
    %3066 = vmatpush2.xpose.msra.mxu0 0.0
    %3067 = vmatprep.subr.mxu0 0.0
    %3068 = vmatpush2.xpose.msra.mxu0 0.0
    %3069 = vmatprep.subr.mxu0 0.0
    %3070 = vmatpush2.xpose.msra.mxu0 0.0
    %3071 = vmatprep.subr.mxu0 0.0
    %3072 = vmatpush2.xpose.msra.mxu0 0.0
    %3073 = vmatprep.subr.mxu0 0.0
    %3074 = vmatpush2.xpose.msra.mxu0 0.0
    %3075 = vmatprep.subr.mxu0 0.0
    %3076 = vmatpush2.xpose.msra.mxu0 0.0
    %3077 = vmatprep.subr.mxu0 0.0
    %3078 = vmatpush2.xpose.msra.mxu0 0.0
    %3079 = vmatprep.subr.mxu0 0.0
    %3080 = vmatpush2.xpose.msra.mxu0 0.0
    %3081 = vmatprep.subr.mxu0 0.0
    %3082 = vmatpush2.xpose.msra.mxu0 0.0
    %3083 = vmatprep.subr.mxu0 0.0
    %3084 = vmatpush2.xpose.msra.mxu0 0.0
    %3085 = vmatprep.subr.mxu0 0.0
    %3086 = vmatpush2.xpose.msra.mxu0 0.0
    %3087 = vmatprep.subr.mxu0 0.0
    %3088 = vmatpush2.xpose.msra.mxu0 0.0
    %3089 = vmatprep.subr.mxu0 0.0
    %3090 = vmatpush2.xpose.msra.mxu0 0.0
    %3091 = vmatprep.mubr.f32.mxu0 0.0
    %3092 = vmatmul.mubr.f32.gmra.mxu0 %v3023
    %v3093 = vpop.f32.mrf.mxu0
    %v3094 = vadd.f32 0.0, %v3093
    %v3095 = vpop.f32.mrf.mxu0
    %3096 = vdwg.mxu0
    %v3097 = vmul.f32 %v3094, 0.35355338
    %v3098 = vsel %vm168, %v3097, -inf
    %3099 = vmax.xlane.f32.xlu0 %v3098
    %v3100 = vpop.xlane.xlu0 %3099
    %v3101 = vsub.f32 %v3097, %v3100
    %v3102 = vmul.f32 %v3101, 1.442695
    %v3103 = vpow.pop %v3102
    %v3104 = vsel %vm168, %v3103, 0.0
    %3105 = vadd.xlane.f32.xlu0 %v3104
    %v3106 = vpop.xlane.xlu0 %3105
    %v3107 = vrcp.pop %v3106
    %v3108 = vmul.f32 %v3103, %v3107
    %3109 = vrot.lane.b32.xlu0 %v2007, 48
    %v3110 = vpop.permute.xlu0 %3109
    %v3113 = vsel %vm168, %v3108, 0
    %3115 = vmatprep.subr.mxu0 0.0
    %3116 = vmatpush1.msra.mxu0 0.0
    %3117 = vmatprep.subr.mxu0 0.0
    %3118 = vmatpush1.msra.mxu0 0.0
    %3119 = vmatprep.subr.mxu0 0.0
    %3120 = vmatpush1.msra.mxu0 0.0
    %3121 = vmatprep.subr.mxu0 0.0
    %3122 = vmatpush1.msra.mxu0 0.0
    %3123 = vmatprep.subr.mxu0 0.0
    %3124 = vmatpush1.msra.mxu0 0.0
    %3125 = vmatprep.subr.mxu0 0.0
    %3126 = vmatpush1.msra.mxu0 0.0
    %3127 = vmatprep.subr.mxu0 0.0
    %3128 = vmatpush1.msra.mxu0 0.0
    %3129 = vmatprep.subr.mxu0 0.0
    %3130 = vmatpush1.msra.mxu0 0.0
    %3131 = vmatprep.subr.mxu0 0.0
    %3132 = vmatpush1.msra.mxu0 0.0
    %3133 = vmatprep.subr.mxu0 0.0
    %3134 = vmatpush1.msra.mxu0 0.0
    %3135 = vmatprep.subr.mxu0 0.0
    %3136 = vmatpush1.msra.mxu0 0.0
    %3137 = vmatprep.subr.mxu0 0.0
    %3138 = vmatpush1.msra.mxu0 0.0
    %3139 = vmatprep.subr.mxu0 0.0
    %3140 = vmatpush1.msra.mxu0 0.0
    %3141 = vmatprep.subr.mxu0 0.0
    %3142 = vmatpush1.msra.mxu0 0.0
    %3143 = vmatprep.subr.mxu0 0.0
    %3144 = vmatpush1.msra.mxu0 0.0
    %3145 = vmatprep.subr.mxu0 0.0
    %3146 = vmatpush1.msra.mxu0 %v3110
    %3147 = vmatprep.subr.mxu0 0.0
    %3148 = vmatpush2.msra.mxu0 0.0
    %3149 = vmatprep.subr.mxu0 0.0
    %3150 = vmatpush2.msra.mxu0 0.0
    %3151 = vmatprep.subr.mxu0 0.0
    %3152 = vmatpush2.msra.mxu0 0.0
    %3153 = vmatprep.subr.mxu0 0.0
    %3154 = vmatpush2.msra.mxu0 0.0
    %3155 = vmatprep.subr.mxu0 0.0
    %3156 = vmatpush2.msra.mxu0 0.0
    %3157 = vmatprep.subr.mxu0 0.0
    %3158 = vmatpush2.msra.mxu0 0.0
    %3159 = vmatprep.subr.mxu0 0.0
    %3160 = vmatpush2.msra.mxu0 0.0
    %3161 = vmatprep.subr.mxu0 0.0
    %3162 = vmatpush2.msra.mxu0 0.0
    %3163 = vmatprep.subr.mxu0 0.0
    %3164 = vmatpush2.msra.mxu0 0.0
    %3165 = vmatprep.subr.mxu0 0.0
    %3166 = vmatpush2.msra.mxu0 0.0
    %3167 = vmatprep.subr.mxu0 0.0
    %3168 = vmatpush2.msra.mxu0 0.0
    %3169 = vmatprep.subr.mxu0 0.0
    %3170 = vmatpush2.msra.mxu0 0.0
    %3171 = vmatprep.subr.mxu0 0.0
    %3172 = vmatpush2.msra.mxu0 0.0
    %3173 = vmatprep.subr.mxu0 0.0
    %3174 = vmatpush2.msra.mxu0 0.0
    %3175 = vmatprep.subr.mxu0 0.0
    %3176 = vmatpush2.msra.mxu0 0.0
    %3177 = vmatprep.subr.mxu0 0.0
    %3178 = vmatpush2.msra.mxu0 0.0
    %3179 = vmatprep.mubr.f32.mxu0 0.0
    %3180 = vmatmul.mubr.f32.gmra.mxu0 %v3113
    %v3181 = vpop.f32.mrf.mxu0
    %v3182 = vadd.f32 0.0, %v3181
    %v3183 = vpop.f32.mrf.mxu0
    %3184 = vdwg.mxu0
    %3185 = vrot.lane.b32.xlu0 %v2007, 104
    %v3186 = vpop.permute.xlu0 %3185
    %3187 = vrot.lane.b32.xlu0 %v2007, 72
    %v3188 = vpop.permute.xlu0 %3187
    %v3189 = vsel %vm168, %v3186, 0
    %v3191 = vsel %vm168, %v3188, 0
    %3193 = vmatprep.subr.mxu0 0.0
    %3194 = vmatpush1.xpose.msra.mxu0 0.0
    %3195 = vmatprep.subr.mxu0 0.0
    %3196 = vmatpush1.xpose.msra.mxu0 0.0
    %3197 = vmatprep.subr.mxu0 0.0
    %3198 = vmatpush1.xpose.msra.mxu0 0.0
    %3199 = vmatprep.subr.mxu0 0.0
    %3200 = vmatpush1.xpose.msra.mxu0 0.0
    %3201 = vmatprep.subr.mxu0 0.0
    %3202 = vmatpush1.xpose.msra.mxu0 0.0
    %3203 = vmatprep.subr.mxu0 0.0
    %3204 = vmatpush1.xpose.msra.mxu0 0.0
    %3205 = vmatprep.subr.mxu0 0.0
    %3206 = vmatpush1.xpose.msra.mxu0 0.0
    %3207 = vmatprep.subr.mxu0 0.0
    %3208 = vmatpush1.xpose.msra.mxu0 0.0
    %3209 = vmatprep.subr.mxu0 0.0
    %3210 = vmatpush1.xpose.msra.mxu0 0.0
    %3211 = vmatprep.subr.mxu0 0.0
    %3212 = vmatpush1.xpose.msra.mxu0 0.0
    %3213 = vmatprep.subr.mxu0 0.0
    %3214 = vmatpush1.xpose.msra.mxu0 0.0
    %3215 = vmatprep.subr.mxu0 0.0
    %3216 = vmatpush1.xpose.msra.mxu0 0.0
    %3217 = vmatprep.subr.mxu0 0.0
    %3218 = vmatpush1.xpose.msra.mxu0 0.0
    %3219 = vmatprep.subr.mxu0 0.0
    %3220 = vmatpush1.xpose.msra.mxu0 0.0
    %3221 = vmatprep.subr.mxu0 0.0
    %3222 = vmatpush1.xpose.msra.mxu0 0.0
    %3223 = vmatprep.subr.mxu0 0.0
    %3224 = vmatpush1.xpose.msra.mxu0 %v3191
    %3225 = vmatprep.subr.mxu0 0.0
    %3226 = vmatpush2.xpose.msra.mxu0 0.0
    %3227 = vmatprep.subr.mxu0 0.0
    %3228 = vmatpush2.xpose.msra.mxu0 0.0
    %3229 = vmatprep.subr.mxu0 0.0
    %3230 = vmatpush2.xpose.msra.mxu0 0.0
    %3231 = vmatprep.subr.mxu0 0.0
    %3232 = vmatpush2.xpose.msra.mxu0 0.0
    %3233 = vmatprep.subr.mxu0 0.0
    %3234 = vmatpush2.xpose.msra.mxu0 0.0
    %3235 = vmatprep.subr.mxu0 0.0
    %3236 = vmatpush2.xpose.msra.mxu0 0.0
    %3237 = vmatprep.subr.mxu0 0.0
    %3238 = vmatpush2.xpose.msra.mxu0 0.0
    %3239 = vmatprep.subr.mxu0 0.0
    %3240 = vmatpush2.xpose.msra.mxu0 0.0
    %3241 = vmatprep.subr.mxu0 0.0
    %3242 = vmatpush2.xpose.msra.mxu0 0.0
    %3243 = vmatprep.subr.mxu0 0.0
    %3244 = vmatpush2.xpose.msra.mxu0 0.0
    %3245 = vmatprep.subr.mxu0 0.0
    %3246 = vmatpush2.xpose.msra.mxu0 0.0
    %3247 = vmatprep.subr.mxu0 0.0
    %3248 = vmatpush2.xpose.msra.mxu0 0.0
    %3249 = vmatprep.subr.mxu0 0.0
    %3250 = vmatpush2.xpose.msra.mxu0 0.0
    %3251 = vmatprep.subr.mxu0 0.0
    %3252 = vmatpush2.xpose.msra.mxu0 0.0
    %3253 = vmatprep.subr.mxu0 0.0
    %3254 = vmatpush2.xpose.msra.mxu0 0.0
    %3255 = vmatprep.subr.mxu0 0.0
    %3256 = vmatpush2.xpose.msra.mxu0 0.0
    %3257 = vmatprep.mubr.f32.mxu0 0.0
    %3258 = vmatmul.mubr.f32.gmra.mxu0 %v3189
    %v3259 = vpop.f32.mrf.mxu0
    %v3260 = vadd.f32 0.0, %v3259
    %v3261 = vpop.f32.mrf.mxu0
    %3262 = vdwg.mxu0
    %v3263 = vmul.f32 %v3260, 0.35355338
    %v3264 = vsel %vm168, %v3263, -inf
    %3265 = vmax.xlane.f32.xlu0 %v3264
    %v3266 = vpop.xlane.xlu0 %3265
    %v3267 = vsub.f32 %v3263, %v3266
    %v3268 = vmul.f32 %v3267, 1.442695
    %v3269 = vpow.pop %v3268
    %v3270 = vsel %vm168, %v3269, 0.0
    %3271 = vadd.xlane.f32.xlu0 %v3270
    %v3272 = vpop.xlane.xlu0 %3271
    %v3273 = vrcp.pop %v3272
    %v3274 = vmul.f32 %v3269, %v3273
    %3275 = vrot.lane.b32.xlu0 %v2007, 40
    %v3276 = vpop.permute.xlu0 %3275
    %v3279 = vsel %vm168, %v3274, 0
    %3281 = vmatprep.subr.mxu0 0.0
    %3282 = vmatpush1.msra.mxu0 0.0
    %3283 = vmatprep.subr.mxu0 0.0
    %3284 = vmatpush1.msra.mxu0 0.0
    %3285 = vmatprep.subr.mxu0 0.0
    %3286 = vmatpush1.msra.mxu0 0.0
    %3287 = vmatprep.subr.mxu0 0.0
    %3288 = vmatpush1.msra.mxu0 0.0
    %3289 = vmatprep.subr.mxu0 0.0
    %3290 = vmatpush1.msra.mxu0 0.0
    %3291 = vmatprep.subr.mxu0 0.0
    %3292 = vmatpush1.msra.mxu0 0.0
    %3293 = vmatprep.subr.mxu0 0.0
    %3294 = vmatpush1.msra.mxu0 0.0
    %3295 = vmatprep.subr.mxu0 0.0
    %3296 = vmatpush1.msra.mxu0 0.0
    %3297 = vmatprep.subr.mxu0 0.0
    %3298 = vmatpush1.msra.mxu0 0.0
    %3299 = vmatprep.subr.mxu0 0.0
    %3300 = vmatpush1.msra.mxu0 0.0
    %3301 = vmatprep.subr.mxu0 0.0
    %3302 = vmatpush1.msra.mxu0 0.0
    %3303 = vmatprep.subr.mxu0 0.0
    %3304 = vmatpush1.msra.mxu0 0.0
    %3305 = vmatprep.subr.mxu0 0.0
    %3306 = vmatpush1.msra.mxu0 0.0
    %3307 = vmatprep.subr.mxu0 0.0
    %3308 = vmatpush1.msra.mxu0 0.0
    %3309 = vmatprep.subr.mxu0 0.0
    %3310 = vmatpush1.msra.mxu0 0.0
    %3311 = vmatprep.subr.mxu0 0.0
    %3312 = vmatpush1.msra.mxu0 %v3276
    %3313 = vmatprep.subr.mxu0 0.0
    %3314 = vmatpush2.msra.mxu0 0.0
    %3315 = vmatprep.subr.mxu0 0.0
    %3316 = vmatpush2.msra.mxu0 0.0
    %3317 = vmatprep.subr.mxu0 0.0
    %3318 = vmatpush2.msra.mxu0 0.0
    %3319 = vmatprep.subr.mxu0 0.0
    %3320 = vmatpush2.msra.mxu0 0.0
    %3321 = vmatprep.subr.mxu0 0.0
    %3322 = vmatpush2.msra.mxu0 0.0
    %3323 = vmatprep.subr.mxu0 0.0
    %3324 = vmatpush2.msra.mxu0 0.0
    %3325 = vmatprep.subr.mxu0 0.0
    %3326 = vmatpush2.msra.mxu0 0.0
    %3327 = vmatprep.subr.mxu0 0.0
    %3328 = vmatpush2.msra.mxu0 0.0
    %3329 = vmatprep.subr.mxu0 0.0
    %3330 = vmatpush2.msra.mxu0 0.0
    %3331 = vmatprep.subr.mxu0 0.0
    %3332 = vmatpush2.msra.mxu0 0.0
    %3333 = vmatprep.subr.mxu0 0.0
    %3334 = vmatpush2.msra.mxu0 0.0
    %3335 = vmatprep.subr.mxu0 0.0
    %3336 = vmatpush2.msra.mxu0 0.0
    %3337 = vmatprep.subr.mxu0 0.0
    %3338 = vmatpush2.msra.mxu0 0.0
    %3339 = vmatprep.subr.mxu0 0.0
    %3340 = vmatpush2.msra.mxu0 0.0
    %3341 = vmatprep.subr.mxu0 0.0
    %3342 = vmatpush2.msra.mxu0 0.0
    %3343 = vmatprep.subr.mxu0 0.0
    %3344 = vmatpush2.msra.mxu0 0.0
    %3345 = vmatprep.mubr.f32.mxu0 0.0
    %3346 = vmatmul.mubr.f32.gmra.mxu0 %v3279
    %v3347 = vpop.f32.mrf.mxu0
    %v3348 = vadd.f32 0.0, %v3347
    %v3349 = vpop.f32.mrf.mxu0
    %3350 = vdwg.mxu0
    %3352 = vrot.lane.b32.xlu0 %v3016, 8
    %v3353 = vpop.permute.xlu0 %3352
    %3356 = vrot.lane.b32.xlu0 %v3182, 16
    %v3357 = vpop.permute.xlu0 %3356
    %3360 = vrot.lane.b32.xlu0 %v3348, 24
    %v3361 = vpop.permute.xlu0 %3360
    %v3363 = vsel %vm168, %v2850, %v3353
    %v3364 = vsel %vm842, %v3363, %v3357
    %v3365 = vsel %vm844, %v3364, %v3361
    %s3366 = scalar_lea.vmem %s3, 32
    %v3367 = vld [vmem:[%s3366] sm:$0xff]
    %v3368 = vld [vmem:[%s3366 + $0x8] sm:$0xff]
    %v3369 = vld [vmem:[%s3366 + $0x10] sm:$0xff]
    %v3370 = vld [vmem:[%s3366 + $0x18] sm:$0xff]
    %s3371 = scalar_lea.vmem %s4, 1
    %v3372 = vld [vmem:[%s3371] sm:$0x1]
    %v3374 = vlaneseq
    %v3375 = vshrl.u32 %v3374, 7
    %v3376 = vsub.s32 0, %v3375
    %v3377 = vrot.slane %v3372, %v3376
    %v3380 = vsel %vm83, %v2687, 0
    %v3383 = vsel %vm83, %v3365, 0
    %3385 = vmatprep.subr.mxu0 0.0
    %3386 = vmatpush1.msra.mxu0 0.0
    %3387 = vmatprep.subr.mxu0 0.0
    %3388 = vmatpush1.msra.mxu0 0.0
    %3389 = vmatprep.subr.mxu0 0.0
    %3390 = vmatpush1.msra.mxu0 0.0
    %3391 = vmatprep.subr.mxu0 0.0
    %3392 = vmatpush1.msra.mxu0 0.0
    %3393 = vmatprep.subr.mxu0 0.0
    %3394 = vmatpush1.msra.mxu0 0.0
    %3395 = vmatprep.subr.mxu0 0.0
    %3396 = vmatpush1.msra.mxu0 0.0
    %3397 = vmatprep.subr.mxu0 0.0
    %3398 = vmatpush1.msra.mxu0 0.0
    %3399 = vmatprep.subr.mxu0 0.0
    %3400 = vmatpush1.msra.mxu0 0.0
    %3401 = vmatprep.subr.mxu0 0.0
    %3402 = vmatpush1.msra.mxu0 0.0
    %3403 = vmatprep.subr.mxu0 0.0
    %3404 = vmatpush1.msra.mxu0 0.0
    %3405 = vmatprep.subr.mxu0 0.0
    %3406 = vmatpush1.msra.mxu0 0.0
    %3407 = vmatprep.subr.mxu0 0.0
    %3408 = vmatpush1.msra.mxu0 0.0
    %3409 = vmatprep.subr.mxu0 0.0
    %3410 = vmatpush1.msra.mxu0 %v3370
    %3411 = vmatprep.subr.mxu0 0.0
    %3412 = vmatpush1.msra.mxu0 %v3369
    %3413 = vmatprep.subr.mxu0 0.0
    %3414 = vmatpush1.msra.mxu0 %v3368
    %3415 = vmatprep.subr.mxu0 0.0
    %3416 = vmatpush1.msra.mxu0 %v3367
    %3417 = vmatprep.subr.mxu0 0.0
    %3418 = vmatpush2.msra.mxu0 0.0
    %3419 = vmatprep.subr.mxu0 0.0
    %3420 = vmatpush2.msra.mxu0 0.0
    %3421 = vmatprep.subr.mxu0 0.0
    %3422 = vmatpush2.msra.mxu0 0.0
    %3423 = vmatprep.subr.mxu0 0.0
    %3424 = vmatpush2.msra.mxu0 0.0
    %3425 = vmatprep.subr.mxu0 0.0
    %3426 = vmatpush2.msra.mxu0 0.0
    %3427 = vmatprep.subr.mxu0 0.0
    %3428 = vmatpush2.msra.mxu0 0.0
    %3429 = vmatprep.subr.mxu0 0.0
    %3430 = vmatpush2.msra.mxu0 0.0
    %3431 = vmatprep.subr.mxu0 0.0
    %3432 = vmatpush2.msra.mxu0 0.0
    %3433 = vmatprep.subr.mxu0 0.0
    %3434 = vmatpush2.msra.mxu0 0.0
    %3435 = vmatprep.subr.mxu0 0.0
    %3436 = vmatpush2.msra.mxu0 0.0
    %3437 = vmatprep.subr.mxu0 0.0
    %3438 = vmatpush2.msra.mxu0 0.0
    %3439 = vmatprep.subr.mxu0 0.0
    %3440 = vmatpush2.msra.mxu0 0.0
    %3441 = vmatprep.subr.mxu0 0.0
    %3442 = vmatpush2.msra.mxu0 0.0
    %3443 = vmatprep.subr.mxu0 0.0
    %3444 = vmatpush2.msra.mxu0 0.0
    %3445 = vmatprep.subr.mxu0 0.0
    %3446 = vmatpush2.msra.mxu0 0.0
    %3447 = vmatprep.subr.mxu0 0.0
    %3448 = vmatpush2.msra.mxu0 0.0
    %3449 = vmatprep.mubr.f32.mxu0 0.0
    %3450 = vmatmul.mubr.f32.gmra.mxu0 %v3380
    %v3451 = vpop.f32.mrf.mxu0
    %v3452 = vadd.f32 %v3377, %v3451
    %v3453 = vpop.f32.mrf.mxu0
    %3454 = vmatprep.mubr.f32.mxu0 0.0
    %3455 = vmatmul.mubr.f32.gmra.mxu0 %v3383
    %v3456 = vpop.f32.mrf.mxu0
    %v3457 = vadd.f32 %v3377, %v3456
    %v3458 = vpop.f32.mrf.mxu0
    %3459 = vdwg.mxu0
    %v3460 = vadd.f32 %v3452, %v1914
    %v3461 = vadd.f32 %v3457, %v1915
    %s3462 = scalar_lea.vmem %s5, 1
    %v3463 = vld [vmem:[%s3462] sm:$0x1]
    %s3464 = scalar_lea.vmem %s6, 1
    %v3465 = vld [vmem:[%s3464] sm:$0x1]
    %v3466 = vsel %vm83, %v3460, 0.0
    %3467 = vadd.xlane.f32.xlu0 %v3466
    %v3468 = vpop.xlane.xlu0 %3467
    %v3469 = vsel %vm83, %v3461, 0.0
    %3470 = vadd.xlane.f32.xlu0 %v3469
    %v3471 = vpop.xlane.xlu0 %3470
    %v3472 = vmul.f32 %v3468, %v1626
    %v3473 = vmul.f32 %v3471, %v1626
    %v3474 = vsub.f32 %v3460, %v3472
    %v3475 = vsub.f32 %v3461, %v3473
    %v3476 = vmul.f32 %v3474, %v3474
    %v3477 = vmul.f32 %v3475, %v3475
    %v3478 = vsel %vm83, %v3476, 0.0
    %3479 = vadd.xlane.f32.xlu0 %v3478
    %v3480 = vpop.xlane.xlu0 %3479
    %v3481 = vsel %vm83, %v3477, 0.0
    %3482 = vadd.xlane.f32.xlu0 %v3481
    %v3483 = vpop.xlane.xlu0 %3482
    %v3484 = vmul.f32 %v3480, %v1626
    %v3485 = vmul.f32 %v3483, %v1626
    %v3486 = vadd.f32 %v3484, 1e-12
    %v3487 = vadd.f32 %v3485, 1e-12
    %v3488 = vrsqrt.pop %v3486
    %v3489 = vrsqrt.pop %v3487
    %v3490 = vmul.f32 %v3474, %v3488
    %v3491 = vmul.f32 %v3475, %v3489
    %v3493 = vlaneseq
    %v3494 = vshrl.u32 %v3493, 7
    %v3495 = vsub.s32 0, %v3494
    %v3496 = vrot.slane %v3463, %v3495
    %v3498 = vmul.f32 %v3490, %v3496
    %v3499 = vmul.f32 %v3491, %v3496
    %v3501 = vlaneseq
    %v3502 = vshrl.u32 %v3501, 7
    %v3503 = vsub.s32 0, %v3502
    %v3504 = vrot.slane %v3465, %v3503
    %v3506 = vadd.f32 %v3498, %v3504
    %v3507 = vadd.f32 %v3499, %v3504
    %s3508 = scalar_lea.vmem %s7, 32
    %v3509 = vld [vmem:[%s3508] sm:$0xff]
    %v3510 = vld [vmem:[%s3508 + $0x8] sm:$0xff]
    %v3511 = vld [vmem:[%s3508 + $0x10] sm:$0xff]
    %v3512 = vld [vmem:[%s3508 + $0x18] sm:$0xff]
    %s3513 = scalar_lea.vmem %s8, 1
    %v3514 = vld [vmem:[%s3513] sm:$0x1]
    %v3516 = vlaneseq
    %v3517 = vshrl.u32 %v3516, 7
    %v3518 = vsub.s32 0, %v3517
    %v3519 = vrot.slane %v3514, %v3518
    %v3522 = vsel %vm83, %v3506, 0
    %v3525 = vsel %vm83, %v3507, 0
    %3527 = vmatprep.subr.mxu0 0.0
    %3528 = vmatpush1.msra.mxu0 0.0
    %3529 = vmatprep.subr.mxu0 0.0
    %3530 = vmatpush1.msra.mxu0 0.0
    %3531 = vmatprep.subr.mxu0 0.0
    %3532 = vmatpush1.msra.mxu0 0.0
    %3533 = vmatprep.subr.mxu0 0.0
    %3534 = vmatpush1.msra.mxu0 0.0
    %3535 = vmatprep.subr.mxu0 0.0
    %3536 = vmatpush1.msra.mxu0 0.0
    %3537 = vmatprep.subr.mxu0 0.0
    %3538 = vmatpush1.msra.mxu0 0.0
    %3539 = vmatprep.subr.mxu0 0.0
    %3540 = vmatpush1.msra.mxu0 0.0
    %3541 = vmatprep.subr.mxu0 0.0
    %3542 = vmatpush1.msra.mxu0 0.0
    %3543 = vmatprep.subr.mxu0 0.0
    %3544 = vmatpush1.msra.mxu0 0.0
    %3545 = vmatprep.subr.mxu0 0.0
    %3546 = vmatpush1.msra.mxu0 0.0
    %3547 = vmatprep.subr.mxu0 0.0
    %3548 = vmatpush1.msra.mxu0 0.0
    %3549 = vmatprep.subr.mxu0 0.0
    %3550 = vmatpush1.msra.mxu0 0.0
    %3551 = vmatprep.subr.mxu0 0.0
    %3552 = vmatpush1.msra.mxu0 %v3512
    %3553 = vmatprep.subr.mxu0 0.0
    %3554 = vmatpush1.msra.mxu0 %v3511
    %3555 = vmatprep.subr.mxu0 0.0
    %3556 = vmatpush1.msra.mxu0 %v3510
    %3557 = vmatprep.subr.mxu0 0.0
    %3558 = vmatpush1.msra.mxu0 %v3509
    %3559 = vmatprep.subr.mxu0 0.0
    %3560 = vmatpush2.msra.mxu0 0.0
    %3561 = vmatprep.subr.mxu0 0.0
    %3562 = vmatpush2.msra.mxu0 0.0
    %3563 = vmatprep.subr.mxu0 0.0
    %3564 = vmatpush2.msra.mxu0 0.0
    %3565 = vmatprep.subr.mxu0 0.0
    %3566 = vmatpush2.msra.mxu0 0.0
    %3567 = vmatprep.subr.mxu0 0.0
    %3568 = vmatpush2.msra.mxu0 0.0
    %3569 = vmatprep.subr.mxu0 0.0
    %3570 = vmatpush2.msra.mxu0 0.0
    %3571 = vmatprep.subr.mxu0 0.0
    %3572 = vmatpush2.msra.mxu0 0.0
    %3573 = vmatprep.subr.mxu0 0.0
    %3574 = vmatpush2.msra.mxu0 0.0
    %3575 = vmatprep.subr.mxu0 0.0
    %3576 = vmatpush2.msra.mxu0 0.0
    %3577 = vmatprep.subr.mxu0 0.0
    %3578 = vmatpush2.msra.mxu0 0.0
    %3579 = vmatprep.subr.mxu0 0.0
    %3580 = vmatpush2.msra.mxu0 0.0
    %3581 = vmatprep.subr.mxu0 0.0
    %3582 = vmatpush2.msra.mxu0 0.0
    %3583 = vmatprep.subr.mxu0 0.0
    %3584 = vmatpush2.msra.mxu0 0.0
    %3585 = vmatprep.subr.mxu0 0.0
    %3586 = vmatpush2.msra.mxu0 0.0
    %3587 = vmatprep.subr.mxu0 0.0
    %3588 = vmatpush2.msra.mxu0 0.0
    %3589 = vmatprep.subr.mxu0 0.0
    %3590 = vmatpush2.msra.mxu0 0.0
    %3591 = vmatprep.mubr.f32.mxu0 0.0
    %3592 = vmatmul.mubr.f32.gmra.mxu0 %v3522
    %v3593 = vpop.f32.mrf.mxu0
    %v3594 = vadd.f32 %v3519, %v3593
    %v3595 = vpop.f32.mrf.mxu0
    %3596 = vmatprep.mubr.f32.mxu0 0.0
    %3597 = vmatmul.mubr.f32.gmra.mxu0 %v3525
    %v3598 = vpop.f32.mrf.mxu0
    %v3599 = vadd.f32 %v3519, %v3598
    %v3600 = vpop.f32.mrf.mxu0
    %3601 = vdwg.mxu0
    %v3602 = vmul.f32 %v3594, 0.5
    %v3603 = vmul.f32 %v3599, 0.5
    %v3604 = vmul.f32 %v3594, 0.044715
    %v3605 = vmul.f32 %v3599, 0.044715
    %v3606 = vmul.f32 %v3604, %v3594
    %v3607 = vmul.f32 %v3605, %v3599
    %v3608 = vmul.f32 %v3606, %v3594
    %v3609 = vmul.f32 %v3607, %v3599
    %v3610 = vadd.f32 %v3594, %v3608
    %v3611 = vadd.f32 %v3599, %v3609
    %v3612 = vmul.f32 %v3610, 0.7978846
    %v3613 = vmul.f32 %v3611, 0.7978846
    %v3614 = vtanh.pop %v3612
    %v3615 = vtanh.pop %v3613
    %v3616 = vadd.f32 %v3614, 1.0
    %v3617 = vadd.f32 %v3615, 1.0
    %v3618 = vmul.f32 %v3602, %v3616
    %v3619 = vmul.f32 %v3603, %v3617
    %s3620 = scalar_lea.vmem %s9, 64
    %v3621 = vld [vmem:[%s3620] sm:$0xff]
    %v3622 = vld [vmem:[%s3620 + $0x8] sm:$0xff]
    %v3623 = vld [vmem:[%s3620 + $0x10] sm:$0xff]
    %v3624 = vld [vmem:[%s3620 + $0x18] sm:$0xff]
    %v3625 = vld [vmem:[%s3620 + $0x20] sm:$0xff]
    %v3626 = vld [vmem:[%s3620 + $0x28] sm:$0xff]
    %v3627 = vld [vmem:[%s3620 + $0x30] sm:$0xff]
    %v3628 = vld [vmem:[%s3620 + $0x38] sm:$0xff]
    %s3629 = scalar_lea.vmem %s10, 1
    %v3630 = vld [vmem:[%s3629] sm:$0x1]
    %v3632 = vlaneseq
    %v3633 = vshrl.u32 %v3632, 7
    %v3634 = vsub.s32 0, %v3633
    %v3635 = vrot.slane %v3630, %v3634
    %v3638 = vsel %vm1788, %v3618, 0
    %v3641 = vsel %vm1788, %v3619, 0
    %3643 = vmatprep.subr.mxu0 0.0
    %3644 = vmatpush1.msra.mxu0 0.0
    %3645 = vmatprep.subr.mxu0 0.0
    %3646 = vmatpush1.msra.mxu0 0.0
    %3647 = vmatprep.subr.mxu0 0.0
    %3648 = vmatpush1.msra.mxu0 0.0
    %3649 = vmatprep.subr.mxu0 0.0
    %3650 = vmatpush1.msra.mxu0 0.0
    %3651 = vmatprep.subr.mxu0 0.0
    %3652 = vmatpush1.msra.mxu0 0.0
    %3653 = vmatprep.subr.mxu0 0.0
    %3654 = vmatpush1.msra.mxu0 0.0
    %3655 = vmatprep.subr.mxu0 0.0
    %3656 = vmatpush1.msra.mxu0 0.0
    %3657 = vmatprep.subr.mxu0 0.0
    %3658 = vmatpush1.msra.mxu0 0.0
    %3659 = vmatprep.subr.mxu0 0.0
    %3660 = vmatpush1.msra.mxu0 %v3628
    %3661 = vmatprep.subr.mxu0 0.0
    %3662 = vmatpush1.msra.mxu0 %v3627
    %3663 = vmatprep.subr.mxu0 0.0
    %3664 = vmatpush1.msra.mxu0 %v3626
    %3665 = vmatprep.subr.mxu0 0.0
    %3666 = vmatpush1.msra.mxu0 %v3625
    %3667 = vmatprep.subr.mxu0 0.0
    %3668 = vmatpush1.msra.mxu0 %v3624
    %3669 = vmatprep.subr.mxu0 0.0
    %3670 = vmatpush1.msra.mxu0 %v3623
    %3671 = vmatprep.subr.mxu0 0.0
    %3672 = vmatpush1.msra.mxu0 %v3622
    %3673 = vmatprep.subr.mxu0 0.0
    %3674 = vmatpush1.msra.mxu0 %v3621
    %3675 = vmatprep.subr.mxu0 0.0
    %3676 = vmatpush2.msra.mxu0 0.0
    %3677 = vmatprep.subr.mxu0 0.0
    %3678 = vmatpush2.msra.mxu0 0.0
    %3679 = vmatprep.subr.mxu0 0.0
    %3680 = vmatpush2.msra.mxu0 0.0
    %3681 = vmatprep.subr.mxu0 0.0
    %3682 = vmatpush2.msra.mxu0 0.0
    %3683 = vmatprep.subr.mxu0 0.0
    %3684 = vmatpush2.msra.mxu0 0.0
    %3685 = vmatprep.subr.mxu0 0.0
    %3686 = vmatpush2.msra.mxu0 0.0
    %3687 = vmatprep.subr.mxu0 0.0
    %3688 = vmatpush2.msra.mxu0 0.0
    %3689 = vmatprep.subr.mxu0 0.0
    %3690 = vmatpush2.msra.mxu0 0.0
    %3691 = vmatprep.subr.mxu0 0.0
    %3692 = vmatpush2.msra.mxu0 0.0
    %3693 = vmatprep.subr.mxu0 0.0
    %3694 = vmatpush2.msra.mxu0 0.0
    %3695 = vmatprep.subr.mxu0 0.0
    %3696 = vmatpush2.msra.mxu0 0.0
    %3697 = vmatprep.subr.mxu0 0.0
    %3698 = vmatpush2.msra.mxu0 0.0
    %3699 = vmatprep.subr.mxu0 0.0
    %3700 = vmatpush2.msra.mxu0 0.0
    %3701 = vmatprep.subr.mxu0 0.0
    %3702 = vmatpush2.msra.mxu0 0.0
    %3703 = vmatprep.subr.mxu0 0.0
    %3704 = vmatpush2.msra.mxu0 0.0
    %3705 = vmatprep.subr.mxu0 0.0
    %3706 = vmatpush2.msra.mxu0 0.0
    %3707 = vmatprep.mubr.f32.mxu0 0.0
    %3708 = vmatmul.mubr.f32.gmra.mxu0 %v3638
    %v3709 = vpop.f32.mrf.mxu0
    %v3710 = vadd.f32 %v3635, %v3709
    %v3711 = vpop.f32.mrf.mxu0
    %3712 = vmatprep.mubr.f32.mxu0 0.0
    %3713 = vmatmul.mubr.f32.gmra.mxu0 %v3641
    %v3714 = vpop.f32.mrf.mxu0
    %v3715 = vadd.f32 %v3635, %v3714
    %v3716 = vpop.f32.mrf.mxu0
    %3717 = vdwg.mxu0
    %v3718 = vadd.f32 %v3710, %v3506
    %v3719 = vadd.f32 %v3715, %v3507
    %s3720 = scalar_lea.vmem %s11, 1
    %v3721 = vld [vmem:[%s3720] sm:$0x1]
    %s3722 = scalar_lea.vmem %s12, 1
    %v3723 = vld [vmem:[%s3722] sm:$0x1]
    %v3724 = vsel %vm83, %v3718, 0.0
    %3725 = vadd.xlane.f32.xlu0 %v3724
    %v3726 = vpop.xlane.xlu0 %3725
    %v3727 = vsel %vm83, %v3719, 0.0
    %3728 = vadd.xlane.f32.xlu0 %v3727
    %v3729 = vpop.xlane.xlu0 %3728
    %v3730 = vmul.f32 %v3726, %v1626
    %v3731 = vmul.f32 %v3729, %v1626
    %v3732 = vsub.f32 %v3718, %v3730
    %v3733 = vsub.f32 %v3719, %v3731
    %v3734 = vmul.f32 %v3732, %v3732
    %v3735 = vmul.f32 %v3733, %v3733
    %v3736 = vsel %vm83, %v3734, 0.0
    %3737 = vadd.xlane.f32.xlu0 %v3736
    %v3738 = vpop.xlane.xlu0 %3737
    %v3739 = vsel %vm83, %v3735, 0.0
    %3740 = vadd.xlane.f32.xlu0 %v3739
    %v3741 = vpop.xlane.xlu0 %3740
    %v3742 = vmul.f32 %v3738, %v1626
    %v3743 = vmul.f32 %v3741, %v1626
    %v3744 = vadd.f32 %v3742, 1e-12
    %v3745 = vadd.f32 %v3743, 1e-12
    %v3746 = vrsqrt.pop %v3744
    %v3747 = vrsqrt.pop %v3745
    %v3748 = vmul.f32 %v3732, %v3746
    %v3749 = vmul.f32 %v3733, %v3747
    %v3751 = vlaneseq
    %v3752 = vshrl.u32 %v3751, 7
    %v3753 = vsub.s32 0, %v3752
    %v3754 = vrot.slane %v3721, %v3753
    %v3756 = vmul.f32 %v3748, %v3754
    %v3757 = vmul.f32 %v3749, %v3754
    %v3759 = vlaneseq
    %v3760 = vshrl.u32 %v3759, 7
    %v3761 = vsub.s32 0, %v3760
    %v3762 = vrot.slane %v3723, %v3761
    %v3764 = vadd.f32 %v3756, %v3762
    %v3765 = vadd.f32 %v3757, %v3762
    %v3767 = vrot.slane %v3765, 7
    %vm3769 = vcmask 1040384
    %v3770 = vsel %vm3769, %v3764, %v3767
    %v3771 = vld [vmem:[%s13] sm:$0xff]
    %v3772 = vld [vmem:[%s13 + $0x8] sm:$0xff]
    %v3773 = vld [vmem:[%s13 + $0x10] sm:$0xff]
    %v3774 = vld [vmem:[%s13 + $0x18] sm:$0xff]
    %v3775 = vld [vmem:[%s14] sm:$0x1]
    %v3777 = vlaneseq
    %v3778 = vshrl.u32 %v3777, 7
    %v3779 = vsub.s32 0, %v3778
    %v3780 = vrot.slane %v3775, %v3779
    %v3783 = vsel %vm83, %v3770, 0
    %3785 = vmatprep.subr.mxu0 0.0
    %3786 = vmatpush1.msra.mxu0 0.0
    %3787 = vmatprep.subr.mxu0 0.0
    %3788 = vmatpush1.msra.mxu0 0.0
    %3789 = vmatprep.subr.mxu0 0.0
    %3790 = vmatpush1.msra.mxu0 0.0
    %3791 = vmatprep.subr.mxu0 0.0
    %3792 = vmatpush1.msra.mxu0 0.0
    %3793 = vmatprep.subr.mxu0 0.0
    %3794 = vmatpush1.msra.mxu0 0.0
    %3795 = vmatprep.subr.mxu0 0.0
    %3796 = vmatpush1.msra.mxu0 0.0
    %3797 = vmatprep.subr.mxu0 0.0
    %3798 = vmatpush1.msra.mxu0 0.0
    %3799 = vmatprep.subr.mxu0 0.0
    %3800 = vmatpush1.msra.mxu0 0.0
    %3801 = vmatprep.subr.mxu0 0.0
    %3802 = vmatpush1.msra.mxu0 0.0
    %3803 = vmatprep.subr.mxu0 0.0
    %3804 = vmatpush1.msra.mxu0 0.0
    %3805 = vmatprep.subr.mxu0 0.0
    %3806 = vmatpush1.msra.mxu0 0.0
    %3807 = vmatprep.subr.mxu0 0.0
    %3808 = vmatpush1.msra.mxu0 0.0
    %3809 = vmatprep.subr.mxu0 0.0
    %3810 = vmatpush1.msra.mxu0 %v3774
    %3811 = vmatprep.subr.mxu0 0.0
    %3812 = vmatpush1.msra.mxu0 %v3773
    %3813 = vmatprep.subr.mxu0 0.0
    %3814 = vmatpush1.msra.mxu0 %v3772
    %3815 = vmatprep.subr.mxu0 0.0
    %3816 = vmatpush1.msra.mxu0 %v3771
    %3817 = vmatprep.subr.mxu0 0.0
    %3818 = vmatpush2.msra.mxu0 0.0
    %3819 = vmatprep.subr.mxu0 0.0
    %3820 = vmatpush2.msra.mxu0 0.0
    %3821 = vmatprep.subr.mxu0 0.0
    %3822 = vmatpush2.msra.mxu0 0.0
    %3823 = vmatprep.subr.mxu0 0.0
    %3824 = vmatpush2.msra.mxu0 0.0
    %3825 = vmatprep.subr.mxu0 0.0
    %3826 = vmatpush2.msra.mxu0 0.0
    %3827 = vmatprep.subr.mxu0 0.0
    %3828 = vmatpush2.msra.mxu0 0.0
    %3829 = vmatprep.subr.mxu0 0.0
    %3830 = vmatpush2.msra.mxu0 0.0
    %3831 = vmatprep.subr.mxu0 0.0
    %3832 = vmatpush2.msra.mxu0 0.0
    %3833 = vmatprep.subr.mxu0 0.0
    %3834 = vmatpush2.msra.mxu0 0.0
    %3835 = vmatprep.subr.mxu0 0.0
    %3836 = vmatpush2.msra.mxu0 0.0
    %3837 = vmatprep.subr.mxu0 0.0
    %3838 = vmatpush2.msra.mxu0 0.0
    %3839 = vmatprep.subr.mxu0 0.0
    %3840 = vmatpush2.msra.mxu0 0.0
    %3841 = vmatprep.subr.mxu0 0.0
    %3842 = vmatpush2.msra.mxu0 0.0
    %3843 = vmatprep.subr.mxu0 0.0
    %3844 = vmatpush2.msra.mxu0 0.0
    %3845 = vmatprep.subr.mxu0 0.0
    %3846 = vmatpush2.msra.mxu0 0.0
    %3847 = vmatprep.subr.mxu0 0.0
    %3848 = vmatpush2.msra.mxu0 0.0
    %3849 = vmatprep.mubr.f32.mxu0 0.0
    %3850 = vmatmul.mubr.f32.gmra.mxu0 %v3783
    %v3851 = vpop.f32.mrf.mxu0
    %v3852 = vadd.f32 %v3780, %v3851
    %v3853 = vpop.f32.mrf.mxu0
    %3854 = vdwg.mxu0
    %v3855 = vtanh.pop %v3852
    %v3856 = vld [vmem:[%s15] sm:$0xff]
    %v3857 = vld [vmem:[%s15 + $0x8] sm:$0xff]
    %v3858 = vld [vmem:[%s15 + $0x10] sm:$0xff]
    %v3859 = vld [vmem:[%s15 + $0x18] sm:$0xff]
    %v3860 = vld [vmem:[%s16] sm:$0x1]
    %v3862 = vlaneseq
    %v3863 = vshrl.u32 %v3862, 7
    %v3864 = vsub.s32 0, %v3863
    %v3865 = vrot.slane %v3860, %v3864
    %v3868 = vsel %vm83, %v3855, 0
    %3870 = vmatprep.subr.mxu0 0.0
    %3871 = vmatpush1.msra.mxu0 0.0
    %3872 = vmatprep.subr.mxu0 0.0
    %3873 = vmatpush1.msra.mxu0 0.0
    %3874 = vmatprep.subr.mxu0 0.0
    %3875 = vmatpush1.msra.mxu0 0.0
    %3876 = vmatprep.subr.mxu0 0.0
    %3877 = vmatpush1.msra.mxu0 0.0
    %3878 = vmatprep.subr.mxu0 0.0
    %3879 = vmatpush1.msra.mxu0 0.0
    %3880 = vmatprep.subr.mxu0 0.0
    %3881 = vmatpush1.msra.mxu0 0.0
    %3882 = vmatprep.subr.mxu0 0.0
    %3883 = vmatpush1.msra.mxu0 0.0
    %3884 = vmatprep.subr.mxu0 0.0
    %3885 = vmatpush1.msra.mxu0 0.0
    %3886 = vmatprep.subr.mxu0 0.0
    %3887 = vmatpush1.msra.mxu0 0.0
    %3888 = vmatprep.subr.mxu0 0.0
    %3889 = vmatpush1.msra.mxu0 0.0
    %3890 = vmatprep.subr.mxu0 0.0
    %3891 = vmatpush1.msra.mxu0 0.0
    %3892 = vmatprep.subr.mxu0 0.0
    %3893 = vmatpush1.msra.mxu0 0.0
    %3894 = vmatprep.subr.mxu0 0.0
    %3895 = vmatpush1.msra.mxu0 %v3859
    %3896 = vmatprep.subr.mxu0 0.0
    %3897 = vmatpush1.msra.mxu0 %v3858
    %3898 = vmatprep.subr.mxu0 0.0
    %3899 = vmatpush1.msra.mxu0 %v3857
    %3900 = vmatprep.subr.mxu0 0.0
    %3901 = vmatpush1.msra.mxu0 %v3856
    %3902 = vmatprep.subr.mxu0 0.0
    %3903 = vmatpush2.msra.mxu0 0.0
    %3904 = vmatprep.subr.mxu0 0.0
    %3905 = vmatpush2.msra.mxu0 0.0
    %3906 = vmatprep.subr.mxu0 0.0
    %3907 = vmatpush2.msra.mxu0 0.0
    %3908 = vmatprep.subr.mxu0 0.0
    %3909 = vmatpush2.msra.mxu0 0.0
    %3910 = vmatprep.subr.mxu0 0.0
    %3911 = vmatpush2.msra.mxu0 0.0
    %3912 = vmatprep.subr.mxu0 0.0
    %3913 = vmatpush2.msra.mxu0 0.0
    %3914 = vmatprep.subr.mxu0 0.0
    %3915 = vmatpush2.msra.mxu0 0.0
    %3916 = vmatprep.subr.mxu0 0.0
    %3917 = vmatpush2.msra.mxu0 0.0
    %3918 = vmatprep.subr.mxu0 0.0
    %3919 = vmatpush2.msra.mxu0 0.0
    %3920 = vmatprep.subr.mxu0 0.0
    %3921 = vmatpush2.msra.mxu0 0.0
    %3922 = vmatprep.subr.mxu0 0.0
    %3923 = vmatpush2.msra.mxu0 0.0
    %3924 = vmatprep.subr.mxu0 0.0
    %3925 = vmatpush2.msra.mxu0 0.0
    %3926 = vmatprep.subr.mxu0 0.0
    %3927 = vmatpush2.msra.mxu0 0.0
    %3928 = vmatprep.subr.mxu0 0.0
    %3929 = vmatpush2.msra.mxu0 0.0
    %3930 = vmatprep.subr.mxu0 0.0
    %3931 = vmatpush2.msra.mxu0 0.0
    %3932 = vmatprep.subr.mxu0 0.0
    %3933 = vmatpush2.msra.mxu0 0.0
    %3934 = vmatprep.mubr.f32.mxu0 0.0
    %3935 = vmatmul.mubr.f32.gmra.mxu0 %v3868
    %v3936 = vpop.f32.mrf.mxu0
    %v3937 = vadd.f32 %v3865, %v3936
    %v3938 = vpop.f32.mrf.mxu0
    %3939 = vdwg.mxu0
    %vm3940 = vcmask 9216
    %v3941 = vsel %vm3940, %v3937, -inf
    %3942 = vmax.xlane.f32.xlu0 %v3941
    %v3943 = vpop.xlane.xlu0 %3942
    %v3944 = vsub.f32 %v3937, %v3943
    %v3945 = vmul.f32 %v3944, 1.442695
    %v3946 = vpow.pop %v3945
    %v3947 = vsel %vm3940, %v3946, 0.0
    %3948 = vadd.xlane.f32.xlu0 %v3947
    %v3949 = vpop.xlane.xlu0 %3948
    %v3950 = vrcp.pop %v3949
    %v3951 = vmul.f32 %v3946, %v3950
    %3953 = vrot.lane.b32.xlu0 %v3951, 127
    %v3954 = vpop.permute.xlu0 %3953
    %vm3956 = vcmask 1024
    %3957 = vst.msk [vmem:[%s17] sm:$0x3] %vm3956, %v3954
    // Predicated region
    $region74: #{tpu_custom_call.1} parent=1 // pred_check
      _
    $region75: #{tpu_custom_call.1} parent=1 // pred_check_branch
      %3959 = sbr.rel (0) target = $region77
    $region76: #{tpu_custom_call.1} parent=1 // pred_region
      _
    $region77: #{tpu_custom_call.1} parent=1 // pred_fallthru
      _
    // Predicated region
    $region78: #{tpu_custom_call.1} parent=1 // pred_check
      _
    $region79: #{tpu_custom_call.1} parent=1 // pred_check_branch
      %3961 = sbr.rel (0) target = $region81
    $region80: #{tpu_custom_call.1} parent=1 // pred_region
      _
    $region81: #{tpu_custom_call.1} parent=1 // pred_fallthru
      _
    %3962 = vsyncpa [#allocation3], 1

</llo_original>
